<compile_context>
chip_gen: v5e
topology: v5e:2x2
jax: 0.10.0
libtpu: 0.0.40
codegen_flags: <defaults>
</compile_context>

<pallas_src>
import numpy as np

import jax
import jax.numpy as jnp
from jax.experimental import pallas as pl
from jax.experimental.pallas import tpu as pltpu


# ----------------------------------------------------------------------------
# Fused Pallas kernel
# ----------------------------------------------------------------------------
def _make_fused_kernel(n_backbone, n_extras, source_layers):
    """Build the fused kernel body.

    Ref order (inputs):
      x(1,H,W*Cin), shift(2,H,H),
      [band_k(3,W*cin,W*cout), bias_k(1,W*cout)]  for every conv layer k,
      [m_j(W*c,W*c),  gamma_j(1,W*c)]             for every L2Norm source j,
    then the output refs (one per source, each (1, H, W*cout)).
    """
    n_layers = n_backbone + n_extras
    n_l2 = len(source_layers)

    def kernel(*refs):
        n_in = 2 + 2 * n_layers + 2 * n_l2
        in_refs, out_refs = refs[:n_in], refs[n_in:]
        x_ref, sh_ref = in_refs[0], in_refs[1]
        bands = [in_refs[2 + 2 * k] for k in range(n_layers)]
        biases = [in_refs[3 + 2 * k] for k in range(n_layers)]
        base = 2 + 2 * n_layers
        ms = [in_refs[base + 2 * j] for j in range(n_l2)]
        gammas = [in_refs[base + 2 * j + 1] for j in range(n_l2)]

        s_up = sh_ref[0]   # (H,H): (s_up @ a)[h] = a[h-1], top row -> 0
        s_dn = sh_ref[1]   # (H,H): (s_dn @ a)[h] = a[h+1], bottom row -> 0

        def conv3x3_relu(a, band_ref, bias_ref):
            # a: (H, W*cin) lane-dense activation slab; band_ref: (3, W*cin, W*cout).
            a_up = jnp.dot(s_up, a, preferred_element_type=jnp.float32)
            a_dn = jnp.dot(s_dn, a, preferred_element_type=jnp.float32)
            acc = jnp.dot(a_up, band_ref[0], preferred_element_type=jnp.float32)
            acc = acc + jnp.dot(a, band_ref[1], preferred_element_type=jnp.float32)
            acc = acc + jnp.dot(a_dn, band_ref[2], preferred_element_type=jnp.float32)
            return jnp.maximum(acc + bias_ref[...], 0.0)

        def l2norm(a, m_ref, g_ref):
            # Per-pixel channel L2 norm on the flat layout: the block-diagonal ones
            # matmul replicates sum(x^2) across each channel group; reciprocal on EUP.
            ss = jnp.dot(a * a, m_ref[...], preferred_element_type=jnp.float32)
            inv = pl.reciprocal(jnp.sqrt(ss) + 1e-10, approx=True)
            return a * inv * g_ref[...]

        a = x_ref[0]                              # (H, W*Cin), f32
        out_i = 0
        l2_i = 0
        for k in range(n_backbone):
            a = conv3x3_relu(a, bands[k], biases[k])
            if k in source_layers:
                out_refs[out_i][0] = l2norm(a, ms[l2_i], gammas[l2_i])
                out_i += 1
                l2_i += 1
        for e in range(n_extras):
            a = conv3x3_relu(a, bands[n_backbone + e], biases[n_backbone + e])
            out_refs[out_i][0] = a
            out_i += 1

    return kernel


# ----------------------------------------------------------------------------
# One-time glue-side weight re-layout (conv-as-banded-matmul)
# ----------------------------------------------------------------------------
def _band_weights(w_hwio, W):
    """Fold horizontal taps + horizontal zero-pad of a 3x3 SAME conv into three
    banded (W*Cin, W*Cout) matrices, one per vertical tap dh."""
    w = np.asarray(w_hwio, np.float32)          # (3, 3, cin, cout)
    cin, cout = w.shape[2], w.shape[3]
    band = np.zeros((3, W * cin, W * cout), np.float32)
    for dh in range(3):
        for wo in range(W):
            for dw in range(3):
                wi = wo + dw - 1
                if 0 <= wi < W:
                    band[dh, wi * cin:(wi + 1) * cin,
                         wo * cout:(wo + 1) * cout] = w[dh, dw]
    return jnp.asarray(band)


def _shift_matrices(H):
    s = np.zeros((2, H, H), np.float32)
    s[0, 1:, :-1] = np.eye(H - 1, dtype=np.float32)   # row h <- row h-1
    s[1, :-1, 1:] = np.eye(H - 1, dtype=np.float32)   # row h <- row h+1
    return jnp.asarray(s)


def _group_sum_matrix(W, c):
    # Block-diagonal ones: sums c-channel groups and replicates the sum across them.
    return jnp.asarray(np.kron(np.eye(W, dtype=np.float32),
                               np.ones((c, c), np.float32)))


# ----------------------------------------------------------------------------
# FeatureExtractor equivalent
# ----------------------------------------------------------------------------
class FeatureExtractorPallas:
    """Pallas equivalent of FeatureExtractor for a fixed synthetic cfg/backbone/extras:
         backbone        = [Conv3x3(4->8)+ReLU, Conv3x3(8->8)+ReLU, Conv3x3(8->16)+ReLU]
         backbone_source = [1, 2]  -> L2Norm(8, 20), L2Norm(16, 20)
         extras          = [Conv3x3(16->16)+ReLU, Conv3x3(16->8)+ReLU]
       forward -> [L2Norm(b1_out), L2Norm(b2_out), extra0_out, extra1_out]
    """
    # TODO(synk): cfg/backbone/extras are constructor-supplied nn.Module lists in the
    # PyTorch spec; here they are fixed to the synthetic Conv3x3+ReLU instance above.

    def __init__(self, key):
        self.backbone_chans = [(4, 8), (8, 8), (8, 16)]
        self.extras_chans = [(16, 16), (16, 8)]
        self.backbone_source = [1, 2]
        l2norm_chans = [self.backbone_chans[k][1] for k in self.backbone_source]

        all_chans = self.backbone_chans + self.extras_chans
        keys = jax.random.split(key, len(all_chans))

        def init_conv(k, cin, cout):
            kw, kb = jax.random.split(k)
            w = 0.1 * jax.random.normal(kw, (3, 3, cin, cout), jnp.float32)
            b = 0.01 * jax.random.normal(kb, (cout,), jnp.float32)
            return w, b

        params = [init_conv(keys[i], ci, co) for i, (ci, co) in enumerate(all_chans)]
        self.backbone = params[:len(self.backbone_chans)]
        self.extras = params[len(self.backbone_chans):]
        # L2Norm weight initialized to the scale (20), as in SSD's L2Norm.
        self.l2norm_gamma = [jnp.full((c,), 20.0, jnp.float32) for c in l2norm_chans]
        self._prepared_cache = {}

    def _prepared(self, H, W):
        key = (H, W)
        if key not in self._prepared_cache:
            layers = self.backbone + self.extras
            bands = [_band_weights(w, W) for (w, _) in layers]
            biases = [jnp.asarray(np.tile(np.asarray(b, np.float32), W))[None, :]
                      for (_, b) in layers]
            ms = [_group_sum_matrix(W, int(g.shape[0])) for g in self.l2norm_gamma]
            gs = [jnp.asarray(np.tile(np.asarray(g, np.float32), W))[None, :]
                  for g in self.l2norm_gamma]
            self._prepared_cache[key] = (_shift_matrices(H), bands, biases, ms, gs)
        return self._prepared_cache[key]

    def __call__(self, x_nchw):
        N, Cin, H, W = x_nchw.shape
        shift, bands, biases, ms, gs = self._prepared(H, W)

        # NCHW -> lane-dense flat NHWC slab (N, H, W*Cin); cheap glue transform.
        x_flat = jnp.transpose(x_nchw, (0, 2, 3, 1)).reshape(N, H, W * Cin)

        n_backbone, n_extras = len(self.backbone), len(self.extras)
        kernel = _make_fused_kernel(n_backbone, n_extras, tuple(self.backbone_source))

        in_specs = [
            pl.BlockSpec((1, H, W * Cin), lambda n: (n, 0, 0)),
            pl.BlockSpec(tuple(shift.shape), lambda n: (0, 0, 0)),
        ]
        args = [x_flat, shift]
        for band, bias in zip(bands, biases):
            in_specs.append(pl.BlockSpec(tuple(band.shape), lambda n: (0, 0, 0)))
            in_specs.append(pl.BlockSpec(tuple(bias.shape), lambda n: (0, 0)))
            args += [band, bias]
        for m, g in zip(ms, gs):
            in_specs.append(pl.BlockSpec(tuple(m.shape), lambda n: (0, 0)))
            in_specs.append(pl.BlockSpec(tuple(g.shape), lambda n: (0, 0)))
            args += [m, g]

        # Output order matches PyTorch forward: L2Norm'd backbone sources, then extras.
        out_chans = ([self.backbone_chans[k][1] for k in self.backbone_source]
                     + [co for (_, co) in self.extras_chans])
        out_shape = tuple(jax.ShapeDtypeStruct((N, H, W * c), jnp.float32)
                          for c in out_chans)
        out_specs = [pl.BlockSpec((1, H, W * c), lambda n: (n, 0, 0))
                     for c in out_chans]

        outs = pl.pallas_call(
            kernel,
            out_shape=out_shape,
            grid_spec=pltpu.PrefetchScalarGridSpec(
                num_scalar_prefetch=0,
                grid=(N,),                      # batch axis: 'parallel' -> 2 TCs on v7x
                in_specs=in_specs,
                out_specs=out_specs,
            ),
            compiler_params=pltpu.CompilerParams(
                dimension_semantics=("parallel",)),
        )(*args)

        # Flat (N, H, W*C) -> NCHW; reshape/transpose of contiguous HBM arrays (glue).
        return [jnp.transpose(o.reshape(N, H, W, c), (0, 3, 1, 2))
                for o, c in zip(outs, out_chans)]

    # Pure-JAX reference (for correctness checking only).
    def reference(self, x_nchw):
        def conv_ref(x, w, b):
            y = jax.lax.conv_general_dilated(
                x, w, window_strides=(1, 1), padding="SAME",
                dimension_numbers=("NHWC", "HWIO", "NHWC"),
                precision=jax.lax.Precision.HIGHEST)
            return jnp.maximum(y + b, 0.0)

        def l2_ref(x, g):
            norm = jnp.sqrt(jnp.sum(x * x, axis=-1, keepdims=True)) + 1e-10
            return (x / norm) * g

        x = jnp.transpose(x_nchw, (0, 2, 3, 1))
        sources = []
        norm_ind = 0
        for k, (w, b) in enumerate(self.backbone):
            x = conv_ref(x, w, b)
            if k in self.backbone_source:
                sources.append(l2_ref(x, self.l2norm_gamma[norm_ind]))
                norm_ind += 1
        for (w, b) in self.extras:
            x = conv_ref(x, w, b)
            sources.append(x)
        return [jnp.transpose(s, (0, 3, 1, 2)) for s in sources]


# ----------------------------------------------------------------------------
if __name__ == "__main__":
    key = jax.random.PRNGKey(0)
    kx, kp = jax.random.split(key)

    # Small shapes consistent with the module: batch=2, in-channels=4, 16x16 spatial.
    x = jax.random.normal(kx, (2, 4, 16, 16), jnp.float32)   # NCHW input

    model = FeatureExtractorPallas(kp)
    sources = model(x)
    sources = [jax.block_until_ready(s) for s in sources]

    # Sanity check against a pure-JAX reference.
    refs = model.reference(x)
    for s, r in zip(sources, refs):
        assert s.shape == r.shape, (s.shape, r.shape)
        assert bool(jnp.all(jnp.isfinite(s)))
        assert bool(jnp.allclose(s, r, rtol=1e-2, atol=1e-2))

    print("KERNEL_OK")
</pallas_src>

<mosaic_0001>
module attributes {stable_mosaic.version = 11 : i64} {
  func.func @kernel(%arg0: i32, %arg1: memref<1x16x64xf32, #tpu.memory_space<vmem>>, %arg2: memref<2x16x16xf32, #tpu.memory_space<vmem>>, %arg3: memref<3x64x128xf32, #tpu.memory_space<vmem>>, %arg4: memref<1x128xf32, #tpu.memory_space<vmem>>, %arg5: memref<3x128x128xf32, #tpu.memory_space<vmem>>, %arg6: memref<1x128xf32, #tpu.memory_space<vmem>>, %arg7: memref<3x128x256xf32, #tpu.memory_space<vmem>>, %arg8: memref<1x256xf32, #tpu.memory_space<vmem>>, %arg9: memref<3x256x256xf32, #tpu.memory_space<vmem>>, %arg10: memref<1x256xf32, #tpu.memory_space<vmem>>, %arg11: memref<3x256x128xf32, #tpu.memory_space<vmem>>, %arg12: memref<1x128xf32, #tpu.memory_space<vmem>>, %arg13: memref<128x128xf32, #tpu.memory_space<vmem>>, %arg14: memref<1x128xf32, #tpu.memory_space<vmem>>, %arg15: memref<256x256xf32, #tpu.memory_space<vmem>>, %arg16: memref<1x256xf32, #tpu.memory_space<vmem>>, %arg17: memref<1x16x128xf32, #tpu.memory_space<vmem>>, %arg18: memref<1x16x256xf32, #tpu.memory_space<vmem>>, %arg19: memref<1x16x256xf32, #tpu.memory_space<vmem>>, %arg20: memref<1x16x128xf32, #tpu.memory_space<vmem>>) attributes {dimension_semantics = [#tpu.dimension_semantics<parallel>], iteration_bounds = array<i64: 2>, scalar_prefetch = 0 : i64, scratch_operands = 0 : i64, tpu.core_type = #tpu.core_type<tc>, window_params = [{transform_indices = @transform_0, window_bounds = array<i64: 1, 16, 64>}, {pipeline_mode = #tpu.pipeline_mode<synchronous>, transform_indices = @transform_1, window_bounds = array<i64: 2, 16, 16>}, {pipeline_mode = #tpu.pipeline_mode<synchronous>, transform_indices = @transform_2, window_bounds = array<i64: 3, 64, 128>}, {pipeline_mode = #tpu.pipeline_mode<synchronous>, transform_indices = @transform_3, window_bounds = array<i64: 1, 128>}, {pipeline_mode = #tpu.pipeline_mode<synchronous>, transform_indices = @transform_4, window_bounds = array<i64: 3, 128, 128>}, {pipeline_mode = #tpu.pipeline_mode<synchronous>, transform_indices = @transform_5, window_bounds = array<i64: 1, 128>}, {pipeline_mode = #tpu.pipeline_mode<synchronous>, transform_indices = @transform_6, window_bounds = array<i64: 3, 128, 256>}, {pipeline_mode = #tpu.pipeline_mode<synchronous>, transform_indices = @transform_7, window_bounds = array<i64: 1, 256>}, {pipeline_mode = #tpu.pipeline_mode<synchronous>, transform_indices = @transform_8, window_bounds = array<i64: 3, 256, 256>}, {pipeline_mode = #tpu.pipeline_mode<synchronous>, transform_indices = @transform_9, window_bounds = array<i64: 1, 256>}, {pipeline_mode = #tpu.pipeline_mode<synchronous>, transform_indices = @transform_10, window_bounds = array<i64: 3, 256, 128>}, {pipeline_mode = #tpu.pipeline_mode<synchronous>, transform_indices = @transform_11, window_bounds = array<i64: 1, 128>}, {pipeline_mode = #tpu.pipeline_mode<synchronous>, transform_indices = @transform_12, window_bounds = array<i64: 128, 128>}, {pipeline_mode = #tpu.pipeline_mode<synchronous>, transform_indices = @transform_13, window_bounds = array<i64: 1, 128>}, {pipeline_mode = #tpu.pipeline_mode<synchronous>, transform_indices = @transform_14, window_bounds = array<i64: 256, 256>}, {pipeline_mode = #tpu.pipeline_mode<synchronous>, transform_indices = @transform_15, window_bounds = array<i64: 1, 256>}, {transform_indices = @transform_16, window_bounds = array<i64: 1, 16, 128>}, {transform_indices = @transform_17, window_bounds = array<i64: 1, 16, 256>}, {transform_indices = @transform_18, window_bounds = array<i64: 1, 16, 256>}, {transform_indices = @transform_19, window_bounds = array<i64: 1, 16, 128>}]} {
    %c0 = arith.constant 0 : index
    %c0_0 = arith.constant 0 : index
    %c0_1 = arith.constant 0 : index
    %0 = vector.load %arg2[%c0, %c0_0, %c0_1] : memref<2x16x16xf32, #tpu.memory_space<vmem>>, vector<1x16x16xf32>
    %1 = vector.shape_cast %0 : vector<1x16x16xf32> to vector<16x16xf32>
    %c1 = arith.constant 1 : index
    %c0_2 = arith.constant 0 : index
    %c0_3 = arith.constant 0 : index
    %2 = vector.load %arg2[%c1, %c0_2, %c0_3] : memref<2x16x16xf32, #tpu.memory_space<vmem>>, vector<1x16x16xf32>
    %3 = vector.shape_cast %2 : vector<1x16x16xf32> to vector<16x16xf32>
    %c0_4 = arith.constant 0 : index
    %c0_5 = arith.constant 0 : index
    %c0_6 = arith.constant 0 : index
    %4 = vector.load %arg1[%c0_4, %c0_5, %c0_6] : memref<1x16x64xf32, #tpu.memory_space<vmem>>, vector<1x16x64xf32>
    %5 = vector.shape_cast %4 : vector<1x16x64xf32> to vector<16x64xf32>
    %cst = arith.constant dense<0.000000e+00> : vector<16x64xf32>
    %6 = tpu.matmul %1, %5, %cst {dimension_numbers = #tpu.dot_dimension_numbers<[1], [0], [0], [1], [0, 0, 1, 1], [], []>} : vector<16x16xf32>, vector<16x64xf32>, vector<16x64xf32> -> vector<16x64xf32>
    %cst_7 = arith.constant dense<0.000000e+00> : vector<16x64xf32>
    %7 = tpu.matmul %3, %5, %cst_7 {dimension_numbers = #tpu.dot_dimension_numbers<[1], [0], [0], [1], [0, 0, 1, 1], [], []>} : vector<16x16xf32>, vector<16x64xf32>, vector<16x64xf32> -> vector<16x64xf32>
    %c0_8 = arith.constant 0 : index
    %c0_9 = arith.constant 0 : index
    %c0_10 = arith.constant 0 : index
    %8 = vector.load %arg3[%c0_8, %c0_9, %c0_10] : memref<3x64x128xf32, #tpu.memory_space<vmem>>, vector<1x64x128xf32>
    %9 = vector.shape_cast %8 : vector<1x64x128xf32> to vector<64x128xf32>
    %cst_11 = arith.constant dense<0.000000e+00> : vector<16x128xf32>
    %10 = tpu.matmul %6, %9, %cst_11 {dimension_numbers = #tpu.dot_dimension_numbers<[1], [0], [0], [1], [0, 0, 1, 1], [], []>} : vector<16x64xf32>, vector<64x128xf32>, vector<16x128xf32> -> vector<16x128xf32>
    %c1_12 = arith.constant 1 : index
    %c0_13 = arith.constant 0 : index
    %c0_14 = arith.constant 0 : index
    %11 = vector.load %arg3[%c1_12, %c0_13, %c0_14] : memref<3x64x128xf32, #tpu.memory_space<vmem>>, vector<1x64x128xf32>
    %12 = vector.shape_cast %11 : vector<1x64x128xf32> to vector<64x128xf32>
    %cst_15 = arith.constant dense<0.000000e+00> : vector<16x128xf32>
    %13 = tpu.matmul %5, %12, %cst_15 {dimension_numbers = #tpu.dot_dimension_numbers<[1], [0], [0], [1], [0, 0, 1, 1], [], []>} : vector<16x64xf32>, vector<64x128xf32>, vector<16x128xf32> -> vector<16x128xf32>
    %14 = arith.addf %10, %13 : vector<16x128xf32>
    %c2 = arith.constant 2 : index
    %c0_16 = arith.constant 0 : index
    %c0_17 = arith.constant 0 : index
    %15 = vector.load %arg3[%c2, %c0_16, %c0_17] : memref<3x64x128xf32, #tpu.memory_space<vmem>>, vector<1x64x128xf32>
    %16 = vector.shape_cast %15 : vector<1x64x128xf32> to vector<64x128xf32>
    %cst_18 = arith.constant dense<0.000000e+00> : vector<16x128xf32>
    %17 = tpu.matmul %7, %16, %cst_18 {dimension_numbers = #tpu.dot_dimension_numbers<[1], [0], [0], [1], [0, 0, 1, 1], [], []>} : vector<16x64xf32>, vector<64x128xf32>, vector<16x128xf32> -> vector<16x128xf32>
    %18 = arith.addf %14, %17 : vector<16x128xf32>
    %c0_19 = arith.constant 0 : index
    %c0_20 = arith.constant 0 : index
    %19 = vector.load %arg4[%c0_19, %c0_20] : memref<1x128xf32, #tpu.memory_space<vmem>>, vector<1x128xf32>
    %20 = vector.broadcast %19 : vector<1x128xf32> to vector<16x128xf32>
    %21 = arith.addf %18, %20 : vector<16x128xf32>
    %cst_21 = arith.constant 0.000000e+00 : f32
    %22 = vector.broadcast %cst_21 : f32 to vector<16x128xf32>
    %23 = arith.maximumf %21, %22 : vector<16x128xf32>
    %cst_22 = arith.constant dense<0.000000e+00> : vector<16x128xf32>
    %24 = tpu.matmul %1, %23, %cst_22 {dimension_numbers = #tpu.dot_dimension_numbers<[1], [0], [0], [1], [0, 0, 1, 1], [], []>} : vector<16x16xf32>, vector<16x128xf32>, vector<16x128xf32> -> vector<16x128xf32>
    %cst_23 = arith.constant dense<0.000000e+00> : vector<16x128xf32>
    %25 = tpu.matmul %3, %23, %cst_23 {dimension_numbers = #tpu.dot_dimension_numbers<[1], [0], [0], [1], [0, 0, 1, 1], [], []>} : vector<16x16xf32>, vector<16x128xf32>, vector<16x128xf32> -> vector<16x128xf32>
    %c0_24 = arith.constant 0 : index
    %c0_25 = arith.constant 0 : index
    %c0_26 = arith.constant 0 : index
    %26 = vector.load %arg5[%c0_24, %c0_25, %c0_26] : memref<3x128x128xf32, #tpu.memory_space<vmem>>, vector<1x128x128xf32>
    %27 = vector.shape_cast %26 : vector<1x128x128xf32> to vector<128x128xf32>
    %cst_27 = arith.constant dense<0.000000e+00> : vector<16x128xf32>
    %28 = tpu.matmul %24, %27, %cst_27 {dimension_numbers = #tpu.dot_dimension_numbers<[1], [0], [0], [1], [0, 0, 1, 1], [], []>} : vector<16x128xf32>, vector<128x128xf32>, vector<16x128xf32> -> vector<16x128xf32>
    %c1_28 = arith.constant 1 : index
    %c0_29 = arith.constant 0 : index
    %c0_30 = arith.constant 0 : index
    %29 = vector.load %arg5[%c1_28, %c0_29, %c0_30] : memref<3x128x128xf32, #tpu.memory_space<vmem>>, vector<1x128x128xf32>
    %30 = vector.shape_cast %29 : vector<1x128x128xf32> to vector<128x128xf32>
    %cst_31 = arith.constant dense<0.000000e+00> : vector<16x128xf32>
    %31 = tpu.matmul %23, %30, %cst_31 {dimension_numbers = #tpu.dot_dimension_numbers<[1], [0], [0], [1], [0, 0, 1, 1], [], []>} : vector<16x128xf32>, vector<128x128xf32>, vector<16x128xf32> -> vector<16x128xf32>
    %32 = arith.addf %28, %31 : vector<16x128xf32>
    %c2_32 = arith.constant 2 : index
    %c0_33 = arith.constant 0 : index
    %c0_34 = arith.constant 0 : index
    %33 = vector.load %arg5[%c2_32, %c0_33, %c0_34] : memref<3x128x128xf32, #tpu.memory_space<vmem>>, vector<1x128x128xf32>
    %34 = vector.shape_cast %33 : vector<1x128x128xf32> to vector<128x128xf32>
    %cst_35 = arith.constant dense<0.000000e+00> : vector<16x128xf32>
    %35 = tpu.matmul %25, %34, %cst_35 {dimension_numbers = #tpu.dot_dimension_numbers<[1], [0], [0], [1], [0, 0, 1, 1], [], []>} : vector<16x128xf32>, vector<128x128xf32>, vector<16x128xf32> -> vector<16x128xf32>
    %36 = arith.addf %32, %35 : vector<16x128xf32>
    %c0_36 = arith.constant 0 : index
    %c0_37 = arith.constant 0 : index
    %37 = vector.load %arg6[%c0_36, %c0_37] : memref<1x128xf32, #tpu.memory_space<vmem>>, vector<1x128xf32>
    %38 = vector.broadcast %37 : vector<1x128xf32> to vector<16x128xf32>
    %39 = arith.addf %36, %38 : vector<16x128xf32>
    %cst_38 = arith.constant 0.000000e+00 : f32
    %40 = vector.broadcast %cst_38 : f32 to vector<16x128xf32>
    %41 = arith.maximumf %39, %40 : vector<16x128xf32>
    %42 = arith.mulf %41, %41 : vector<16x128xf32>
    %c0_39 = arith.constant 0 : index
    %c0_40 = arith.constant 0 : index
    %43 = vector.load %arg13[%c0_39, %c0_40] : memref<128x128xf32, #tpu.memory_space<vmem>>, vector<128x128xf32>
    %cst_41 = arith.constant dense<0.000000e+00> : vector<16x128xf32>
    %44 = tpu.matmul %42, %43, %cst_41 {dimension_numbers = #tpu.dot_dimension_numbers<[1], [0], [0], [1], [0, 0, 1, 1], [], []>} : vector<16x128xf32>, vector<128x128xf32>, vector<16x128xf32> -> vector<16x128xf32>
    %45 = math.sqrt %44 : vector<16x128xf32>
    %cst_42 = arith.constant 1.000000e-10 : f32
    %46 = vector.broadcast %cst_42 : f32 to vector<16x128xf32>
    %47 = arith.addf %45, %46 : vector<16x128xf32>
    %48 = tpu.reciprocal %47 {approx = true} : vector<16x128xf32> -> vector<16x128xf32>
    %49 = arith.mulf %41, %48 : vector<16x128xf32>
    %c0_43 = arith.constant 0 : index
    %c0_44 = arith.constant 0 : index
    %50 = vector.load %arg14[%c0_43, %c0_44] : memref<1x128xf32, #tpu.memory_space<vmem>>, vector<1x128xf32>
    %51 = vector.broadcast %50 : vector<1x128xf32> to vector<16x128xf32>
    %52 = arith.mulf %49, %51 : vector<16x128xf32>
    %c0_45 = arith.constant 0 : index
    %c0_46 = arith.constant 0 : index
    %c0_47 = arith.constant 0 : index
    %53 = vector.load %arg17[%c0_45, %c0_46, %c0_47] : memref<1x16x128xf32, #tpu.memory_space<vmem>>, vector<1x16x128xf32>
    %54 = vector.shape_cast %53 : vector<1x16x128xf32> to vector<16x128xf32>
    %55 = vector.shape_cast %52 : vector<16x128xf32> to vector<1x16x128xf32>
    tpu.vector_store %arg17[%c0_45, %c0_46, %c0_47], %55 {strides = array<i32>} : memref<1x16x128xf32, #tpu.memory_space<vmem>>, vector<1x16x128xf32>,
    %cst_48 = arith.constant dense<0.000000e+00> : vector<16x128xf32>
    %56 = tpu.matmul %1, %41, %cst_48 {dimension_numbers = #tpu.dot_dimension_numbers<[1], [0], [0], [1], [0, 0, 1, 1], [], []>} : vector<16x16xf32>, vector<16x128xf32>, vector<16x128xf32> -> vector<16x128xf32>
    %cst_49 = arith.constant dense<0.000000e+00> : vector<16x128xf32>
    %57 = tpu.matmul %3, %41, %cst_49 {dimension_numbers = #tpu.dot_dimension_numbers<[1], [0], [0], [1], [0, 0, 1, 1], [], []>} : vector<16x16xf32>, vector<16x128xf32>, vector<16x128xf32> -> vector<16x128xf32>
    %c0_50 = arith.constant 0 : index
    %c0_51 = arith.constant 0 : index
    %c0_52 = arith.constant 0 : index
    %58 = vector.load %arg7[%c0_50, %c0_51, %c0_52] : memref<3x128x256xf32, #tpu.memory_space<vmem>>, vector<1x128x256xf32>
    %59 = vector.shape_cast %58 : vector<1x128x256xf32> to vector<128x256xf32>
    %cst_53 = arith.constant dense<0.000000e+00> : vector<16x256xf32>
    %60 = tpu.matmul %56, %59, %cst_53 {dimension_numbers = #tpu.dot_dimension_numbers<[1], [0], [0], [1], [0, 0, 1, 1], [], []>} : vector<16x128xf32>, vector<128x256xf32>, vector<16x256xf32> -> vector<16x256xf32>
    %c1_54 = arith.constant 1 : index
    %c0_55 = arith.constant 0 : index
    %c0_56 = arith.constant 0 : index
    %61 = vector.load %arg7[%c1_54, %c0_55, %c0_56] : memref<3x128x256xf32, #tpu.memory_space<vmem>>, vector<1x128x256xf32>
    %62 = vector.shape_cast %61 : vector<1x128x256xf32> to vector<128x256xf32>
    %cst_57 = arith.constant dense<0.000000e+00> : vector<16x256xf32>
    %63 = tpu.matmul %41, %62, %cst_57 {dimension_numbers = #tpu.dot_dimension_numbers<[1], [0], [0], [1], [0, 0, 1, 1], [], []>} : vector<16x128xf32>, vector<128x256xf32>, vector<16x256xf32> -> vector<16x256xf32>
    %64 = arith.addf %60, %63 : vector<16x256xf32>
    %c2_58 = arith.constant 2 : index
    %c0_59 = arith.constant 0 : index
    %c0_60 = arith.constant 0 : index
    %65 = vector.load %arg7[%c2_58, %c0_59, %c0_60] : memref<3x128x256xf32, #tpu.memory_space<vmem>>, vector<1x128x256xf32>
    %66 = vector.shape_cast %65 : vector<1x128x256xf32> to vector<128x256xf32>
    %cst_61 = arith.constant dense<0.000000e+00> : vector<16x256xf32>
    %67 = tpu.matmul %57, %66, %cst_61 {dimension_numbers = #tpu.dot_dimension_numbers<[1], [0], [0], [1], [0, 0, 1, 1], [], []>} : vector<16x128xf32>, vector<128x256xf32>, vector<16x256xf32> -> vector<16x256xf32>
    %68 = arith.addf %64, %67 : vector<16x256xf32>
    %c0_62 = arith.constant 0 : index
    %c0_63 = arith.constant 0 : index
    %69 = vector.load %arg8[%c0_62, %c0_63] : memref<1x256xf32, #tpu.memory_space<vmem>>, vector<1x256xf32>
    %70 = vector.broadcast %69 : vector<1x256xf32> to vector<16x256xf32>
    %71 = arith.addf %68, %70 : vector<16x256xf32>
    %cst_64 = arith.constant 0.000000e+00 : f32
    %72 = vector.broadcast %cst_64 : f32 to vector<16x256xf32>
    %73 = arith.maximumf %71, %72 : vector<16x256xf32>
    %74 = arith.mulf %73, %73 : vector<16x256xf32>
    %c0_65 = arith.constant 0 : index
    %c0_66 = arith.constant 0 : index
    %75 = vector.load %arg15[%c0_65, %c0_66] : memref<256x256xf32, #tpu.memory_space<vmem>>, vector<256x256xf32>
    %cst_67 = arith.constant dense<0.000000e+00> : vector<16x256xf32>
    %76 = tpu.matmul %74, %75, %cst_67 {dimension_numbers = #tpu.dot_dimension_numbers<[1], [0], [0], [1], [0, 0, 1, 1], [], []>} : vector<16x256xf32>, vector<256x256xf32>, vector<16x256xf32> -> vector<16x256xf32>
    %77 = math.sqrt %76 : vector<16x256xf32>
    %cst_68 = arith.constant 1.000000e-10 : f32
    %78 = vector.broadcast %cst_68 : f32 to vector<16x256xf32>
    %79 = arith.addf %77, %78 : vector<16x256xf32>
    %80 = tpu.reciprocal %79 {approx = true} : vector<16x256xf32> -> vector<16x256xf32>
    %81 = arith.mulf %73, %80 : vector<16x256xf32>
    %c0_69 = arith.constant 0 : index
    %c0_70 = arith.constant 0 : index
    %82 = vector.load %arg16[%c0_69, %c0_70] : memref<1x256xf32, #tpu.memory_space<vmem>>, vector<1x256xf32>
    %83 = vector.broadcast %82 : vector<1x256xf32> to vector<16x256xf32>
    %84 = arith.mulf %81, %83 : vector<16x256xf32>
    %c0_71 = arith.constant 0 : index
    %c0_72 = arith.constant 0 : index
    %c0_73 = arith.constant 0 : index
    %85 = vector.load %arg18[%c0_71, %c0_72, %c0_73] : memref<1x16x256xf32, #tpu.memory_space<vmem>>, vector<1x16x256xf32>
    %86 = vector.shape_cast %85 : vector<1x16x256xf32> to vector<16x256xf32>
    %87 = vector.shape_cast %84 : vector<16x256xf32> to vector<1x16x256xf32>
    tpu.vector_store %arg18[%c0_71, %c0_72, %c0_73], %87 {strides = array<i32>} : memref<1x16x256xf32, #tpu.memory_space<vmem>>, vector<1x16x256xf32>,
    %cst_74 = arith.constant dense<0.000000e+00> : vector<16x256xf32>
    %88 = tpu.matmul %1, %73, %cst_74 {dimension_numbers = #tpu.dot_dimension_numbers<[1], [0], [0], [1], [0, 0, 1, 1], [], []>} : vector<16x16xf32>, vector<16x256xf32>, vector<16x256xf32> -> vector<16x256xf32>
    %cst_75 = arith.constant dense<0.000000e+00> : vector<16x256xf32>
    %89 = tpu.matmul %3, %73, %cst_75 {dimension_numbers = #tpu.dot_dimension_numbers<[1], [0], [0], [1], [0, 0, 1, 1], [], []>} : vector<16x16xf32>, vector<16x256xf32>, vector<16x256xf32> -> vector<16x256xf32>
    %c0_76 = arith.constant 0 : index
    %c0_77 = arith.constant 0 : index
    %c0_78 = arith.constant 0 : index
    %90 = vector.load %arg9[%c0_76, %c0_77, %c0_78] : memref<3x256x256xf32, #tpu.memory_space<vmem>>, vector<1x256x256xf32>
    %91 = vector.shape_cast %90 : vector<1x256x256xf32> to vector<256x256xf32>
    %cst_79 = arith.constant dense<0.000000e+00> : vector<16x256xf32>
    %92 = tpu.matmul %88, %91, %cst_79 {dimension_numbers = #tpu.dot_dimension_numbers<[1], [0], [0], [1], [0, 0, 1, 1], [], []>} : vector<16x256xf32>, vector<256x256xf32>, vector<16x256xf32> -> vector<16x256xf32>
    %c1_80 = arith.constant 1 : index
    %c0_81 = arith.constant 0 : index
    %c0_82 = arith.constant 0 : index
    %93 = vector.load %arg9[%c1_80, %c0_81, %c0_82] : memref<3x256x256xf32, #tpu.memory_space<vmem>>, vector<1x256x256xf32>
    %94 = vector.shape_cast %93 : vector<1x256x256xf32> to vector<256x256xf32>
    %cst_83 = arith.constant dense<0.000000e+00> : vector<16x256xf32>
    %95 = tpu.matmul %73, %94, %cst_83 {dimension_numbers = #tpu.dot_dimension_numbers<[1], [0], [0], [1], [0, 0, 1, 1], [], []>} : vector<16x256xf32>, vector<256x256xf32>, vector<16x256xf32> -> vector<16x256xf32>
    %96 = arith.addf %92, %95 : vector<16x256xf32>
    %c2_84 = arith.constant 2 : index
    %c0_85 = arith.constant 0 : index
    %c0_86 = arith.constant 0 : index
    %97 = vector.load %arg9[%c2_84, %c0_85, %c0_86] : memref<3x256x256xf32, #tpu.memory_space<vmem>>, vector<1x256x256xf32>
    %98 = vector.shape_cast %97 : vector<1x256x256xf32> to vector<256x256xf32>
    %cst_87 = arith.constant dense<0.000000e+00> : vector<16x256xf32>
    %99 = tpu.matmul %89, %98, %cst_87 {dimension_numbers = #tpu.dot_dimension_numbers<[1], [0], [0], [1], [0, 0, 1, 1], [], []>} : vector<16x256xf32>, vector<256x256xf32>, vector<16x256xf32> -> vector<16x256xf32>
    %100 = arith.addf %96, %99 : vector<16x256xf32>
    %c0_88 = arith.constant 0 : index
    %c0_89 = arith.constant 0 : index
    %101 = vector.load %arg10[%c0_88, %c0_89] : memref<1x256xf32, #tpu.memory_space<vmem>>, vector<1x256xf32>
    %102 = vector.broadcast %101 : vector<1x256xf32> to vector<16x256xf32>
    %103 = arith.addf %100, %102 : vector<16x256xf32>
    %cst_90 = arith.constant 0.000000e+00 : f32
    %104 = vector.broadcast %cst_90 : f32 to vector<16x256xf32>
    %105 = arith.maximumf %103, %104 : vector<16x256xf32>
    %c0_91 = arith.constant 0 : index
    %c0_92 = arith.constant 0 : index
    %c0_93 = arith.constant 0 : index
    %106 = vector.load %arg19[%c0_91, %c0_92, %c0_93] : memref<1x16x256xf32, #tpu.memory_space<vmem>>, vector<1x16x256xf32>
    %107 = vector.shape_cast %106 : vector<1x16x256xf32> to vector<16x256xf32>
    %108 = vector.shape_cast %105 : vector<16x256xf32> to vector<1x16x256xf32>
    tpu.vector_store %arg19[%c0_91, %c0_92, %c0_93], %108 {strides = array<i32>} : memref<1x16x256xf32, #tpu.memory_space<vmem>>, vector<1x16x256xf32>,
    %cst_94 = arith.constant dense<0.000000e+00> : vector<16x256xf32>
    %109 = tpu.matmul %1, %105, %cst_94 {dimension_numbers = #tpu.dot_dimension_numbers<[1], [0], [0], [1], [0, 0, 1, 1], [], []>} : vector<16x16xf32>, vector<16x256xf32>, vector<16x256xf32> -> vector<16x256xf32>
    %cst_95 = arith.constant dense<0.000000e+00> : vector<16x256xf32>
    %110 = tpu.matmul %3, %105, %cst_95 {dimension_numbers = #tpu.dot_dimension_numbers<[1], [0], [0], [1], [0, 0, 1, 1], [], []>} : vector<16x16xf32>, vector<16x256xf32>, vector<16x256xf32> -> vector<16x256xf32>
    %c0_96 = arith.constant 0 : index
    %c0_97 = arith.constant 0 : index
    %c0_98 = arith.constant 0 : index
    %111 = vector.load %arg11[%c0_96, %c0_97, %c0_98] : memref<3x256x128xf32, #tpu.memory_space<vmem>>, vector<1x256x128xf32>
    %112 = vector.shape_cast %111 : vector<1x256x128xf32> to vector<256x128xf32>
    %cst_99 = arith.constant dense<0.000000e+00> : vector<16x128xf32>
    %113 = tpu.matmul %109, %112, %cst_99 {dimension_numbers = #tpu.dot_dimension_numbers<[1], [0], [0], [1], [0, 0, 1, 1], [], []>} : vector<16x256xf32>, vector<256x128xf32>, vector<16x128xf32> -> vector<16x128xf32>
    %c1_100 = arith.constant 1 : index
    %c0_101 = arith.constant 0 : index
    %c0_102 = arith.constant 0 : index
    %114 = vector.load %arg11[%c1_100, %c0_101, %c0_102] : memref<3x256x128xf32, #tpu.memory_space<vmem>>, vector<1x256x128xf32>
    %115 = vector.shape_cast %114 : vector<1x256x128xf32> to vector<256x128xf32>
    %cst_103 = arith.constant dense<0.000000e+00> : vector<16x128xf32>
    %116 = tpu.matmul %105, %115, %cst_103 {dimension_numbers = #tpu.dot_dimension_numbers<[1], [0], [0], [1], [0, 0, 1, 1], [], []>} : vector<16x256xf32>, vector<256x128xf32>, vector<16x128xf32> -> vector<16x128xf32>
    %117 = arith.addf %113, %116 : vector<16x128xf32>
    %c2_104 = arith.constant 2 : index
    %c0_105 = arith.constant 0 : index
    %c0_106 = arith.constant 0 : index
    %118 = vector.load %arg11[%c2_104, %c0_105, %c0_106] : memref<3x256x128xf32, #tpu.memory_space<vmem>>, vector<1x256x128xf32>
    %119 = vector.shape_cast %118 : vector<1x256x128xf32> to vector<256x128xf32>
    %cst_107 = arith.constant dense<0.000000e+00> : vector<16x128xf32>
    %120 = tpu.matmul %110, %119, %cst_107 {dimension_numbers = #tpu.dot_dimension_numbers<[1], [0], [0], [1], [0, 0, 1, 1], [], []>} : vector<16x256xf32>, vector<256x128xf32>, vector<16x128xf32> -> vector<16x128xf32>
    %121 = arith.addf %117, %120 : vector<16x128xf32>
    %c0_108 = arith.constant 0 : index
    %c0_109 = arith.constant 0 : index
    %122 = vector.load %arg12[%c0_108, %c0_109] : memref<1x128xf32, #tpu.memory_space<vmem>>, vector<1x128xf32>
    %123 = vector.broadcast %122 : vector<1x128xf32> to vector<16x128xf32>
    %124 = arith.addf %121, %123 : vector<16x128xf32>
    %cst_110 = arith.constant 0.000000e+00 : f32
    %125 = vector.broadcast %cst_110 : f32 to vector<16x128xf32>
    %126 = arith.maximumf %124, %125 : vector<16x128xf32>
    %c0_111 = arith.constant 0 : index
    %c0_112 = arith.constant 0 : index
    %c0_113 = arith.constant 0 : index
    %127 = vector.load %arg20[%c0_111, %c0_112, %c0_113] : memref<1x16x128xf32, #tpu.memory_space<vmem>>, vector<1x16x128xf32>
    %128 = vector.shape_cast %127 : vector<1x16x128xf32> to vector<16x128xf32>
    %129 = vector.shape_cast %126 : vector<16x128xf32> to vector<1x16x128xf32>
    tpu.vector_store %arg20[%c0_111, %c0_112, %c0_113], %129 {strides = array<i32>} : memref<1x16x128xf32, #tpu.memory_space<vmem>>, vector<1x16x128xf32>,
    return
  }
  func.func @transform_0(%arg0: i32) -> (i32, i32, i32) {
    %c0_i32 = arith.constant 0 : i32
    %c0_i32_0 = arith.constant 0 : i32
    %c0_i32_1 = arith.constant 0 : i32
    return %arg0, %c0_i32, %c0_i32_0 : i32, i32, i32
  }
  func.func @transform_1(%arg0: i32) -> (i32, i32, i32) {
    %c0_i32 = arith.constant 0 : i32
    %c0_i32_0 = arith.constant 0 : i32
    %c0_i32_1 = arith.constant 0 : i32
    %c0_i32_2 = arith.constant 0 : i32
    return %c0_i32, %c0_i32_0, %c0_i32_1 : i32, i32, i32
  }
  func.func @transform_2(%arg0: i32) -> (i32, i32, i32) {
    %c0_i32 = arith.constant 0 : i32
    %c0_i32_0 = arith.constant 0 : i32
    %c0_i32_1 = arith.constant 0 : i32
    %c0_i32_2 = arith.constant 0 : i32
    return %c0_i32, %c0_i32_0, %c0_i32_1 : i32, i32, i32
  }
  func.func @transform_3(%arg0: i32) -> (i32, i32) {
    %c0_i32 = arith.constant 0 : i32
    %c0_i32_0 = arith.constant 0 : i32
    %c0_i32_1 = arith.constant 0 : i32
    return %c0_i32, %c0_i32_0 : i32, i32
  }
  func.func @transform_4(%arg0: i32) -> (i32, i32, i32) {
    %c0_i32 = arith.constant 0 : i32
    %c0_i32_0 = arith.constant 0 : i32
    %c0_i32_1 = arith.constant 0 : i32
    %c0_i32_2 = arith.constant 0 : i32
    return %c0_i32, %c0_i32_0, %c0_i32_1 : i32, i32, i32
  }
  func.func @transform_5(%arg0: i32) -> (i32, i32) {
    %c0_i32 = arith.constant 0 : i32
    %c0_i32_0 = arith.constant 0 : i32
    %c0_i32_1 = arith.constant 0 : i32
    return %c0_i32, %c0_i32_0 : i32, i32
  }
  func.func @transform_6(%arg0: i32) -> (i32, i32, i32) {
    %c0_i32 = arith.constant 0 : i32
    %c0_i32_0 = arith.constant 0 : i32
    %c0_i32_1 = arith.constant 0 : i32
    %c0_i32_2 = arith.constant 0 : i32
    return %c0_i32, %c0_i32_0, %c0_i32_1 : i32, i32, i32
  }
  func.func @transform_7(%arg0: i32) -> (i32, i32) {
    %c0_i32 = arith.constant 0 : i32
    %c0_i32_0 = arith.constant 0 : i32
    %c0_i32_1 = arith.constant 0 : i32
    return %c0_i32, %c0_i32_0 : i32, i32
  }
  func.func @transform_8(%arg0: i32) -> (i32, i32, i32) {
    %c0_i32 = arith.constant 0 : i32
    %c0_i32_0 = arith.constant 0 : i32
    %c0_i32_1 = arith.constant 0 : i32
    %c0_i32_2 = arith.constant 0 : i32
    return %c0_i32, %c0_i32_0, %c0_i32_1 : i32, i32, i32
  }
  func.func @transform_9(%arg0: i32) -> (i32, i32) {
    %c0_i32 = arith.constant 0 : i32
    %c0_i32_0 = arith.constant 0 : i32
    %c0_i32_1 = arith.constant 0 : i32
    return %c0_i32, %c0_i32_0 : i32, i32
  }
  func.func @transform_10(%arg0: i32) -> (i32, i32, i32) {
    %c0_i32 = arith.constant 0 : i32
    %c0_i32_0 = arith.constant 0 : i32
    %c0_i32_1 = arith.constant 0 : i32
    %c0_i32_2 = arith.constant 0 : i32
    return %c0_i32, %c0_i32_0, %c0_i32_1 : i32, i32, i32
  }
  func.func @transform_11(%arg0: i32) -> (i32, i32) {
    %c0_i32 = arith.constant 0 : i32
    %c0_i32_0 = arith.constant 0 : i32
    %c0_i32_1 = arith.constant 0 : i32
    return %c0_i32, %c0_i32_0 : i32, i32
  }
  func.func @transform_12(%arg0: i32) -> (i32, i32) {
    %c0_i32 = arith.constant 0 : i32
    %c0_i32_0 = arith.constant 0 : i32
    %c0_i32_1 = arith.constant 0 : i32
    return %c0_i32, %c0_i32_0 : i32, i32
  }
  func.func @transform_13(%arg0: i32) -> (i32, i32) {
    %c0_i32 = arith.constant 0 : i32
    %c0_i32_0 = arith.constant 0 : i32
    %c0_i32_1 = arith.constant 0 : i32
    return %c0_i32, %c0_i32_0 : i32, i32
  }
  func.func @transform_14(%arg0: i32) -> (i32, i32) {
    %c0_i32 = arith.constant 0 : i32
    %c0_i32_0 = arith.constant 0 : i32
    %c0_i32_1 = arith.constant 0 : i32
    return %c0_i32, %c0_i32_0 : i32, i32
  }
  func.func @transform_15(%arg0: i32) -> (i32, i32) {
    %c0_i32 = arith.constant 0 : i32
    %c0_i32_0 = arith.constant 0 : i32
    %c0_i32_1 = arith.constant 0 : i32
    return %c0_i32, %c0_i32_0 : i32, i32
  }
  func.func @transform_16(%arg0: i32) -> (i32, i32, i32) {
    %c0_i32 = arith.constant 0 : i32
    %c0_i32_0 = arith.constant 0 : i32
    %c0_i32_1 = arith.constant 0 : i32
    return %arg0, %c0_i32, %c0_i32_0 : i32, i32, i32
  }
  func.func @transform_17(%arg0: i32) -> (i32, i32, i32) {
    %c0_i32 = arith.constant 0 : i32
    %c0_i32_0 = arith.constant 0 : i32
    %c0_i32_1 = arith.constant 0 : i32
    return %arg0, %c0_i32, %c0_i32_0 : i32, i32, i32
  }
  func.func @transform_18(%arg0: i32) -> (i32, i32, i32) {
    %c0_i32 = arith.constant 0 : i32
    %c0_i32_0 = arith.constant 0 : i32
    %c0_i32_1 = arith.constant 0 : i32
    return %arg0, %c0_i32, %c0_i32_0 : i32, i32, i32
  }
  func.func @transform_19(%arg0: i32) -> (i32, i32, i32) {
    %c0_i32 = arith.constant 0 : i32
    %c0_i32_0 = arith.constant 0 : i32
    %c0_i32_1 = arith.constant 0 : i32
    return %arg0, %c0_i32, %c0_i32_0 : i32, i32, i32
  }
}

</mosaic_0001>

<llo_original>
// kernel: tpu_custom_call.1
$region0: #{tpu_custom_call.1}
  #allocation0 [shape = 'u32[]', space=smem, size = 0x4, offset = 0x4, fixed_abs, tag = 'smem constant byte address 0x4 - core index']
  #allocation1 [shape = 'u32[72,128]{1,0:T(1,128)}', space=vmem, size = 0x9000, scoped, tag = 'internal scratch']
  %s0 = inlined_call_operand.hbm [shape: f32[2,16,64], index: 0, kind: input, shape index: {}]
  %s1 = inlined_call_operand.hbm [shape: f32[2,16,16], index: 1, kind: input, shape index: {}]
  %s2 = inlined_call_operand.hbm [shape: f32[3,64,128], index: 2, kind: input, shape index: {}]
  %s3 = inlined_call_operand.hbm [shape: f32[1,128], index: 3, kind: input, shape index: {}]
  %s4 = inlined_call_operand.hbm [shape: f32[3,128,128], index: 4, kind: input, shape index: {}]
  %s5 = inlined_call_operand.hbm [shape: f32[1,128], index: 5, kind: input, shape index: {}]
  %s6 = inlined_call_operand.hbm [shape: f32[3,128,256], index: 6, kind: input, shape index: {}]
  %s7 = inlined_call_operand.vmem [shape: f32[1,256], index: 7, kind: input, shape index: {}]
  %s8 = inlined_call_operand.hbm [shape: f32[3,256,256], index: 8, kind: input, shape index: {}]
  %s9 = inlined_call_operand.vmem [shape: f32[1,256], index: 9, kind: input, shape index: {}]
  %s10 = inlined_call_operand.hbm [shape: f32[3,256,128], index: 10, kind: input, shape index: {}]
  %s11 = inlined_call_operand.vmem [shape: f32[1,128], index: 11, kind: input, shape index: {}]
  %s12 = inlined_call_operand.hbm [shape: f32[128,128], index: 12, kind: input, shape index: {}]
  %s13 = inlined_call_operand.vmem [shape: f32[1,128], index: 13, kind: input, shape index: {}]
  %s14 = inlined_call_operand.hbm [shape: f32[256,256], index: 14, kind: input, shape index: {}]
  %s15 = inlined_call_operand.vmem [shape: f32[1,256], index: 15, kind: input, shape index: {}]
  %s16 = inlined_call_operand.hbm [shape: f32[2,16,128], index: 16, kind: output, shape index: {0}]
  %s17 = inlined_call_operand.hbm [shape: f32[2,16,256], index: 17, kind: output, shape index: {1}]
  %s18 = inlined_call_operand.hbm [shape: f32[2,16,256], index: 18, kind: output, shape index: {2}]
  %s19 = inlined_call_operand.hbm [shape: f32[2,16,128], index: 19, kind: output, shape index: {3}]
  %20 = xla_tuple %s16, %s17, %s18, %s19
  %s21 = sld [smem:[#allocation0]]
  $region165: #{tpu_custom_call.1} parent=0
    _
  %s23 = ssub.s32 1, %s21
  %s24 = scalar_select 0, %s23, %s21
  $region1: #{tpu_custom_call.1} parent=0
    #allocation2 [shape = 'u8[16384]{0}', space=vmem, size = 0x4000, scoped, tag = 'input window, operand 0']
    #allocation3 [shape = 's32[2]{0}', space=sflag, size = 0x8, scoped, tag = 'scoped memory for tpu_custom_call.1']
    #allocation4 [shape = 's32[2]{0}', space=sflag, size = 0x8, scoped, tag = 'scoped memory for tpu_custom_call.1']
    #allocation5 [shape = 'u8[16384]{0}', space=vmem, size = 0x4000, scoped, tag = 'input window, operand 1, single buffered']
    #allocation6 [shape = 's32[1]{0}', space=sflag, size = 0x4, scoped, tag = 'scoped memory for tpu_custom_call.1']
    #allocation7 [shape = 'u8[98304]{0}', space=vmem, size = 0x18000, scoped, tag = 'input window, operand 2, single buffered']
    #allocation8 [shape = 'u8[512]{0}', space=vmem, size = 0x400, scoped, tag = 'input window, operand 3, single buffered']
    #allocation9 [shape = 's32[1]{0}', space=sflag, size = 0x4, scoped, tag = 'scoped memory for tpu_custom_call.1']
    #allocation10 [shape = 'u8[196608]{0}', space=vmem, size = 0x30000, scoped, tag = 'input window, operand 4, single buffered']
    #allocation11 [shape = 'u8[512]{0}', space=vmem, size = 0x400, scoped, tag = 'input window, operand 5, single buffered']
    #allocation12 [shape = 's32[1]{0}', space=sflag, size = 0x4, scoped, tag = 'scoped memory for tpu_custom_call.1']
    #allocation13 [shape = 'u8[393216]{0}', space=vmem, size = 0x60000, scoped, tag = 'input window, operand 6, single buffered']
    #allocation14 [shape = 'u8[786432]{0}', space=vmem, size = 0xc0000, scoped, tag = 'input window, operand 8, single buffered']
    #allocation15 [shape = 's32[1]{0}', space=sflag, size = 0x4, scoped, tag = 'scoped memory for tpu_custom_call.1']
    #allocation16 [shape = 'u8[393216]{0}', space=vmem, size = 0x60000, scoped, tag = 'input window, operand 10, single buffered']
    #allocation17 [shape = 'u8[65536]{0}', space=vmem, size = 0x10000, scoped, tag = 'input window, operand 12, single buffered']
    #allocation18 [shape = 's32[1]{0}', space=sflag, size = 0x4, scoped, tag = 'scoped memory for tpu_custom_call.1']
    #allocation19 [shape = 'u8[262144]{0}', space=vmem, size = 0x40000, scoped, tag = 'input window, operand 14, single buffered']
    #allocation20 [shape = 'u8[16384]{0}', space=vmem, size = 0x4000, scoped, tag = 'output window, operand 0']
    #allocation21 [shape = 'u8[32768]{0}', space=vmem, size = 0x8000, scoped, tag = 'output window, operand 1']
    #allocation22 [shape = 's32[2]{0}', space=sflag, size = 0x8, scoped, tag = 'scoped memory for tpu_custom_call.1']
    #allocation23 [shape = 'u8[32768]{0}', space=vmem, size = 0x8000, scoped, tag = 'output window, operand 2']
    #allocation24 [shape = 'u8[16384]{0}', space=vmem, size = 0x4000, scoped, tag = 'output window, operand 3']
    #allocation25 [shape = 's32[2]{0}', space=sflag, size = 0x8, scoped, tag = 'scoped memory for tpu_custom_call.1']
    %25 = vsyncpa [#allocation3], 0
    %s26 = scalar_lea.sflag [#allocation3], 1
    %27 = vsyncpa %s26, 0
    %28 = vsyncpa [#allocation6], 0
    %29 = vsyncpa [#allocation9], 0
    %30 = vsyncpa [#allocation12], 0
    %31 = vsyncpa [#allocation15], 0
    %32 = vsyncpa [#allocation18], 0
    %33 = vsyncpa [#allocation4], 0
    %s34 = scalar_lea.sflag [#allocation4], 1
    %35 = vsyncpa %s34, 0
    %36 = vsyncpa [#allocation22], 0
    %s37 = scalar_lea.sflag [#allocation22], 1
    %38 = vsyncpa %s37, 0
    %39 = vsyncpa [#allocation25], 0
    %s40 = scalar_lea.sflag [#allocation25], 1
    %41 = vsyncpa %s40, 0
    loop: start=0, step=1, limit=4
    $region2: #{tpu_custom_call.1} parent=1 // loop_pre_header
      _
    $region3: #{tpu_custom_call.1} parent=1 // loop_header
      %s43 = sphi 0, %s47
      %p44 = scmp.ge.s32.totalorder %s43, 4
      %s53 = sphi 0, %s55
      %s56 = sphi 0, %s53
      %s57 = sphi 0, %s56
      %s73 = sphi 0, %s57
      %s77 = sphi 0, %s77
      %s79 = sphi 0, %s77
      %s80 = sphi 0, %s79
      %s94 = sphi 0, %s80
      %s98 = sphi 0, %s98
      %s100 = sphi 0, %s98
      %s101 = sphi 0, %s100
      %s115 = sphi 0, %s101
      %s119 = sphi 0, %s119
      %s121 = sphi 0, %s119
      %s122 = sphi 0, %s121
      %s136 = sphi 0, %s122
      %s140 = sphi 0, %s140
      %s142 = sphi 0, %s140
      %s143 = sphi 0, %s142
      %s157 = sphi 0, %s143
      %s161 = sphi 0, %s161
      %s163 = sphi 0, %s161
      %s164 = sphi 0, %s163
      %s178 = sphi 0, %s164
      %s182 = sphi 0, %s182
      %s184 = sphi 0, %s182
      %s185 = sphi 0, %s184
      %s199 = sphi 0, %s185
      %s203 = sphi 0, %s203
      %s205 = sphi 0, %s203
      %s206 = sphi 0, %s205
      %s220 = sphi 0, %s206
      %s224 = sphi 0, %s224
      %s226 = sphi 0, %s224
      %s227 = sphi 0, %s226
      %s241 = sphi 0, %s227
      %s245 = sphi 0, %s245
      %s247 = sphi 0, %s245
      %s248 = sphi 0, %s247
      %s262 = sphi 0, %s248
      %s266 = sphi 0, %s266
      %s268 = sphi 0, %s266
      %s269 = sphi 0, %s268
      %s283 = sphi 0, %s269
      %s287 = sphi 0, %s287
      %s289 = sphi 0, %s287
      %s290 = sphi 0, %s289
      %s304 = sphi 0, %s290
      %s308 = sphi 0, %s308
      %s310 = sphi 0, %s308
      %s311 = sphi 0, %s310
      %s325 = sphi 0, %s311
      %s329 = sphi 0, %s329
      %s331 = sphi 0, %s329
      %s332 = sphi 0, %s331
      %s346 = sphi 0, %s332
      %s350 = sphi 0, %s350
      %s352 = sphi 0, %s350
      %s353 = sphi 0, %s352
      %s367 = sphi 0, %s353
      %s371 = sphi 0, %s371
      %s373 = sphi 0, %s371
      %s374 = sphi 0, %s373
      %s388 = sphi 0, %s374
      %s394 = sphi 0, %s396
      %s397 = sphi 0, %s394
      %s398 = sphi 0, %s397
      %s414 = sphi 0, %s398
      %s420 = sphi 0, %s422
      %s423 = sphi 0, %s420
      %s424 = sphi 0, %s423
      %s440 = sphi 0, %s424
      %s446 = sphi 0, %s448
      %s449 = sphi 0, %s446
      %s450 = sphi 0, %s449
      %s466 = sphi 0, %s450
      %s472 = sphi 0, %s474
      %s475 = sphi 0, %s472
      %s476 = sphi 0, %s475
      %s492 = sphi 0, %s476
    $region4: #{tpu_custom_call.1} parent=1 // loop_header_branch
      %46 = sbr.rel (%p44) target = $region8
    $region5: #{tpu_custom_call.1} parent=1 // loop_body
      %s48 = ssub.s32 %s43, 1
      %s49 = ssub.s32 %s43, 2
      %s50 = sadd.s32 %s43, 1
      %s51 = ssub.s32 %s43, %s50
      %p52 = scmp.eq.s32.totalorder %s51, 0
      %s54 = sadd.s32 %s53, 1
      %s55 = scalar_select %p52, %s53, %s54
      %p58 = pneg %p52
      %p59 = scmp.eq.s32.totalorder %s43, 1
      %p60 = por %p58, %p59
      %p61 = scmp.ne.s32.totalorder %s53, %s56
      %p62 = scmp.eq.s32.totalorder %s43, 0
      %p63 = por %p61, %p62
      %p64 = scmp.ne.s32.totalorder %s53, %s56
      %p65 = scmp.eq.s32.totalorder %s48, 1
      %p66 = por %p64, %p65
      %p67 = scmp.ne.s32.totalorder %s56, %s57
      %p68 = scmp.eq.s32.totalorder %s48, 0
      %p69 = por %p67, %p68
      %p70 = scmp.ne.s32.totalorder %s56, %s57
      %p71 = scmp.eq.s32.totalorder %s49, 1
      %p72 = por %p70, %p71
      %p74 = scmp.ne.s32.totalorder %s57, %s73
      %p75 = scmp.eq.s32.totalorder %s49, 0
      %p76 = por %p74, %p75
      %s78 = sadd.s32 %s77, 1
      %p81 = scmp.eq.s32.totalorder %s43, 1
      %p82 = scmp.ne.s32.totalorder %s77, %s79
      %p83 = scmp.eq.s32.totalorder %s43, 0
      %p84 = por %p82, %p83
      %p85 = scmp.ne.s32.totalorder %s77, %s79
      %p86 = scmp.eq.s32.totalorder %s48, 1
      %p87 = por %p85, %p86
      %p88 = scmp.ne.s32.totalorder %s79, %s80
      %p89 = scmp.eq.s32.totalorder %s48, 0
      %p90 = por %p88, %p89
      %p91 = scmp.ne.s32.totalorder %s79, %s80
      %p92 = scmp.eq.s32.totalorder %s49, 1
      %p93 = por %p91, %p92
      %p95 = scmp.ne.s32.totalorder %s80, %s94
      %p96 = scmp.eq.s32.totalorder %s49, 0
      %p97 = por %p95, %p96
      %s99 = sadd.s32 %s98, 1
      %p102 = scmp.eq.s32.totalorder %s43, 1
      %p103 = scmp.ne.s32.totalorder %s98, %s100
      %p104 = scmp.eq.s32.totalorder %s43, 0
      %p105 = por %p103, %p104
      %p106 = scmp.ne.s32.totalorder %s98, %s100
      %p107 = scmp.eq.s32.totalorder %s48, 1
      %p108 = por %p106, %p107
      %p109 = scmp.ne.s32.totalorder %s100, %s101
      %p110 = scmp.eq.s32.totalorder %s48, 0
      %p111 = por %p109, %p110
      %p112 = scmp.ne.s32.totalorder %s100, %s101
      %p113 = scmp.eq.s32.totalorder %s49, 1
      %p114 = por %p112, %p113
      %p116 = scmp.ne.s32.totalorder %s101, %s115
      %p117 = scmp.eq.s32.totalorder %s49, 0
      %p118 = por %p116, %p117
      %s120 = sadd.s32 %s119, 1
      %p123 = scmp.eq.s32.totalorder %s43, 1
      %p124 = scmp.ne.s32.totalorder %s119, %s121
      %p125 = scmp.eq.s32.totalorder %s43, 0
      %p126 = por %p124, %p125
      %p127 = scmp.ne.s32.totalorder %s119, %s121
      %p128 = scmp.eq.s32.totalorder %s48, 1
      %p129 = por %p127, %p128
      %p130 = scmp.ne.s32.totalorder %s121, %s122
      %p131 = scmp.eq.s32.totalorder %s48, 0
      %p132 = por %p130, %p131
      %p133 = scmp.ne.s32.totalorder %s121, %s122
      %p134 = scmp.eq.s32.totalorder %s49, 1
      %p135 = por %p133, %p134
      %p137 = scmp.ne.s32.totalorder %s122, %s136
      %p138 = scmp.eq.s32.totalorder %s49, 0
      %p139 = por %p137, %p138
      %s141 = sadd.s32 %s140, 1
      %p144 = scmp.eq.s32.totalorder %s43, 1
      %p145 = scmp.ne.s32.totalorder %s140, %s142
      %p146 = scmp.eq.s32.totalorder %s43, 0
      %p147 = por %p145, %p146
      %p148 = scmp.ne.s32.totalorder %s140, %s142
      %p149 = scmp.eq.s32.totalorder %s48, 1
      %p150 = por %p148, %p149
      %p151 = scmp.ne.s32.totalorder %s142, %s143
      %p152 = scmp.eq.s32.totalorder %s48, 0
      %p153 = por %p151, %p152
      %p154 = scmp.ne.s32.totalorder %s142, %s143
      %p155 = scmp.eq.s32.totalorder %s49, 1
      %p156 = por %p154, %p155
      %p158 = scmp.ne.s32.totalorder %s143, %s157
      %p159 = scmp.eq.s32.totalorder %s49, 0
      %p160 = por %p158, %p159
      %s162 = sadd.s32 %s161, 1
      %p165 = scmp.eq.s32.totalorder %s43, 1
      %p166 = scmp.ne.s32.totalorder %s161, %s163
      %p167 = scmp.eq.s32.totalorder %s43, 0
      %p168 = por %p166, %p167
      %p169 = scmp.ne.s32.totalorder %s161, %s163
      %p170 = scmp.eq.s32.totalorder %s48, 1
      %p171 = por %p169, %p170
      %p172 = scmp.ne.s32.totalorder %s163, %s164
      %p173 = scmp.eq.s32.totalorder %s48, 0
      %p174 = por %p172, %p173
      %p175 = scmp.ne.s32.totalorder %s163, %s164
      %p176 = scmp.eq.s32.totalorder %s49, 1
      %p177 = por %p175, %p176
      %p179 = scmp.ne.s32.totalorder %s164, %s178
      %p180 = scmp.eq.s32.totalorder %s49, 0
      %p181 = por %p179, %p180
      %s183 = sadd.s32 %s182, 1
      %p186 = scmp.eq.s32.totalorder %s43, 1
      %p187 = scmp.ne.s32.totalorder %s182, %s184
      %p188 = scmp.eq.s32.totalorder %s43, 0
      %p189 = por %p187, %p188
      %p190 = scmp.ne.s32.totalorder %s182, %s184
      %p191 = scmp.eq.s32.totalorder %s48, 1
      %p192 = por %p190, %p191
      %p193 = scmp.ne.s32.totalorder %s184, %s185
      %p194 = scmp.eq.s32.totalorder %s48, 0
      %p195 = por %p193, %p194
      %p196 = scmp.ne.s32.totalorder %s184, %s185
      %p197 = scmp.eq.s32.totalorder %s49, 1
      %p198 = por %p196, %p197
      %p200 = scmp.ne.s32.totalorder %s185, %s199
      %p201 = scmp.eq.s32.totalorder %s49, 0
      %p202 = por %p200, %p201
      %s204 = sadd.s32 %s203, 1
      %p207 = scmp.eq.s32.totalorder %s43, 1
      %p208 = scmp.ne.s32.totalorder %s203, %s205
      %p209 = scmp.eq.s32.totalorder %s43, 0
      %p210 = por %p208, %p209
      %p211 = scmp.ne.s32.totalorder %s203, %s205
      %p212 = scmp.eq.s32.totalorder %s48, 1
      %p213 = por %p211, %p212
      %p214 = scmp.ne.s32.totalorder %s205, %s206
      %p215 = scmp.eq.s32.totalorder %s48, 0
      %p216 = por %p214, %p215
      %p217 = scmp.ne.s32.totalorder %s205, %s206
      %p218 = scmp.eq.s32.totalorder %s49, 1
      %p219 = por %p217, %p218
      %p221 = scmp.ne.s32.totalorder %s206, %s220
      %p222 = scmp.eq.s32.totalorder %s49, 0
      %p223 = por %p221, %p222
      %s225 = sadd.s32 %s224, 1
      %p228 = scmp.eq.s32.totalorder %s43, 1
      %p229 = scmp.ne.s32.totalorder %s224, %s226
      %p230 = scmp.eq.s32.totalorder %s43, 0
      %p231 = por %p229, %p230
      %p232 = scmp.ne.s32.totalorder %s224, %s226
      %p233 = scmp.eq.s32.totalorder %s48, 1
      %p234 = por %p232, %p233
      %p235 = scmp.ne.s32.totalorder %s226, %s227
      %p236 = scmp.eq.s32.totalorder %s48, 0
      %p237 = por %p235, %p236
      %p238 = scmp.ne.s32.totalorder %s226, %s227
      %p239 = scmp.eq.s32.totalorder %s49, 1
      %p240 = por %p238, %p239
      %p242 = scmp.ne.s32.totalorder %s227, %s241
      %p243 = scmp.eq.s32.totalorder %s49, 0
      %p244 = por %p242, %p243
      %s246 = sadd.s32 %s245, 1
      %p249 = scmp.eq.s32.totalorder %s43, 1
      %p250 = scmp.ne.s32.totalorder %s245, %s247
      %p251 = scmp.eq.s32.totalorder %s43, 0
      %p252 = por %p250, %p251
      %p253 = scmp.ne.s32.totalorder %s245, %s247
      %p254 = scmp.eq.s32.totalorder %s48, 1
      %p255 = por %p253, %p254
      %p256 = scmp.ne.s32.totalorder %s247, %s248
      %p257 = scmp.eq.s32.totalorder %s48, 0
      %p258 = por %p256, %p257
      %p259 = scmp.ne.s32.totalorder %s247, %s248
      %p260 = scmp.eq.s32.totalorder %s49, 1
      %p261 = por %p259, %p260
      %p263 = scmp.ne.s32.totalorder %s248, %s262
      %p264 = scmp.eq.s32.totalorder %s49, 0
      %p265 = por %p263, %p264
      %s267 = sadd.s32 %s266, 1
      %p270 = scmp.eq.s32.totalorder %s43, 1
      %p271 = scmp.ne.s32.totalorder %s266, %s268
      %p272 = scmp.eq.s32.totalorder %s43, 0
      %p273 = por %p271, %p272
      %p274 = scmp.ne.s32.totalorder %s266, %s268
      %p275 = scmp.eq.s32.totalorder %s48, 1
      %p276 = por %p274, %p275
      %p277 = scmp.ne.s32.totalorder %s268, %s269
      %p278 = scmp.eq.s32.totalorder %s48, 0
      %p279 = por %p277, %p278
      %p280 = scmp.ne.s32.totalorder %s268, %s269
      %p281 = scmp.eq.s32.totalorder %s49, 1
      %p282 = por %p280, %p281
      %p284 = scmp.ne.s32.totalorder %s269, %s283
      %p285 = scmp.eq.s32.totalorder %s49, 0
      %p286 = por %p284, %p285
      %s288 = sadd.s32 %s287, 1
      %p291 = scmp.eq.s32.totalorder %s43, 1
      %p292 = scmp.ne.s32.totalorder %s287, %s289
      %p293 = scmp.eq.s32.totalorder %s43, 0
      %p294 = por %p292, %p293
      %p295 = scmp.ne.s32.totalorder %s287, %s289
      %p296 = scmp.eq.s32.totalorder %s48, 1
      %p297 = por %p295, %p296
      %p298 = scmp.ne.s32.totalorder %s289, %s290
      %p299 = scmp.eq.s32.totalorder %s48, 0
      %p300 = por %p298, %p299
      %p301 = scmp.ne.s32.totalorder %s289, %s290
      %p302 = scmp.eq.s32.totalorder %s49, 1
      %p303 = por %p301, %p302
      %p305 = scmp.ne.s32.totalorder %s290, %s304
      %p306 = scmp.eq.s32.totalorder %s49, 0
      %p307 = por %p305, %p306
      %s309 = sadd.s32 %s308, 1
      %p312 = scmp.eq.s32.totalorder %s43, 1
      %p313 = scmp.ne.s32.totalorder %s308, %s310
      %p314 = scmp.eq.s32.totalorder %s43, 0
      %p315 = por %p313, %p314
      %p316 = scmp.ne.s32.totalorder %s308, %s310
      %p317 = scmp.eq.s32.totalorder %s48, 1
      %p318 = por %p316, %p317
      %p319 = scmp.ne.s32.totalorder %s310, %s311
      %p320 = scmp.eq.s32.totalorder %s48, 0
      %p321 = por %p319, %p320
      %p322 = scmp.ne.s32.totalorder %s310, %s311
      %p323 = scmp.eq.s32.totalorder %s49, 1
      %p324 = por %p322, %p323
      %p326 = scmp.ne.s32.totalorder %s311, %s325
      %p327 = scmp.eq.s32.totalorder %s49, 0
      %p328 = por %p326, %p327
      %s330 = sadd.s32 %s329, 1
      %p333 = scmp.eq.s32.totalorder %s43, 1
      %p334 = scmp.ne.s32.totalorder %s329, %s331
      %p335 = scmp.eq.s32.totalorder %s43, 0
      %p336 = por %p334, %p335
      %p337 = scmp.ne.s32.totalorder %s329, %s331
      %p338 = scmp.eq.s32.totalorder %s48, 1
      %p339 = por %p337, %p338
      %p340 = scmp.ne.s32.totalorder %s331, %s332
      %p341 = scmp.eq.s32.totalorder %s48, 0
      %p342 = por %p340, %p341
      %p343 = scmp.ne.s32.totalorder %s331, %s332
      %p344 = scmp.eq.s32.totalorder %s49, 1
      %p345 = por %p343, %p344
      %p347 = scmp.ne.s32.totalorder %s332, %s346
      %p348 = scmp.eq.s32.totalorder %s49, 0
      %p349 = por %p347, %p348
      %s351 = sadd.s32 %s350, 1
      %p354 = scmp.eq.s32.totalorder %s43, 1
      %p355 = scmp.ne.s32.totalorder %s350, %s352
      %p356 = scmp.eq.s32.totalorder %s43, 0
      %p357 = por %p355, %p356
      %p358 = scmp.ne.s32.totalorder %s350, %s352
      %p359 = scmp.eq.s32.totalorder %s48, 1
      %p360 = por %p358, %p359
      %p361 = scmp.ne.s32.totalorder %s352, %s353
      %p362 = scmp.eq.s32.totalorder %s48, 0
      %p363 = por %p361, %p362
      %p364 = scmp.ne.s32.totalorder %s352, %s353
      %p365 = scmp.eq.s32.totalorder %s49, 1
      %p366 = por %p364, %p365
      %p368 = scmp.ne.s32.totalorder %s353, %s367
      %p369 = scmp.eq.s32.totalorder %s49, 0
      %p370 = por %p368, %p369
      %s372 = sadd.s32 %s371, 1
      %p375 = scmp.eq.s32.totalorder %s43, 1
      %p376 = scmp.ne.s32.totalorder %s371, %s373
      %p377 = scmp.eq.s32.totalorder %s43, 0
      %p378 = por %p376, %p377
      %p379 = scmp.ne.s32.totalorder %s371, %s373
      %p380 = scmp.eq.s32.totalorder %s48, 1
      %p381 = por %p379, %p380
      %p382 = scmp.ne.s32.totalorder %s373, %s374
      %p383 = scmp.eq.s32.totalorder %s48, 0
      %p384 = por %p382, %p383
      %p385 = scmp.ne.s32.totalorder %s373, %s374
      %p386 = scmp.eq.s32.totalorder %s49, 1
      %p387 = por %p385, %p386
      %p389 = scmp.ne.s32.totalorder %s374, %s388
      %p390 = scmp.eq.s32.totalorder %s49, 0
      %p391 = por %p389, %p390
      %s392 = ssub.s32 %s43, %s50
      %p393 = scmp.eq.s32.totalorder %s392, 0
      %s395 = sadd.s32 %s394, 1
      %s396 = scalar_select %p393, %s394, %s395
      %p399 = pneg %p393
      %p400 = scmp.eq.s32.totalorder %s43, 1
      %p401 = por %p399, %p400
      %p402 = scmp.ne.s32.totalorder %s394, %s397
      %p403 = scmp.eq.s32.totalorder %s43, 0
      %p404 = por %p402, %p403
      %p405 = scmp.ne.s32.totalorder %s394, %s397
      %p406 = scmp.eq.s32.totalorder %s48, 1
      %p407 = por %p405, %p406
      %p408 = scmp.ne.s32.totalorder %s397, %s398
      %p409 = scmp.eq.s32.totalorder %s48, 0
      %p410 = por %p408, %p409
      %p411 = scmp.ne.s32.totalorder %s397, %s398
      %p412 = scmp.eq.s32.totalorder %s49, 1
      %p413 = por %p411, %p412
      %p415 = scmp.ne.s32.totalorder %s398, %s414
      %p416 = scmp.eq.s32.totalorder %s49, 0
      %p417 = por %p415, %p416
      %s418 = ssub.s32 %s43, %s50
      %p419 = scmp.eq.s32.totalorder %s418, 0
      %s421 = sadd.s32 %s420, 1
      %s422 = scalar_select %p419, %s420, %s421
      %p425 = pneg %p419
      %p426 = scmp.eq.s32.totalorder %s43, 1
      %p427 = por %p425, %p426
      %p428 = scmp.ne.s32.totalorder %s420, %s423
      %p429 = scmp.eq.s32.totalorder %s43, 0
      %p430 = por %p428, %p429
      %p431 = scmp.ne.s32.totalorder %s420, %s423
      %p432 = scmp.eq.s32.totalorder %s48, 1
      %p433 = por %p431, %p432
      %p434 = scmp.ne.s32.totalorder %s423, %s424
      %p435 = scmp.eq.s32.totalorder %s48, 0
      %p436 = por %p434, %p435
      %p437 = scmp.ne.s32.totalorder %s423, %s424
      %p438 = scmp.eq.s32.totalorder %s49, 1
      %p439 = por %p437, %p438
      %p441 = scmp.ne.s32.totalorder %s424, %s440
      %p442 = scmp.eq.s32.totalorder %s49, 0
      %p443 = por %p441, %p442
      %s444 = ssub.s32 %s43, %s50
      %p445 = scmp.eq.s32.totalorder %s444, 0
      %s447 = sadd.s32 %s446, 1
      %s448 = scalar_select %p445, %s446, %s447
      %p451 = pneg %p445
      %p452 = scmp.eq.s32.totalorder %s43, 1
      %p453 = por %p451, %p452
      %p454 = scmp.ne.s32.totalorder %s446, %s449
      %p455 = scmp.eq.s32.totalorder %s43, 0
      %p456 = por %p454, %p455
      %p457 = scmp.ne.s32.totalorder %s446, %s449
      %p458 = scmp.eq.s32.totalorder %s48, 1
      %p459 = por %p457, %p458
      %p460 = scmp.ne.s32.totalorder %s449, %s450
      %p461 = scmp.eq.s32.totalorder %s48, 0
      %p462 = por %p460, %p461
      %p463 = scmp.ne.s32.totalorder %s449, %s450
      %p464 = scmp.eq.s32.totalorder %s49, 1
      %p465 = por %p463, %p464
      %p467 = scmp.ne.s32.totalorder %s450, %s466
      %p468 = scmp.eq.s32.totalorder %s49, 0
      %p469 = por %p467, %p468
      %s470 = ssub.s32 %s43, %s50
      %p471 = scmp.eq.s32.totalorder %s470, 0
      %s473 = sadd.s32 %s472, 1
      %s474 = scalar_select %p471, %s472, %s473
      %p477 = pneg %p471
      %p478 = scmp.eq.s32.totalorder %s43, 1
      %p479 = por %p477, %p478
      %p480 = scmp.ne.s32.totalorder %s472, %s475
      %p481 = scmp.eq.s32.totalorder %s43, 0
      %p482 = por %p480, %p481
      %p483 = scmp.ne.s32.totalorder %s472, %s475
      %p484 = scmp.eq.s32.totalorder %s48, 1
      %p485 = por %p483, %p484
      %p486 = scmp.ne.s32.totalorder %s475, %s476
      %p487 = scmp.eq.s32.totalorder %s48, 0
      %p488 = por %p486, %p487
      %p489 = scmp.ne.s32.totalorder %s475, %s476
      %p490 = scmp.eq.s32.totalorder %s49, 1
      %p491 = por %p489, %p490
      %p493 = scmp.ne.s32.totalorder %s476, %s492
      %p494 = scmp.eq.s32.totalorder %s49, 0
      %p495 = por %p493, %p494
      %p496 = scmp.le.s32.totalorder 1, %s43
      %p497 = scmp.lt.s32.totalorder %s43, 3
      %p498 = pnand %p496, %p497
      %p499 = pneg %p498
      // Predicated region
      $region9: #{tpu_custom_call.1} parent=5 // pred_check
        _
      $region10: #{tpu_custom_call.1} parent=5 // pred_check_branch
        %501 = sbr.rel (%p498) target = $region12
      $region11: #{tpu_custom_call.1} parent=5 // pred_region
        %s502 = ssub.s32 %s43, 1
        // Predicated region
        $region13: #{tpu_custom_call.1} parent=11 // pred_check
          %p503 = pneg %p90
        $region14: #{tpu_custom_call.1} parent=11 // pred_check_branch
          %505 = sbr.rel (%p503) target = $region16
        $region15: #{tpu_custom_call.1} parent=11 // pred_region
          %507 = vsyncadd [#allocation6], 0
          %s508 = sshll.u32 %s1, 4
          %s509 = int_to_ptr.hbm [resolvable:$true] %s508
          %s510 = sshll.u32 [#allocation5], 4
          %s511 = int_to_ptr.vmem [resolvable:$true] %s510
          %516 = dma.hbm_to_vmem [thread:$0]  %s509, 512, %s511, [#allocation6], 128, 128, 8
        $region16: #{tpu_custom_call.1} parent=11 // pred_fallthru
          _
        // Predicated region
        $region17: #{tpu_custom_call.1} parent=11 // pred_check
          %p517 = pneg %p111
        $region18: #{tpu_custom_call.1} parent=11 // pred_check_branch
          %519 = sbr.rel (%p517) target = $region20
        $region19: #{tpu_custom_call.1} parent=11 // pred_region
          %521 = vsyncadd [#allocation6], 0
          %s522 = sshll.u32 %s2, 4
          %s523 = int_to_ptr.hbm [resolvable:$true] %s522
          %s524 = sshll.u32 [#allocation7], 4
          %s525 = int_to_ptr.vmem [resolvable:$true] %s524
          %530 = dma.hbm_to_vmem [thread:$0]  %s523, 3072, %s525, [#allocation6], 128, 128, 8
        $region20: #{tpu_custom_call.1} parent=11 // pred_fallthru
          _
        // Predicated region
        $region21: #{tpu_custom_call.1} parent=11 // pred_check
          %p531 = pneg %p132
        $region22: #{tpu_custom_call.1} parent=11 // pred_check_branch
          %533 = sbr.rel (%p531) target = $region24
        $region23: #{tpu_custom_call.1} parent=11 // pred_region
          %535 = vsyncadd [#allocation9], 0
          %s537 = sshll.u32 %s3, 4
          %s538 = int_to_ptr.hbm [resolvable:$true] %s537
          %s539 = sshll.u32 [#allocation8], 4
          %s540 = int_to_ptr.vmem [resolvable:$true] %s539
          %542 = dma.hbm_to_vmem [thread:$0]  %s538, 16, %s540, [#allocation9]
        $region24: #{tpu_custom_call.1} parent=11 // pred_fallthru
          _
        // Predicated region
        $region25: #{tpu_custom_call.1} parent=11 // pred_check
          %p543 = pneg %p153
        $region26: #{tpu_custom_call.1} parent=11 // pred_check_branch
          %545 = sbr.rel (%p543) target = $region28
        $region27: #{tpu_custom_call.1} parent=11 // pred_region
          %547 = vsyncadd [#allocation9], 0
          %s548 = sshll.u32 %s4, 4
          %s549 = int_to_ptr.hbm [resolvable:$true] %s548
          %s550 = sshll.u32 [#allocation10], 4
          %s551 = int_to_ptr.vmem [resolvable:$true] %s550
          %556 = dma.hbm_to_vmem [thread:$0]  %s549, 6144, %s551, [#allocation9], 128, 128, 8
        $region28: #{tpu_custom_call.1} parent=11 // pred_fallthru
          _
        // Predicated region
        $region29: #{tpu_custom_call.1} parent=11 // pred_check
          %p557 = pneg %p174
        $region30: #{tpu_custom_call.1} parent=11 // pred_check_branch
          %559 = sbr.rel (%p557) target = $region32
        $region31: #{tpu_custom_call.1} parent=11 // pred_region
          %561 = vsyncadd [#allocation12], 0
          %s563 = sshll.u32 %s5, 4
          %s564 = int_to_ptr.hbm [resolvable:$true] %s563
          %s565 = sshll.u32 [#allocation11], 4
          %s566 = int_to_ptr.vmem [resolvable:$true] %s565
          %568 = dma.hbm_to_vmem [thread:$0]  %s564, 16, %s566, [#allocation12]
        $region32: #{tpu_custom_call.1} parent=11 // pred_fallthru
          _
        // Predicated region
        $region33: #{tpu_custom_call.1} parent=11 // pred_check
          %p569 = pneg %p195
        $region34: #{tpu_custom_call.1} parent=11 // pred_check_branch
          %571 = sbr.rel (%p569) target = $region36
        $region35: #{tpu_custom_call.1} parent=11 // pred_region
          %573 = vsyncadd [#allocation12], 0
          %s574 = sshll.u32 %s6, 4
          %s575 = int_to_ptr.hbm [resolvable:$true] %s574
          %s576 = sshll.u32 [#allocation13], 4
          %s577 = int_to_ptr.vmem [resolvable:$true] %s576
          %582 = dma.hbm_to_vmem [thread:$0]  %s575, 12288, %s577, [#allocation12], 256, 256, 16
        $region36: #{tpu_custom_call.1} parent=11 // pred_fallthru
          _
        // Predicated region
        $region37: #{tpu_custom_call.1} parent=11 // pred_check
          %p583 = pneg %p216
        $region38: #{tpu_custom_call.1} parent=11 // pred_check_branch
          %585 = sbr.rel (%p583) target = $region40
        $region39: #{tpu_custom_call.1} parent=11 // pred_region
          _
        $region40: #{tpu_custom_call.1} parent=11 // pred_fallthru
          _
        // Predicated region
        $region41: #{tpu_custom_call.1} parent=11 // pred_check
          %p586 = pneg %p237
        $region42: #{tpu_custom_call.1} parent=11 // pred_check_branch
          %588 = sbr.rel (%p586) target = $region44
        $region43: #{tpu_custom_call.1} parent=11 // pred_region
          %590 = vsyncadd [#allocation15], 0
          %s591 = sshll.u32 %s8, 4
          %s592 = int_to_ptr.hbm [resolvable:$true] %s591
          %s593 = sshll.u32 [#allocation14], 4
          %s594 = int_to_ptr.vmem [resolvable:$true] %s593
          %599 = dma.hbm_to_vmem [thread:$0]  %s592, 24576, %s594, [#allocation15], 256, 256, 16
        $region44: #{tpu_custom_call.1} parent=11 // pred_fallthru
          _
        // Predicated region
        $region45: #{tpu_custom_call.1} parent=11 // pred_check
          %p600 = pneg %p258
        $region46: #{tpu_custom_call.1} parent=11 // pred_check_branch
          %602 = sbr.rel (%p600) target = $region48
        $region47: #{tpu_custom_call.1} parent=11 // pred_region
          _
        $region48: #{tpu_custom_call.1} parent=11 // pred_fallthru
          _
        // Predicated region
        $region49: #{tpu_custom_call.1} parent=11 // pred_check
          %p603 = pneg %p279
        $region50: #{tpu_custom_call.1} parent=11 // pred_check_branch
          %605 = sbr.rel (%p603) target = $region52
        $region51: #{tpu_custom_call.1} parent=11 // pred_region
          %607 = vsyncadd [#allocation15], 0
          %s608 = sshll.u32 %s10, 4
          %s609 = int_to_ptr.hbm [resolvable:$true] %s608
          %s610 = sshll.u32 [#allocation16], 4
          %s611 = int_to_ptr.vmem [resolvable:$true] %s610
          %616 = dma.hbm_to_vmem [thread:$0]  %s609, 12288, %s611, [#allocation15], 128, 128, 8
        $region52: #{tpu_custom_call.1} parent=11 // pred_fallthru
          _
        // Predicated region
        $region53: #{tpu_custom_call.1} parent=11 // pred_check
          %p617 = pneg %p300
        $region54: #{tpu_custom_call.1} parent=11 // pred_check_branch
          %619 = sbr.rel (%p617) target = $region56
        $region55: #{tpu_custom_call.1} parent=11 // pred_region
          _
        $region56: #{tpu_custom_call.1} parent=11 // pred_fallthru
          _
        // Predicated region
        $region57: #{tpu_custom_call.1} parent=11 // pred_check
          %p620 = pneg %p321
        $region58: #{tpu_custom_call.1} parent=11 // pred_check_branch
          %622 = sbr.rel (%p620) target = $region60
        $region59: #{tpu_custom_call.1} parent=11 // pred_region
          %624 = vsyncadd [#allocation18], 0
          %s625 = sshll.u32 %s12, 4
          %s626 = int_to_ptr.hbm [resolvable:$true] %s625
          %s627 = sshll.u32 [#allocation17], 4
          %s628 = int_to_ptr.vmem [resolvable:$true] %s627
          %633 = dma.hbm_to_vmem [thread:$0]  %s626, 2048, %s628, [#allocation18], 128, 128, 8
        $region60: #{tpu_custom_call.1} parent=11 // pred_fallthru
          _
        // Predicated region
        $region61: #{tpu_custom_call.1} parent=11 // pred_check
          %p634 = pneg %p342
        $region62: #{tpu_custom_call.1} parent=11 // pred_check_branch
          %636 = sbr.rel (%p634) target = $region64
        $region63: #{tpu_custom_call.1} parent=11 // pred_region
          _
        $region64: #{tpu_custom_call.1} parent=11 // pred_fallthru
          _
        // Predicated region
        $region65: #{tpu_custom_call.1} parent=11 // pred_check
          %p637 = pneg %p363
        $region66: #{tpu_custom_call.1} parent=11 // pred_check_branch
          %639 = sbr.rel (%p637) target = $region68
        $region67: #{tpu_custom_call.1} parent=11 // pred_region
          %641 = vsyncadd [#allocation18], 0
          %s642 = sshll.u32 %s14, 4
          %s643 = int_to_ptr.hbm [resolvable:$true] %s642
          %s644 = sshll.u32 [#allocation19], 4
          %s645 = int_to_ptr.vmem [resolvable:$true] %s644
          %650 = dma.hbm_to_vmem [thread:$0]  %s643, 8192, %s645, [#allocation18], 256, 256, 16
        $region68: #{tpu_custom_call.1} parent=11 // pred_fallthru
          _
        // Predicated region
        $region69: #{tpu_custom_call.1} parent=11 // pred_check
          %p651 = pneg %p384
        $region70: #{tpu_custom_call.1} parent=11 // pred_check_branch
          %653 = sbr.rel (%p651) target = $region72
        $region71: #{tpu_custom_call.1} parent=11 // pred_region
          _
        $region72: #{tpu_custom_call.1} parent=11 // pred_fallthru
          _
      $region12: #{tpu_custom_call.1} parent=5 // pred_fallthru
        _
      %p654 = scmp.lt.s32.totalorder %s43, 2
      // Predicated region
      $region73: #{tpu_custom_call.1} parent=5 // pred_check
        %p655 = pneg %p654
      $region74: #{tpu_custom_call.1} parent=5 // pred_check_branch
        %657 = sbr.rel (%p655) target = $region76
      $region75: #{tpu_custom_call.1} parent=5 // pred_region
        // Predicated region
        $region77: #{tpu_custom_call.1} parent=75 // pred_check
          %p658 = pneg %p63
        $region78: #{tpu_custom_call.1} parent=75 // pred_check_branch
          %660 = sbr.rel (%p658) target = $region80
        $region79: #{tpu_custom_call.1} parent=75 // pred_region
          %s661 = sand.u32 %s53, 1
          %s662 = scalar_lea.sflag [#allocation3], %s661
          %s663 = sand.u32 %s53, 1
          %s664 = smul.addr %s663, 16
          %s665 = scalar_lea.vmem [#allocation2], %s664
          %667 = vsyncadd %s662, 0
          %s668 = smul.addr %s43, 2
          %s669 = smul.addr %s668, 8
          %s670 = scalar_lea.hbm %s0, %s669
          %s671 = sshll.u32 %s670, 4
          %s672 = int_to_ptr.hbm [resolvable:$true] %s671
          %s673 = sshll.u32 %s665, 4
          %s674 = int_to_ptr.vmem [resolvable:$true] %s673
          %679 = dma.hbm_to_vmem [thread:$0]  %s672, 256, %s674, %s662, 128, 128, 8
        $region80: #{tpu_custom_call.1} parent=75 // pred_fallthru
          _
      $region76: #{tpu_custom_call.1} parent=5 // pred_fallthru
        _
      %p680 = scmp.le.s32.totalorder 1, %s43
      %p681 = scmp.lt.s32.totalorder %s43, 3
      %p682 = pnand %p680, %p681
      %p683 = pneg %p682
      // Predicated region
      $region81: #{tpu_custom_call.1} parent=5 // pred_check
        _
      $region82: #{tpu_custom_call.1} parent=5 // pred_check_branch
        %685 = sbr.rel (%p682) target = $region84
      $region83: #{tpu_custom_call.1} parent=5 // pred_region
        %s686 = ssub.s32 %s43, 1
        %s687 = sand.u32 %s56, 1
        %s688 = scalar_lea.sflag [#allocation3], %s687
        %s689 = sand.u32 %s56, 1
        %s690 = smul.addr %s689, 16
        %s691 = scalar_lea.vmem [#allocation2], %s690
        // Predicated region
        $region85: #{tpu_custom_call.1} parent=83 // pred_check
          %p692 = pneg %p69
        $region86: #{tpu_custom_call.1} parent=83 // pred_check_branch
          %694 = sbr.rel (%p692) target = $region88
        $region87: #{tpu_custom_call.1} parent=83 // pred_region
          %696 = dma.done %s688, 256
        $region88: #{tpu_custom_call.1} parent=83 // pred_fallthru
          _
        // Predicated region
        $region89: #{tpu_custom_call.1} parent=83 // pred_check
          %p697 = pneg %p90
        $region90: #{tpu_custom_call.1} parent=83 // pred_check_branch
          %699 = sbr.rel (%p697) target = $region92
        $region91: #{tpu_custom_call.1} parent=83 // pred_region
          %701 = dma.done [#allocation6], 512
        $region92: #{tpu_custom_call.1} parent=83 // pred_fallthru
          _
        // Predicated region
        $region93: #{tpu_custom_call.1} parent=83 // pred_check
          %p702 = pneg %p111
        $region94: #{tpu_custom_call.1} parent=83 // pred_check_branch
          %704 = sbr.rel (%p702) target = $region96
        $region95: #{tpu_custom_call.1} parent=83 // pred_region
          %706 = dma.done [#allocation6], 3072
        $region96: #{tpu_custom_call.1} parent=83 // pred_fallthru
          _
        // Predicated region
        $region97: #{tpu_custom_call.1} parent=83 // pred_check
          %p707 = pneg %p132
        $region98: #{tpu_custom_call.1} parent=83 // pred_check_branch
          %709 = sbr.rel (%p707) target = $region100
        $region99: #{tpu_custom_call.1} parent=83 // pred_region
          %711 = dma.done [#allocation9], 16
        $region100: #{tpu_custom_call.1} parent=83 // pred_fallthru
          _
        // Predicated region
        $region101: #{tpu_custom_call.1} parent=83 // pred_check
          %p712 = pneg %p153
        $region102: #{tpu_custom_call.1} parent=83 // pred_check_branch
          %714 = sbr.rel (%p712) target = $region104
        $region103: #{tpu_custom_call.1} parent=83 // pred_region
          %716 = dma.done [#allocation9], 6144
        $region104: #{tpu_custom_call.1} parent=83 // pred_fallthru
          _
        // Predicated region
        $region105: #{tpu_custom_call.1} parent=83 // pred_check
          %p717 = pneg %p174
        $region106: #{tpu_custom_call.1} parent=83 // pred_check_branch
          %719 = sbr.rel (%p717) target = $region108
        $region107: #{tpu_custom_call.1} parent=83 // pred_region
          %721 = dma.done [#allocation12], 16
        $region108: #{tpu_custom_call.1} parent=83 // pred_fallthru
          _
        // Predicated region
        $region109: #{tpu_custom_call.1} parent=83 // pred_check
          %p722 = pneg %p195
        $region110: #{tpu_custom_call.1} parent=83 // pred_check_branch
          %724 = sbr.rel (%p722) target = $region112
        $region111: #{tpu_custom_call.1} parent=83 // pred_region
          %726 = dma.done [#allocation12], 12288
        $region112: #{tpu_custom_call.1} parent=83 // pred_fallthru
          _
        // Predicated region
        $region113: #{tpu_custom_call.1} parent=83 // pred_check
          %p727 = pneg %p237
        $region114: #{tpu_custom_call.1} parent=83 // pred_check_branch
          %729 = sbr.rel (%p727) target = $region116
        $region115: #{tpu_custom_call.1} parent=83 // pred_region
          %731 = dma.done [#allocation15], 24576
        $region116: #{tpu_custom_call.1} parent=83 // pred_fallthru
          _
        // Predicated region
        $region117: #{tpu_custom_call.1} parent=83 // pred_check
          %p732 = pneg %p279
        $region118: #{tpu_custom_call.1} parent=83 // pred_check_branch
          %734 = sbr.rel (%p732) target = $region120
        $region119: #{tpu_custom_call.1} parent=83 // pred_region
          %736 = dma.done [#allocation15], 12288
        $region120: #{tpu_custom_call.1} parent=83 // pred_fallthru
          _
        // Predicated region
        $region121: #{tpu_custom_call.1} parent=83 // pred_check
          %p737 = pneg %p321
        $region122: #{tpu_custom_call.1} parent=83 // pred_check_branch
          %739 = sbr.rel (%p737) target = $region124
        $region123: #{tpu_custom_call.1} parent=83 // pred_region
          %741 = dma.done [#allocation18], 2048
        $region124: #{tpu_custom_call.1} parent=83 // pred_fallthru
          _
        // Predicated region
        $region125: #{tpu_custom_call.1} parent=83 // pred_check
          %p742 = pneg %p363
        $region126: #{tpu_custom_call.1} parent=83 // pred_check_branch
          %744 = sbr.rel (%p742) target = $region128
        $region127: #{tpu_custom_call.1} parent=83 // pred_region
          %746 = dma.done [#allocation18], 8192
        $region128: #{tpu_custom_call.1} parent=83 // pred_fallthru
          _
        %s747 = sand.u32 %s56, 1
        %s748 = scalar_lea.sflag [#allocation3], %s747
        %s749 = sand.u32 %s56, 1
        %s750 = smul.addr %s749, 16
        %s751 = scalar_lea.vmem [#allocation2], %s750
        %p752 = pneg %p69
        %p753 = pneg %p66
        %p754 = pneg %p90
        %p755 = pneg %p87
        %p756 = pneg %p111
        %p757 = pneg %p108
        %p758 = pneg %p132
        %p759 = pneg %p129
        %p760 = pneg %p153
        %p761 = pneg %p150
        %p762 = pneg %p174
        %p763 = pneg %p171
        %p764 = pneg %p195
        %p765 = pneg %p192
        %p766 = pneg %p216
        %p767 = pneg %p213
        %p768 = pneg %p237
        %p769 = pneg %p234
        %p770 = pneg %p258
        %p771 = pneg %p255
        %p772 = pneg %p279
        %p773 = pneg %p276
        %p774 = pneg %p300
        %p775 = pneg %p297
        %p776 = pneg %p321
        %p777 = pneg %p318
        %p778 = pneg %p342
        %p779 = pneg %p339
        %p780 = pneg %p363
        %p781 = pneg %p360
        %p782 = pneg %p384
        %p783 = pneg %p381
        %p784 = pneg %p410
        %p785 = pneg %p407
        %s786 = sand.u32 %s397, 1
        %s787 = scalar_lea.sflag [#allocation4], %s786
        %s788 = sand.u32 %s397, 1
        %s789 = smul.addr %s788, 16
        %s790 = scalar_lea.vmem [#allocation20], %s789
        %p791 = pneg %p436
        %p792 = pneg %p433
        %s793 = sand.u32 %s48, 1
        %s794 = scalar_lea.sflag [#allocation22], %s793
        %s795 = sand.u32 %s423, 1
        %s796 = smul.addr %s795, 32
        %s797 = scalar_lea.vmem [#allocation21], %s796
        %p798 = pneg %p462
        %p799 = pneg %p459
        %s800 = sand.u32 %s48, 1
        %s801 = scalar_lea.sflag [#allocation22], %s800
        %s802 = sand.u32 %s449, 1
        %s803 = smul.addr %s802, 32
        %s804 = scalar_lea.vmem [#allocation23], %s803
        %p805 = pneg %p488
        %p806 = pneg %p485
        %s807 = sand.u32 %s475, 1
        %s808 = scalar_lea.sflag [#allocation25], %s807
        %s809 = sand.u32 %s475, 1
        %s810 = smul.addr %s809, 16
        %s811 = scalar_lea.vmem [#allocation24], %s810
        %v812 = vld [vmem:[#allocation5] sm:$0xff]
        %v813 = vld [vmem:[#allocation5 + $0x8] sm:$0xff]
        %s814 = scalar_lea.vmem [#allocation5], 16
        %v815 = vld [vmem:[%s814] sm:$0xff]
        %v816 = vld [vmem:[%s814 + $0x8] sm:$0xff]
        %v817 = vld [vmem:[%s691] sm:$0xff]
        %v818 = vld [vmem:[%s691 + $0x8] sm:$0xff]
        %vm819 = vcmask 130048
        %v821 = vsel %vm819, %v812, 0
        %v824 = vsel %vm819, %v813, 0
        %826 = vmatpush.msra.mxu0 0.0
        %827 = vmatpush.msra.mxu0 0.0
        %828 = vmatpush.msra.mxu0 0.0
        %829 = vmatpush.msra.mxu0 0.0
        %830 = vmatpush.msra.mxu0 0.0
        %831 = vmatpush.msra.mxu0 0.0
        %832 = vmatpush.msra.mxu0 0.0
        %833 = vmatpush.msra.mxu0 0.0
        %834 = vmatpush.msra.mxu0 0.0
        %835 = vmatpush.msra.mxu0 0.0
        %836 = vmatpush.msra.mxu0 0.0
        %837 = vmatpush.msra.mxu0 0.0
        %838 = vmatpush.msra.mxu0 0.0
        %839 = vmatpush.msra.mxu0 0.0
        %840 = vmatpush.msra.mxu0 %v818
        %841 = vmatpush.msra.mxu0 %v817
        %842 = vmatmul.f32.gmra.mxu0 %v821
        %v843 = vpop.f32.mrf.mxu0
        %v844 = vadd.f32 0.0, %v843
        %845 = vmatmul.f32.gmra.mxu0 %v824
        %v846 = vpop.f32.mrf.mxu0
        %v847 = vadd.f32 0.0, %v846
        %848 = vdwg.mxu0
        %v850 = vsel %vm819, %v815, 0
        %v853 = vsel %vm819, %v816, 0
        %855 = vmatpush.msra.mxu0 0.0
        %856 = vmatpush.msra.mxu0 0.0
        %857 = vmatpush.msra.mxu0 0.0
        %858 = vmatpush.msra.mxu0 0.0
        %859 = vmatpush.msra.mxu0 0.0
        %860 = vmatpush.msra.mxu0 0.0
        %861 = vmatpush.msra.mxu0 0.0
        %862 = vmatpush.msra.mxu0 0.0
        %863 = vmatpush.msra.mxu0 0.0
        %864 = vmatpush.msra.mxu0 0.0
        %865 = vmatpush.msra.mxu0 0.0
        %866 = vmatpush.msra.mxu0 0.0
        %867 = vmatpush.msra.mxu0 0.0
        %868 = vmatpush.msra.mxu0 0.0
        %869 = vmatpush.msra.mxu0 %v818
        %870 = vmatpush.msra.mxu0 %v817
        %871 = vmatmul.f32.gmra.mxu0 %v850
        %v872 = vpop.f32.mrf.mxu0
        %v873 = vadd.f32 0.0, %v872
        %874 = vmatmul.f32.gmra.mxu0 %v853
        %v875 = vpop.f32.mrf.mxu0
        %v876 = vadd.f32 0.0, %v875
        %877 = vdwg.mxu0
        %v878 = vld [vmem:[#allocation7] sm:$0xff]
        %v879 = vld [vmem:[#allocation7 + $0x8] sm:$0xff]
        %v880 = vld [vmem:[#allocation7 + $0x10] sm:$0xff]
        %v881 = vld [vmem:[#allocation7 + $0x18] sm:$0xff]
        %v882 = vld [vmem:[#allocation7 + $0x20] sm:$0xff]
        %v883 = vld [vmem:[#allocation7 + $0x28] sm:$0xff]
        %v884 = vld [vmem:[#allocation7 + $0x30] sm:$0xff]
        %v885 = vld [vmem:[#allocation7 + $0x38] sm:$0xff]
        %s886 = scalar_lea.vmem [#allocation7], 64
        %v887 = vld [vmem:[%s886] sm:$0xff]
        %v888 = vld [vmem:[%s886 + $0x8] sm:$0xff]
        %v889 = vld [vmem:[%s886 + $0x10] sm:$0xff]
        %v890 = vld [vmem:[%s886 + $0x18] sm:$0xff]
        %v891 = vld [vmem:[%s886 + $0x20] sm:$0xff]
        %v892 = vld [vmem:[%s886 + $0x28] sm:$0xff]
        %v893 = vld [vmem:[%s886 + $0x30] sm:$0xff]
        %v894 = vld [vmem:[%s886 + $0x38] sm:$0xff]
        %vm895 = vcmask 523264
        %v897 = vsel %vm895, %v817, 0
        %v900 = vsel %vm895, %v818, 0
        %902 = vmatpush.msra.mxu0 0.0
        %903 = vmatpush.msra.mxu0 0.0
        %904 = vmatpush.msra.mxu0 0.0
        %905 = vmatpush.msra.mxu0 0.0
        %906 = vmatpush.msra.mxu0 0.0
        %907 = vmatpush.msra.mxu0 0.0
        %908 = vmatpush.msra.mxu0 0.0
        %909 = vmatpush.msra.mxu0 0.0
        %910 = vmatpush.msra.mxu0 %v894
        %911 = vmatpush.msra.mxu0 %v893
        %912 = vmatpush.msra.mxu0 %v892
        %913 = vmatpush.msra.mxu0 %v891
        %914 = vmatpush.msra.mxu0 %v890
        %915 = vmatpush.msra.mxu0 %v889
        %916 = vmatpush.msra.mxu0 %v888
        %917 = vmatpush.msra.mxu0 %v887
        %918 = vmatmul.f32.gmra.mxu0 %v897
        %v919 = vpop.f32.mrf.mxu0
        %v920 = vadd.f32 0.0, %v919
        %921 = vmatmul.f32.gmra.mxu0 %v900
        %v922 = vpop.f32.mrf.mxu0
        %v923 = vadd.f32 0.0, %v922
        %924 = vdwg.mxu0
        %v926 = vsel %vm895, %v844, 0
        %v929 = vsel %vm895, %v847, 0
        %931 = vmatpush.msra.mxu0 0.0
        %932 = vmatpush.msra.mxu0 0.0
        %933 = vmatpush.msra.mxu0 0.0
        %934 = vmatpush.msra.mxu0 0.0
        %935 = vmatpush.msra.mxu0 0.0
        %936 = vmatpush.msra.mxu0 0.0
        %937 = vmatpush.msra.mxu0 0.0
        %938 = vmatpush.msra.mxu0 0.0
        %939 = vmatpush.msra.mxu0 %v885
        %940 = vmatpush.msra.mxu0 %v884
        %941 = vmatpush.msra.mxu0 %v883
        %942 = vmatpush.msra.mxu0 %v882
        %943 = vmatpush.msra.mxu0 %v881
        %944 = vmatpush.msra.mxu0 %v880
        %945 = vmatpush.msra.mxu0 %v879
        %946 = vmatpush.msra.mxu0 %v878
        %947 = vmatmul.f32.gmra.mxu0 %v926
        %v948 = vpop.f32.mrf.mxu0
        %v949 = vadd.f32 %v920, %v948
        %950 = vmatmul.f32.gmra.mxu0 %v929
        %v951 = vpop.f32.mrf.mxu0
        %v952 = vadd.f32 %v923, %v951
        %953 = vdwg.mxu0
        %s954 = scalar_lea.vmem [#allocation7], 128
        %v955 = vld [vmem:[%s954] sm:$0xff]
        %v956 = vld [vmem:[%s954 + $0x8] sm:$0xff]
        %v957 = vld [vmem:[%s954 + $0x10] sm:$0xff]
        %v958 = vld [vmem:[%s954 + $0x18] sm:$0xff]
        %v959 = vld [vmem:[%s954 + $0x20] sm:$0xff]
        %v960 = vld [vmem:[%s954 + $0x28] sm:$0xff]
        %v961 = vld [vmem:[%s954 + $0x30] sm:$0xff]
        %v962 = vld [vmem:[%s954 + $0x38] sm:$0xff]
        %v964 = vsel %vm895, %v873, 0
        %v967 = vsel %vm895, %v876, 0
        %969 = vmatpush.msra.mxu0 0.0
        %970 = vmatpush.msra.mxu0 0.0
        %971 = vmatpush.msra.mxu0 0.0
        %972 = vmatpush.msra.mxu0 0.0
        %973 = vmatpush.msra.mxu0 0.0
        %974 = vmatpush.msra.mxu0 0.0
        %975 = vmatpush.msra.mxu0 0.0
        %976 = vmatpush.msra.mxu0 0.0
        %977 = vmatpush.msra.mxu0 %v962
        %978 = vmatpush.msra.mxu0 %v961
        %979 = vmatpush.msra.mxu0 %v960
        %980 = vmatpush.msra.mxu0 %v959
        %981 = vmatpush.msra.mxu0 %v958
        %982 = vmatpush.msra.mxu0 %v957
        %983 = vmatpush.msra.mxu0 %v956
        %984 = vmatpush.msra.mxu0 %v955
        %985 = vmatmul.f32.gmra.mxu0 %v964
        %v986 = vpop.f32.mrf.mxu0
        %v987 = vadd.f32 0.0, %v986
        %988 = vmatmul.f32.gmra.mxu0 %v967
        %v989 = vpop.f32.mrf.mxu0
        %v990 = vadd.f32 0.0, %v989
        %991 = vdwg.mxu0
        %v992 = vadd.f32 %v949, %v987
        %v993 = vadd.f32 %v952, %v990
        %v994 = vld [vmem:[#allocation8] sm:$0x1]
        %v996 = vperm.slane %v994, 0
        %v998 = vadd.f32 %v992, %v996
        %v999 = vadd.f32 %v993, %v996
        %v1000 = vmax.f32 %v998, 0.0
        %v1001 = vmax.f32 %v999, 0.0
        %1002 = vmatpush.msra.mxu0 0.0
        %1003 = vmatpush.msra.mxu0 0.0
        %1004 = vmatpush.msra.mxu0 0.0
        %1005 = vmatpush.msra.mxu0 0.0
        %1006 = vmatpush.msra.mxu0 0.0
        %1007 = vmatpush.msra.mxu0 0.0
        %1008 = vmatpush.msra.mxu0 0.0
        %1009 = vmatpush.msra.mxu0 0.0
        %1010 = vmatpush.msra.mxu0 0.0
        %1011 = vmatpush.msra.mxu0 0.0
        %1012 = vmatpush.msra.mxu0 0.0
        %1013 = vmatpush.msra.mxu0 0.0
        %1014 = vmatpush.msra.mxu0 0.0
        %1015 = vmatpush.msra.mxu0 0.0
        %1016 = vmatpush.msra.mxu0 %v1001
        %1017 = vmatpush.msra.mxu0 %v1000
        %1018 = vmatmul.f32.gmra.mxu0 %v821
        %v1019 = vpop.f32.mrf.mxu0
        %v1020 = vadd.f32 0.0, %v1019
        %1021 = vmatmul.f32.gmra.mxu0 %v824
        %v1022 = vpop.f32.mrf.mxu0
        %v1023 = vadd.f32 0.0, %v1022
        %1024 = vdwg.mxu0
        %1025 = vmatpush.msra.mxu0 0.0
        %1026 = vmatpush.msra.mxu0 0.0
        %1027 = vmatpush.msra.mxu0 0.0
        %1028 = vmatpush.msra.mxu0 0.0
        %1029 = vmatpush.msra.mxu0 0.0
        %1030 = vmatpush.msra.mxu0 0.0
        %1031 = vmatpush.msra.mxu0 0.0
        %1032 = vmatpush.msra.mxu0 0.0
        %1033 = vmatpush.msra.mxu0 0.0
        %1034 = vmatpush.msra.mxu0 0.0
        %1035 = vmatpush.msra.mxu0 0.0
        %1036 = vmatpush.msra.mxu0 0.0
        %1037 = vmatpush.msra.mxu0 0.0
        %1038 = vmatpush.msra.mxu0 0.0
        %1039 = vmatpush.msra.mxu0 %v1001
        %1040 = vmatpush.msra.mxu0 %v1000
        %1041 = vmatmul.f32.gmra.mxu0 %v850
        %v1042 = vpop.f32.mrf.mxu0
        %v1043 = vadd.f32 0.0, %v1042
        %1044 = vmatmul.f32.gmra.mxu0 %v853
        %v1045 = vpop.f32.mrf.mxu0
        %v1046 = vadd.f32 0.0, %v1045
        %1047 = vdwg.mxu0
        %v1048 = vld [vmem:[#allocation10] sm:$0xff]
        %v1049 = vld [vmem:[#allocation10 + $0x8] sm:$0xff]
        %v1050 = vld [vmem:[#allocation10 + $0x10] sm:$0xff]
        %v1051 = vld [vmem:[#allocation10 + $0x18] sm:$0xff]
        %v1052 = vld [vmem:[#allocation10 + $0x20] sm:$0xff]
        %v1053 = vld [vmem:[#allocation10 + $0x28] sm:$0xff]
        %v1054 = vld [vmem:[#allocation10 + $0x30] sm:$0xff]
        %v1055 = vld [vmem:[#allocation10 + $0x38] sm:$0xff]
        %v1056 = vld [vmem:[#allocation10 + $0x40] sm:$0xff]
        %v1057 = vld [vmem:[#allocation10 + $0x48] sm:$0xff]
        %v1058 = vld [vmem:[#allocation10 + $0x50] sm:$0xff]
        %v1059 = vld [vmem:[#allocation10 + $0x58] sm:$0xff]
        %v1060 = vld [vmem:[#allocation10 + $0x60] sm:$0xff]
        %v1061 = vld [vmem:[#allocation10 + $0x68] sm:$0xff]
        %v1062 = vld [vmem:[#allocation10 + $0x70] sm:$0xff]
        %v1063 = vld [vmem:[#allocation10 + $0x78] sm:$0xff]
        %s1064 = scalar_lea.vmem [#allocation10], 128
        %v1065 = vld [vmem:[%s1064] sm:$0xff]
        %v1066 = vld [vmem:[%s1064 + $0x8] sm:$0xff]
        %v1067 = vld [vmem:[%s1064 + $0x10] sm:$0xff]
        %v1068 = vld [vmem:[%s1064 + $0x18] sm:$0xff]
        %v1069 = vld [vmem:[%s1064 + $0x20] sm:$0xff]
        %v1070 = vld [vmem:[%s1064 + $0x28] sm:$0xff]
        %v1071 = vld [vmem:[%s1064 + $0x30] sm:$0xff]
        %v1072 = vld [vmem:[%s1064 + $0x38] sm:$0xff]
        %v1073 = vld [vmem:[%s1064 + $0x40] sm:$0xff]
        %v1074 = vld [vmem:[%s1064 + $0x48] sm:$0xff]
        %v1075 = vld [vmem:[%s1064 + $0x50] sm:$0xff]
        %v1076 = vld [vmem:[%s1064 + $0x58] sm:$0xff]
        %v1077 = vld [vmem:[%s1064 + $0x60] sm:$0xff]
        %v1078 = vld [vmem:[%s1064 + $0x68] sm:$0xff]
        %v1079 = vld [vmem:[%s1064 + $0x70] sm:$0xff]
        %v1080 = vld [vmem:[%s1064 + $0x78] sm:$0xff]
        %1081 = vmatpush.msra.mxu0 %v1080
        %1082 = vmatpush.msra.mxu0 %v1079
        %1083 = vmatpush.msra.mxu0 %v1078
        %1084 = vmatpush.msra.mxu0 %v1077
        %1085 = vmatpush.msra.mxu0 %v1076
        %1086 = vmatpush.msra.mxu0 %v1075
        %1087 = vmatpush.msra.mxu0 %v1074
        %1088 = vmatpush.msra.mxu0 %v1073
        %1089 = vmatpush.msra.mxu0 %v1072
        %1090 = vmatpush.msra.mxu0 %v1071
        %1091 = vmatpush.msra.mxu0 %v1070
        %1092 = vmatpush.msra.mxu0 %v1069
        %1093 = vmatpush.msra.mxu0 %v1068
        %1094 = vmatpush.msra.mxu0 %v1067
        %1095 = vmatpush.msra.mxu0 %v1066
        %1096 = vmatpush.msra.mxu0 %v1065
        %1097 = vmatmul.f32.gmra.mxu0 %v1000
        %v1098 = vpop.f32.mrf.mxu0
        %v1099 = vadd.f32 0.0, %v1098
        %1100 = vmatmul.f32.gmra.mxu0 %v1001
        %v1101 = vpop.f32.mrf.mxu0
        %v1102 = vadd.f32 0.0, %v1101
        %1103 = vdwg.mxu0
        %1104 = vmatpush.msra.mxu0 %v1063
        %1105 = vmatpush.msra.mxu0 %v1062
        %1106 = vmatpush.msra.mxu0 %v1061
        %1107 = vmatpush.msra.mxu0 %v1060
        %1108 = vmatpush.msra.mxu0 %v1059
        %1109 = vmatpush.msra.mxu0 %v1058
        %1110 = vmatpush.msra.mxu0 %v1057
        %1111 = vmatpush.msra.mxu0 %v1056
        %1112 = vmatpush.msra.mxu0 %v1055
        %1113 = vmatpush.msra.mxu0 %v1054
        %1114 = vmatpush.msra.mxu0 %v1053
        %1115 = vmatpush.msra.mxu0 %v1052
        %1116 = vmatpush.msra.mxu0 %v1051
        %1117 = vmatpush.msra.mxu0 %v1050
        %1118 = vmatpush.msra.mxu0 %v1049
        %1119 = vmatpush.msra.mxu0 %v1048
        %1120 = vmatmul.f32.gmra.mxu0 %v1020
        %v1121 = vpop.f32.mrf.mxu0
        %v1122 = vadd.f32 %v1099, %v1121
        %1123 = vmatmul.f32.gmra.mxu0 %v1023
        %v1124 = vpop.f32.mrf.mxu0
        %v1125 = vadd.f32 %v1102, %v1124
        %1126 = vdwg.mxu0
        %s1127 = scalar_lea.vmem [#allocation10], 256
        %v1128 = vld [vmem:[%s1127] sm:$0xff]
        %v1129 = vld [vmem:[%s1127 + $0x8] sm:$0xff]
        %v1130 = vld [vmem:[%s1127 + $0x10] sm:$0xff]
        %v1131 = vld [vmem:[%s1127 + $0x18] sm:$0xff]
        %v1132 = vld [vmem:[%s1127 + $0x20] sm:$0xff]
        %v1133 = vld [vmem:[%s1127 + $0x28] sm:$0xff]
        %v1134 = vld [vmem:[%s1127 + $0x30] sm:$0xff]
        %v1135 = vld [vmem:[%s1127 + $0x38] sm:$0xff]
        %v1136 = vld [vmem:[%s1127 + $0x40] sm:$0xff]
        %v1137 = vld [vmem:[%s1127 + $0x48] sm:$0xff]
        %v1138 = vld [vmem:[%s1127 + $0x50] sm:$0xff]
        %v1139 = vld [vmem:[%s1127 + $0x58] sm:$0xff]
        %v1140 = vld [vmem:[%s1127 + $0x60] sm:$0xff]
        %v1141 = vld [vmem:[%s1127 + $0x68] sm:$0xff]
        %v1142 = vld [vmem:[%s1127 + $0x70] sm:$0xff]
        %v1143 = vld [vmem:[%s1127 + $0x78] sm:$0xff]
        %1144 = vmatpush.msra.mxu0 %v1143
        %1145 = vmatpush.msra.mxu0 %v1142
        %1146 = vmatpush.msra.mxu0 %v1141
        %1147 = vmatpush.msra.mxu0 %v1140
        %1148 = vmatpush.msra.mxu0 %v1139
        %1149 = vmatpush.msra.mxu0 %v1138
        %1150 = vmatpush.msra.mxu0 %v1137
        %1151 = vmatpush.msra.mxu0 %v1136
        %1152 = vmatpush.msra.mxu0 %v1135
        %1153 = vmatpush.msra.mxu0 %v1134
        %1154 = vmatpush.msra.mxu0 %v1133
        %1155 = vmatpush.msra.mxu0 %v1132
        %1156 = vmatpush.msra.mxu0 %v1131
        %1157 = vmatpush.msra.mxu0 %v1130
        %1158 = vmatpush.msra.mxu0 %v1129
        %1159 = vmatpush.msra.mxu0 %v1128
        %1160 = vmatmul.f32.gmra.mxu0 %v1043
        %v1161 = vpop.f32.mrf.mxu0
        %v1162 = vadd.f32 0.0, %v1161
        %1163 = vmatmul.f32.gmra.mxu0 %v1046
        %v1164 = vpop.f32.mrf.mxu0
        %v1165 = vadd.f32 0.0, %v1164
        %1166 = vdwg.mxu0
        %v1167 = vadd.f32 %v1122, %v1162
        %v1168 = vadd.f32 %v1125, %v1165
        %v1169 = vld [vmem:[#allocation11] sm:$0x1]
        %v1171 = vperm.slane %v1169, 0
        %v1173 = vadd.f32 %v1167, %v1171
        %v1174 = vadd.f32 %v1168, %v1171
        %v1175 = vmax.f32 %v1173, 0.0
        %v1176 = vmax.f32 %v1174, 0.0
        %v1177 = vmul.f32 %v1175, %v1175
        %v1178 = vmul.f32 %v1176, %v1176
        %v1179 = vld [vmem:[#allocation17] sm:$0xff]
        %v1180 = vld [vmem:[#allocation17 + $0x8] sm:$0xff]
        %v1181 = vld [vmem:[#allocation17 + $0x10] sm:$0xff]
        %v1182 = vld [vmem:[#allocation17 + $0x18] sm:$0xff]
        %v1183 = vld [vmem:[#allocation17 + $0x20] sm:$0xff]
        %v1184 = vld [vmem:[#allocation17 + $0x28] sm:$0xff]
        %v1185 = vld [vmem:[#allocation17 + $0x30] sm:$0xff]
        %v1186 = vld [vmem:[#allocation17 + $0x38] sm:$0xff]
        %v1187 = vld [vmem:[#allocation17 + $0x40] sm:$0xff]
        %v1188 = vld [vmem:[#allocation17 + $0x48] sm:$0xff]
        %v1189 = vld [vmem:[#allocation17 + $0x50] sm:$0xff]
        %v1190 = vld [vmem:[#allocation17 + $0x58] sm:$0xff]
        %v1191 = vld [vmem:[#allocation17 + $0x60] sm:$0xff]
        %v1192 = vld [vmem:[#allocation17 + $0x68] sm:$0xff]
        %v1193 = vld [vmem:[#allocation17 + $0x70] sm:$0xff]
        %v1194 = vld [vmem:[#allocation17 + $0x78] sm:$0xff]
        %1195 = vmatpush.msra.mxu0 %v1194
        %1196 = vmatpush.msra.mxu0 %v1193
        %1197 = vmatpush.msra.mxu0 %v1192
        %1198 = vmatpush.msra.mxu0 %v1191
        %1199 = vmatpush.msra.mxu0 %v1190
        %1200 = vmatpush.msra.mxu0 %v1189
        %1201 = vmatpush.msra.mxu0 %v1188
        %1202 = vmatpush.msra.mxu0 %v1187
        %1203 = vmatpush.msra.mxu0 %v1186
        %1204 = vmatpush.msra.mxu0 %v1185
        %1205 = vmatpush.msra.mxu0 %v1184
        %1206 = vmatpush.msra.mxu0 %v1183
        %1207 = vmatpush.msra.mxu0 %v1182
        %1208 = vmatpush.msra.mxu0 %v1181
        %1209 = vmatpush.msra.mxu0 %v1180
        %1210 = vmatpush.msra.mxu0 %v1179
        %1211 = vmatmul.f32.gmra.mxu0 %v1177
        %v1212 = vpop.f32.mrf.mxu0
        %v1213 = vadd.f32 0.0, %v1212
        %1214 = vmatmul.f32.gmra.mxu0 %v1178
        %v1215 = vpop.f32.mrf.mxu0
        %v1216 = vadd.f32 0.0, %v1215
        %1217 = vdwg.mxu0
        %v1218 = vrsqrt.pop %v1213
        %v1219 = vmul.f32 %v1218, %v1213
        %v1220 = vmul.f32 %v1219, %v1218
        %v1221 = vmul.f32 0.5, %v1220
        %v1222 = vsub.f32 1.5, %v1221
        %v1223 = vmul.f32 %v1218, %v1222
        %v1224 = vmul.f32 %v1213, %v1223
        %vm1225 = vcmp.eq.f32.partialorder %v1213, inf
        %v1226 = vsel %vm1225, %v1213, %v1224
        %vm1227 = vcmp.eq.f32.partialorder %v1213, 0.0
        %v1228 = vand.u32 %v1213, 2147483648
        %v1229 = vsel %vm1227, %v1228, %v1226
        %v1230 = vrsqrt.pop %v1216
        %v1231 = vmul.f32 %v1230, %v1216
        %v1232 = vmul.f32 %v1231, %v1230
        %v1233 = vmul.f32 0.5, %v1232
        %v1234 = vsub.f32 1.5, %v1233
        %v1235 = vmul.f32 %v1230, %v1234
        %v1236 = vmul.f32 %v1216, %v1235
        %vm1237 = vcmp.eq.f32.partialorder %v1216, inf
        %v1238 = vsel %vm1237, %v1216, %v1236
        %vm1239 = vcmp.eq.f32.partialorder %v1216, 0.0
        %v1240 = vand.u32 %v1216, 2147483648
        %v1241 = vsel %vm1239, %v1240, %v1238
        %v1242 = vadd.f32 %v1229, 1e-10
        %v1243 = vadd.f32 %v1241, 1e-10
        %v1244 = vrcp.pop %v1242
        %v1245 = vrcp.pop %v1243
        %v1246 = vmul.f32 %v1175, %v1244
        %v1247 = vmul.f32 %v1176, %v1245
        %v1248 = vld [vmem:[%s13] sm:$0x1]
        %v1250 = vperm.slane %v1248, 0
        %v1252 = vmul.f32 %v1246, %v1250
        %v1253 = vmul.f32 %v1247, %v1250
        %1254 = vst [vmem:[%s790] sm:$0xff] %v1252
        %1255 = vst [vmem:[%s790 + $0x8] sm:$0xff] %v1253
        %1256 = vmatpush.msra.mxu0 0.0
        %1257 = vmatpush.msra.mxu0 0.0
        %1258 = vmatpush.msra.mxu0 0.0
        %1259 = vmatpush.msra.mxu0 0.0
        %1260 = vmatpush.msra.mxu0 0.0
        %1261 = vmatpush.msra.mxu0 0.0
        %1262 = vmatpush.msra.mxu0 0.0
        %1263 = vmatpush.msra.mxu0 0.0
        %1264 = vmatpush.msra.mxu0 0.0
        %1265 = vmatpush.msra.mxu0 0.0
        %1266 = vmatpush.msra.mxu0 0.0
        %1267 = vmatpush.msra.mxu0 0.0
        %1268 = vmatpush.msra.mxu0 0.0
        %1269 = vmatpush.msra.mxu0 0.0
        %1270 = vmatpush.msra.mxu0 %v1176
        %1271 = vmatpush.msra.mxu0 %v1175
        %1272 = vmatmul.f32.gmra.mxu0 %v821
        %v1273 = vpop.f32.mrf.mxu0
        %v1274 = vadd.f32 0.0, %v1273
        %1275 = vmatmul.f32.gmra.mxu0 %v824
        %v1276 = vpop.f32.mrf.mxu0
        %v1277 = vadd.f32 0.0, %v1276
        %1278 = vdwg.mxu0
        %1279 = vmatpush.msra.mxu0 0.0
        %1280 = vmatpush.msra.mxu0 0.0
        %1281 = vmatpush.msra.mxu0 0.0
        %1282 = vmatpush.msra.mxu0 0.0
        %1283 = vmatpush.msra.mxu0 0.0
        %1284 = vmatpush.msra.mxu0 0.0
        %1285 = vmatpush.msra.mxu0 0.0
        %1286 = vmatpush.msra.mxu0 0.0
        %1287 = vmatpush.msra.mxu0 0.0
        %1288 = vmatpush.msra.mxu0 0.0
        %1289 = vmatpush.msra.mxu0 0.0
        %1290 = vmatpush.msra.mxu0 0.0
        %1291 = vmatpush.msra.mxu0 0.0
        %1292 = vmatpush.msra.mxu0 0.0
        %1293 = vmatpush.msra.mxu0 %v1176
        %1294 = vmatpush.msra.mxu0 %v1175
        %1295 = vmatmul.f32.gmra.mxu0 %v850
        %v1296 = vpop.f32.mrf.mxu0
        %v1297 = vadd.f32 0.0, %v1296
        %1298 = vmatmul.f32.gmra.mxu0 %v853
        %v1299 = vpop.f32.mrf.mxu0
        %v1300 = vadd.f32 0.0, %v1299
        %1301 = vdwg.mxu0
        %v1302 = vld [vmem:[#allocation13] sm:$0xff]
        %v1303 = vld [vmem:[#allocation13 + $0x8] sm:$0xff]
        %v1304 = vld [vmem:[#allocation13 + $0x10] sm:$0xff]
        %v1305 = vld [vmem:[#allocation13 + $0x18] sm:$0xff]
        %v1306 = vld [vmem:[#allocation13 + $0x20] sm:$0xff]
        %v1307 = vld [vmem:[#allocation13 + $0x28] sm:$0xff]
        %v1308 = vld [vmem:[#allocation13 + $0x30] sm:$0xff]
        %v1309 = vld [vmem:[#allocation13 + $0x38] sm:$0xff]
        %v1310 = vld [vmem:[#allocation13 + $0x40] sm:$0xff]
        %v1311 = vld [vmem:[#allocation13 + $0x48] sm:$0xff]
        %v1312 = vld [vmem:[#allocation13 + $0x50] sm:$0xff]
        %v1313 = vld [vmem:[#allocation13 + $0x58] sm:$0xff]
        %v1314 = vld [vmem:[#allocation13 + $0x60] sm:$0xff]
        %v1315 = vld [vmem:[#allocation13 + $0x68] sm:$0xff]
        %v1316 = vld [vmem:[#allocation13 + $0x70] sm:$0xff]
        %v1317 = vld [vmem:[#allocation13 + $0x78] sm:$0xff]
        %v1318 = vld [vmem:[#allocation13 + $0x80] sm:$0xff]
        %v1319 = vld [vmem:[#allocation13 + $0x88] sm:$0xff]
        %v1320 = vld [vmem:[#allocation13 + $0x90] sm:$0xff]
        %v1321 = vld [vmem:[#allocation13 + $0x98] sm:$0xff]
        %v1322 = vld [vmem:[#allocation13 + $0xa0] sm:$0xff]
        %v1323 = vld [vmem:[#allocation13 + $0xa8] sm:$0xff]
        %v1324 = vld [vmem:[#allocation13 + $0xb0] sm:$0xff]
        %v1325 = vld [vmem:[#allocation13 + $0xb8] sm:$0xff]
        %v1326 = vld [vmem:[#allocation13 + $0xc0] sm:$0xff]
        %v1327 = vld [vmem:[#allocation13 + $0xc8] sm:$0xff]
        %v1328 = vld [vmem:[#allocation13 + $0xd0] sm:$0xff]
        %v1329 = vld [vmem:[#allocation13 + $0xd8] sm:$0xff]
        %v1330 = vld [vmem:[#allocation13 + $0xe0] sm:$0xff]
        %v1331 = vld [vmem:[#allocation13 + $0xe8] sm:$0xff]
        %v1332 = vld [vmem:[#allocation13 + $0xf0] sm:$0xff]
        %v1333 = vld [vmem:[#allocation13 + $0xf8] sm:$0xff]
        %s1334 = scalar_lea.vmem [#allocation13], 256
        %v1335 = vld [vmem:[%s1334] sm:$0xff]
        %v1336 = vld [vmem:[%s1334 + $0x8] sm:$0xff]
        %v1337 = vld [vmem:[%s1334 + $0x10] sm:$0xff]
        %v1338 = vld [vmem:[%s1334 + $0x18] sm:$0xff]
        %v1339 = vld [vmem:[%s1334 + $0x20] sm:$0xff]
        %v1340 = vld [vmem:[%s1334 + $0x28] sm:$0xff]
        %v1341 = vld [vmem:[%s1334 + $0x30] sm:$0xff]
        %v1342 = vld [vmem:[%s1334 + $0x38] sm:$0xff]
        %v1343 = vld [vmem:[%s1334 + $0x40] sm:$0xff]
        %v1344 = vld [vmem:[%s1334 + $0x48] sm:$0xff]
        %v1345 = vld [vmem:[%s1334 + $0x50] sm:$0xff]
        %v1346 = vld [vmem:[%s1334 + $0x58] sm:$0xff]
        %v1347 = vld [vmem:[%s1334 + $0x60] sm:$0xff]
        %v1348 = vld [vmem:[%s1334 + $0x68] sm:$0xff]
        %v1349 = vld [vmem:[%s1334 + $0x70] sm:$0xff]
        %v1350 = vld [vmem:[%s1334 + $0x78] sm:$0xff]
        %v1351 = vld [vmem:[%s1334 + $0x80] sm:$0xff]
        %v1352 = vld [vmem:[%s1334 + $0x88] sm:$0xff]
        %v1353 = vld [vmem:[%s1334 + $0x90] sm:$0xff]
        %v1354 = vld [vmem:[%s1334 + $0x98] sm:$0xff]
        %v1355 = vld [vmem:[%s1334 + $0xa0] sm:$0xff]
        %v1356 = vld [vmem:[%s1334 + $0xa8] sm:$0xff]
        %v1357 = vld [vmem:[%s1334 + $0xb0] sm:$0xff]
        %v1358 = vld [vmem:[%s1334 + $0xb8] sm:$0xff]
        %v1359 = vld [vmem:[%s1334 + $0xc0] sm:$0xff]
        %v1360 = vld [vmem:[%s1334 + $0xc8] sm:$0xff]
        %v1361 = vld [vmem:[%s1334 + $0xd0] sm:$0xff]
        %v1362 = vld [vmem:[%s1334 + $0xd8] sm:$0xff]
        %v1363 = vld [vmem:[%s1334 + $0xe0] sm:$0xff]
        %v1364 = vld [vmem:[%s1334 + $0xe8] sm:$0xff]
        %v1365 = vld [vmem:[%s1334 + $0xf0] sm:$0xff]
        %v1366 = vld [vmem:[%s1334 + $0xf8] sm:$0xff]
        %1367 = vmatpush.msra.mxu0 %v1365
        %1368 = vmatpush.msra.mxu0 %v1363
        %1369 = vmatpush.msra.mxu0 %v1361
        %1370 = vmatpush.msra.mxu0 %v1359
        %1371 = vmatpush.msra.mxu0 %v1357
        %1372 = vmatpush.msra.mxu0 %v1355
        %1373 = vmatpush.msra.mxu0 %v1353
        %1374 = vmatpush.msra.mxu0 %v1351
        %1375 = vmatpush.msra.mxu0 %v1349
        %1376 = vmatpush.msra.mxu0 %v1347
        %1377 = vmatpush.msra.mxu0 %v1345
        %1378 = vmatpush.msra.mxu0 %v1343
        %1379 = vmatpush.msra.mxu0 %v1341
        %1380 = vmatpush.msra.mxu0 %v1339
        %1381 = vmatpush.msra.mxu0 %v1337
        %1382 = vmatpush.msra.mxu0 %v1335
        %1383 = vmatmul.f32.gmra.mxu0 %v1175
        %v1384 = vpop.f32.mrf.mxu0
        %v1385 = vadd.f32 0.0, %v1384
        %1386 = vmatmul.f32.gmra.mxu0 %v1176
        %v1387 = vpop.f32.mrf.mxu0
        %v1388 = vadd.f32 0.0, %v1387
        %1389 = vdwg.mxu0
        %1390 = vmatpush.msra.mxu0 %v1366
        %1391 = vmatpush.msra.mxu0 %v1364
        %1392 = vmatpush.msra.mxu0 %v1362
        %1393 = vmatpush.msra.mxu0 %v1360
        %1394 = vmatpush.msra.mxu0 %v1358
        %1395 = vmatpush.msra.mxu0 %v1356
        %1396 = vmatpush.msra.mxu0 %v1354
        %1397 = vmatpush.msra.mxu0 %v1352
        %1398 = vmatpush.msra.mxu0 %v1350
        %1399 = vmatpush.msra.mxu0 %v1348
        %1400 = vmatpush.msra.mxu0 %v1346
        %1401 = vmatpush.msra.mxu0 %v1344
        %1402 = vmatpush.msra.mxu0 %v1342
        %1403 = vmatpush.msra.mxu0 %v1340
        %1404 = vmatpush.msra.mxu0 %v1338
        %1405 = vmatpush.msra.mxu0 %v1336
        %1406 = vmatmul.f32.gmra.mxu0 %v1175
        %v1407 = vpop.f32.mrf.mxu0
        %v1408 = vadd.f32 0.0, %v1407
        %1409 = vmatmul.f32.gmra.mxu0 %v1176
        %v1410 = vpop.f32.mrf.mxu0
        %v1411 = vadd.f32 0.0, %v1410
        %1412 = vdwg.mxu0
        %1413 = vmatpush.msra.mxu0 %v1332
        %1414 = vmatpush.msra.mxu0 %v1330
        %1415 = vmatpush.msra.mxu0 %v1328
        %1416 = vmatpush.msra.mxu0 %v1326
        %1417 = vmatpush.msra.mxu0 %v1324
        %1418 = vmatpush.msra.mxu0 %v1322
        %1419 = vmatpush.msra.mxu0 %v1320
        %1420 = vmatpush.msra.mxu0 %v1318
        %1421 = vmatpush.msra.mxu0 %v1316
        %1422 = vmatpush.msra.mxu0 %v1314
        %1423 = vmatpush.msra.mxu0 %v1312
        %1424 = vmatpush.msra.mxu0 %v1310
        %1425 = vmatpush.msra.mxu0 %v1308
        %1426 = vmatpush.msra.mxu0 %v1306
        %1427 = vmatpush.msra.mxu0 %v1304
        %1428 = vmatpush.msra.mxu0 %v1302
        %1429 = vmatmul.f32.gmra.mxu0 %v1274
        %v1430 = vpop.f32.mrf.mxu0
        %v1431 = vadd.f32 %v1385, %v1430
        %1432 = vmatmul.f32.gmra.mxu0 %v1277
        %v1433 = vpop.f32.mrf.mxu0
        %v1434 = vadd.f32 %v1388, %v1433
        %1435 = vdwg.mxu0
        %1436 = vmatpush.msra.mxu0 %v1333
        %1437 = vmatpush.msra.mxu0 %v1331
        %1438 = vmatpush.msra.mxu0 %v1329
        %1439 = vmatpush.msra.mxu0 %v1327
        %1440 = vmatpush.msra.mxu0 %v1325
        %1441 = vmatpush.msra.mxu0 %v1323
        %1442 = vmatpush.msra.mxu0 %v1321
        %1443 = vmatpush.msra.mxu0 %v1319
        %1444 = vmatpush.msra.mxu0 %v1317
        %1445 = vmatpush.msra.mxu0 %v1315
        %1446 = vmatpush.msra.mxu0 %v1313
        %1447 = vmatpush.msra.mxu0 %v1311
        %1448 = vmatpush.msra.mxu0 %v1309
        %1449 = vmatpush.msra.mxu0 %v1307
        %1450 = vmatpush.msra.mxu0 %v1305
        %1451 = vmatpush.msra.mxu0 %v1303
        %1452 = vmatmul.f32.gmra.mxu0 %v1274
        %v1453 = vpop.f32.mrf.mxu0
        %v1454 = vadd.f32 %v1408, %v1453
        %1455 = vmatmul.f32.gmra.mxu0 %v1277
        %v1456 = vpop.f32.mrf.mxu0
        %v1457 = vadd.f32 %v1411, %v1456
        %1458 = vdwg.mxu0
        %s1459 = scalar_lea.vmem [#allocation13], 512
        %v1460 = vld [vmem:[%s1459] sm:$0xff]
        %v1461 = vld [vmem:[%s1459 + $0x8] sm:$0xff]
        %v1462 = vld [vmem:[%s1459 + $0x10] sm:$0xff]
        %v1463 = vld [vmem:[%s1459 + $0x18] sm:$0xff]
        %v1464 = vld [vmem:[%s1459 + $0x20] sm:$0xff]
        %v1465 = vld [vmem:[%s1459 + $0x28] sm:$0xff]
        %v1466 = vld [vmem:[%s1459 + $0x30] sm:$0xff]
        %v1467 = vld [vmem:[%s1459 + $0x38] sm:$0xff]
        %v1468 = vld [vmem:[%s1459 + $0x40] sm:$0xff]
        %v1469 = vld [vmem:[%s1459 + $0x48] sm:$0xff]
        %v1470 = vld [vmem:[%s1459 + $0x50] sm:$0xff]
        %v1471 = vld [vmem:[%s1459 + $0x58] sm:$0xff]
        %v1472 = vld [vmem:[%s1459 + $0x60] sm:$0xff]
        %v1473 = vld [vmem:[%s1459 + $0x68] sm:$0xff]
        %v1474 = vld [vmem:[%s1459 + $0x70] sm:$0xff]
        %v1475 = vld [vmem:[%s1459 + $0x78] sm:$0xff]
        %v1476 = vld [vmem:[%s1459 + $0x80] sm:$0xff]
        %v1477 = vld [vmem:[%s1459 + $0x88] sm:$0xff]
        %v1478 = vld [vmem:[%s1459 + $0x90] sm:$0xff]
        %v1479 = vld [vmem:[%s1459 + $0x98] sm:$0xff]
        %v1480 = vld [vmem:[%s1459 + $0xa0] sm:$0xff]
        %v1481 = vld [vmem:[%s1459 + $0xa8] sm:$0xff]
        %v1482 = vld [vmem:[%s1459 + $0xb0] sm:$0xff]
        %v1483 = vld [vmem:[%s1459 + $0xb8] sm:$0xff]
        %v1484 = vld [vmem:[%s1459 + $0xc0] sm:$0xff]
        %v1485 = vld [vmem:[%s1459 + $0xc8] sm:$0xff]
        %v1486 = vld [vmem:[%s1459 + $0xd0] sm:$0xff]
        %v1487 = vld [vmem:[%s1459 + $0xd8] sm:$0xff]
        %v1488 = vld [vmem:[%s1459 + $0xe0] sm:$0xff]
        %v1489 = vld [vmem:[%s1459 + $0xe8] sm:$0xff]
        %v1490 = vld [vmem:[%s1459 + $0xf0] sm:$0xff]
        %v1491 = vld [vmem:[%s1459 + $0xf8] sm:$0xff]
        %1492 = vmatpush.msra.mxu0 %v1490
        %1493 = vmatpush.msra.mxu0 %v1488
        %1494 = vmatpush.msra.mxu0 %v1486
        %1495 = vmatpush.msra.mxu0 %v1484
        %1496 = vmatpush.msra.mxu0 %v1482
        %1497 = vmatpush.msra.mxu0 %v1480
        %1498 = vmatpush.msra.mxu0 %v1478
        %1499 = vmatpush.msra.mxu0 %v1476
        %1500 = vmatpush.msra.mxu0 %v1474
        %1501 = vmatpush.msra.mxu0 %v1472
        %1502 = vmatpush.msra.mxu0 %v1470
        %1503 = vmatpush.msra.mxu0 %v1468
        %1504 = vmatpush.msra.mxu0 %v1466
        %1505 = vmatpush.msra.mxu0 %v1464
        %1506 = vmatpush.msra.mxu0 %v1462
        %1507 = vmatpush.msra.mxu0 %v1460
        %1508 = vmatmul.f32.gmra.mxu0 %v1297
        %v1509 = vpop.f32.mrf.mxu0
        %v1510 = vadd.f32 0.0, %v1509
        %1511 = vmatmul.f32.gmra.mxu0 %v1300
        %v1512 = vpop.f32.mrf.mxu0
        %v1513 = vadd.f32 0.0, %v1512
        %1514 = vdwg.mxu0
        %1515 = vmatpush.msra.mxu0 %v1491
        %1516 = vmatpush.msra.mxu0 %v1489
        %1517 = vmatpush.msra.mxu0 %v1487
        %1518 = vmatpush.msra.mxu0 %v1485
        %1519 = vmatpush.msra.mxu0 %v1483
        %1520 = vmatpush.msra.mxu0 %v1481
        %1521 = vmatpush.msra.mxu0 %v1479
        %1522 = vmatpush.msra.mxu0 %v1477
        %1523 = vmatpush.msra.mxu0 %v1475
        %1524 = vmatpush.msra.mxu0 %v1473
        %1525 = vmatpush.msra.mxu0 %v1471
        %1526 = vmatpush.msra.mxu0 %v1469
        %1527 = vmatpush.msra.mxu0 %v1467
        %1528 = vmatpush.msra.mxu0 %v1465
        %1529 = vmatpush.msra.mxu0 %v1463
        %1530 = vmatpush.msra.mxu0 %v1461
        %1531 = vmatmul.f32.gmra.mxu0 %v1297
        %v1532 = vpop.f32.mrf.mxu0
        %v1533 = vadd.f32 0.0, %v1532
        %1534 = vmatmul.f32.gmra.mxu0 %v1300
        %v1535 = vpop.f32.mrf.mxu0
        %v1536 = vadd.f32 0.0, %v1535
        %1537 = vdwg.mxu0
        %v1538 = vadd.f32 %v1431, %v1510
        %v1539 = vadd.f32 %v1454, %v1533
        %v1540 = vadd.f32 %v1434, %v1513
        %v1541 = vadd.f32 %v1457, %v1536
        %v1542 = vld [vmem:[%s7] sm:$0x3]
        %v1544 = vperm.slane %v1542, 0
        %v1545 = vperm.slane %v1542, 1
        %v1548 = vadd.f32 %v1538, %v1544
        %v1549 = vadd.f32 %v1539, %v1545
        %v1550 = vadd.f32 %v1540, %v1544
        %v1551 = vadd.f32 %v1541, %v1545
        %v1552 = vmax.f32 %v1548, 0.0
        %v1553 = vmax.f32 %v1549, 0.0
        %v1554 = vmax.f32 %v1550, 0.0
        %v1555 = vmax.f32 %v1551, 0.0
        %v1556 = vmul.f32 %v1552, %v1552
        %v1557 = vmul.f32 %v1553, %v1553
        %v1558 = vmul.f32 %v1554, %v1554
        %v1559 = vmul.f32 %v1555, %v1555
        %v1560 = vld [vmem:[#allocation19] sm:$0xff]
        %v1561 = vld [vmem:[#allocation19 + $0x8] sm:$0xff]
        %v1562 = vld [vmem:[#allocation19 + $0x10] sm:$0xff]
        %v1563 = vld [vmem:[#allocation19 + $0x18] sm:$0xff]
        %v1564 = vld [vmem:[#allocation19 + $0x20] sm:$0xff]
        %v1565 = vld [vmem:[#allocation19 + $0x28] sm:$0xff]
        %v1566 = vld [vmem:[#allocation19 + $0x30] sm:$0xff]
        %v1567 = vld [vmem:[#allocation19 + $0x38] sm:$0xff]
        %v1568 = vld [vmem:[#allocation19 + $0x40] sm:$0xff]
        %v1569 = vld [vmem:[#allocation19 + $0x48] sm:$0xff]
        %v1570 = vld [vmem:[#allocation19 + $0x50] sm:$0xff]
        %v1571 = vld [vmem:[#allocation19 + $0x58] sm:$0xff]
        %v1572 = vld [vmem:[#allocation19 + $0x60] sm:$0xff]
        %v1573 = vld [vmem:[#allocation19 + $0x68] sm:$0xff]
        %v1574 = vld [vmem:[#allocation19 + $0x70] sm:$0xff]
        %v1575 = vld [vmem:[#allocation19 + $0x78] sm:$0xff]
        %v1576 = vld [vmem:[#allocation19 + $0x80] sm:$0xff]
        %v1577 = vld [vmem:[#allocation19 + $0x88] sm:$0xff]
        %v1578 = vld [vmem:[#allocation19 + $0x90] sm:$0xff]
        %v1579 = vld [vmem:[#allocation19 + $0x98] sm:$0xff]
        %v1580 = vld [vmem:[#allocation19 + $0xa0] sm:$0xff]
        %v1581 = vld [vmem:[#allocation19 + $0xa8] sm:$0xff]
        %v1582 = vld [vmem:[#allocation19 + $0xb0] sm:$0xff]
        %v1583 = vld [vmem:[#allocation19 + $0xb8] sm:$0xff]
        %v1584 = vld [vmem:[#allocation19 + $0xc0] sm:$0xff]
        %v1585 = vld [vmem:[#allocation19 + $0xc8] sm:$0xff]
        %v1586 = vld [vmem:[#allocation19 + $0xd0] sm:$0xff]
        %v1587 = vld [vmem:[#allocation19 + $0xd8] sm:$0xff]
        %v1588 = vld [vmem:[#allocation19 + $0xe0] sm:$0xff]
        %v1589 = vld [vmem:[#allocation19 + $0xe8] sm:$0xff]
        %v1590 = vld [vmem:[#allocation19 + $0xf0] sm:$0xff]
        %v1591 = vld [vmem:[#allocation19 + $0xf8] sm:$0xff]
        %v1592 = vld [vmem:[#allocation19 + $0x100] sm:$0xff]
        %v1593 = vld [vmem:[#allocation19 + $0x108] sm:$0xff]
        %v1594 = vld [vmem:[#allocation19 + $0x110] sm:$0xff]
        %v1595 = vld [vmem:[#allocation19 + $0x118] sm:$0xff]
        %v1596 = vld [vmem:[#allocation19 + $0x120] sm:$0xff]
        %v1597 = vld [vmem:[#allocation19 + $0x128] sm:$0xff]
        %v1598 = vld [vmem:[#allocation19 + $0x130] sm:$0xff]
        %v1599 = vld [vmem:[#allocation19 + $0x138] sm:$0xff]
        %v1600 = vld [vmem:[#allocation19 + $0x140] sm:$0xff]
        %v1601 = vld [vmem:[#allocation19 + $0x148] sm:$0xff]
        %v1602 = vld [vmem:[#allocation19 + $0x150] sm:$0xff]
        %v1603 = vld [vmem:[#allocation19 + $0x158] sm:$0xff]
        %v1604 = vld [vmem:[#allocation19 + $0x160] sm:$0xff]
        %v1605 = vld [vmem:[#allocation19 + $0x168] sm:$0xff]
        %v1606 = vld [vmem:[#allocation19 + $0x170] sm:$0xff]
        %v1607 = vld [vmem:[#allocation19 + $0x178] sm:$0xff]
        %v1608 = vld [vmem:[#allocation19 + $0x180] sm:$0xff]
        %v1609 = vld [vmem:[#allocation19 + $0x188] sm:$0xff]
        %v1610 = vld [vmem:[#allocation19 + $0x190] sm:$0xff]
        %v1611 = vld [vmem:[#allocation19 + $0x198] sm:$0xff]
        %v1612 = vld [vmem:[#allocation19 + $0x1a0] sm:$0xff]
        %v1613 = vld [vmem:[#allocation19 + $0x1a8] sm:$0xff]
        %v1614 = vld [vmem:[#allocation19 + $0x1b0] sm:$0xff]
        %v1615 = vld [vmem:[#allocation19 + $0x1b8] sm:$0xff]
        %v1616 = vld [vmem:[#allocation19 + $0x1c0] sm:$0xff]
        %v1617 = vld [vmem:[#allocation19 + $0x1c8] sm:$0xff]
        %v1618 = vld [vmem:[#allocation19 + $0x1d0] sm:$0xff]
        %v1619 = vld [vmem:[#allocation19 + $0x1d8] sm:$0xff]
        %v1620 = vld [vmem:[#allocation19 + $0x1e0] sm:$0xff]
        %v1621 = vld [vmem:[#allocation19 + $0x1e8] sm:$0xff]
        %v1622 = vld [vmem:[#allocation19 + $0x1f0] sm:$0xff]
        %v1623 = vld [vmem:[#allocation19 + $0x1f8] sm:$0xff]
        %1624 = vmatpush.msra.mxu0 %v1590
        %1625 = vmatpush.msra.mxu0 %v1588
        %1626 = vmatpush.msra.mxu0 %v1586
        %1627 = vmatpush.msra.mxu0 %v1584
        %1628 = vmatpush.msra.mxu0 %v1582
        %1629 = vmatpush.msra.mxu0 %v1580
        %1630 = vmatpush.msra.mxu0 %v1578
        %1631 = vmatpush.msra.mxu0 %v1576
        %1632 = vmatpush.msra.mxu0 %v1574
        %1633 = vmatpush.msra.mxu0 %v1572
        %1634 = vmatpush.msra.mxu0 %v1570
        %1635 = vmatpush.msra.mxu0 %v1568
        %1636 = vmatpush.msra.mxu0 %v1566
        %1637 = vmatpush.msra.mxu0 %v1564
        %1638 = vmatpush.msra.mxu0 %v1562
        %1639 = vmatpush.msra.mxu0 %v1560
        %1640 = vmatmul.f32.gmra.mxu0 %v1556
        %v1641 = vpop.f32.mrf.mxu0
        %v1642 = vadd.f32 0.0, %v1641
        %1643 = vmatmul.f32.gmra.mxu0 %v1558
        %v1644 = vpop.f32.mrf.mxu0
        %v1645 = vadd.f32 0.0, %v1644
        %1646 = vdwg.mxu0
        %1647 = vmatpush.msra.mxu0 %v1622
        %1648 = vmatpush.msra.mxu0 %v1620
        %1649 = vmatpush.msra.mxu0 %v1618
        %1650 = vmatpush.msra.mxu0 %v1616
        %1651 = vmatpush.msra.mxu0 %v1614
        %1652 = vmatpush.msra.mxu0 %v1612
        %1653 = vmatpush.msra.mxu0 %v1610
        %1654 = vmatpush.msra.mxu0 %v1608
        %1655 = vmatpush.msra.mxu0 %v1606
        %1656 = vmatpush.msra.mxu0 %v1604
        %1657 = vmatpush.msra.mxu0 %v1602
        %1658 = vmatpush.msra.mxu0 %v1600
        %1659 = vmatpush.msra.mxu0 %v1598
        %1660 = vmatpush.msra.mxu0 %v1596
        %1661 = vmatpush.msra.mxu0 %v1594
        %1662 = vmatpush.msra.mxu0 %v1592
        %1663 = vmatmul.f32.gmra.mxu0 %v1557
        %v1664 = vpop.f32.mrf.mxu0
        %v1665 = vadd.f32 %v1642, %v1664
        %1666 = vmatmul.f32.gmra.mxu0 %v1559
        %v1667 = vpop.f32.mrf.mxu0
        %v1668 = vadd.f32 %v1645, %v1667
        %1669 = vdwg.mxu0
        %1670 = vmatpush.msra.mxu0 %v1591
        %1671 = vmatpush.msra.mxu0 %v1589
        %1672 = vmatpush.msra.mxu0 %v1587
        %1673 = vmatpush.msra.mxu0 %v1585
        %1674 = vmatpush.msra.mxu0 %v1583
        %1675 = vmatpush.msra.mxu0 %v1581
        %1676 = vmatpush.msra.mxu0 %v1579
        %1677 = vmatpush.msra.mxu0 %v1577
        %1678 = vmatpush.msra.mxu0 %v1575
        %1679 = vmatpush.msra.mxu0 %v1573
        %1680 = vmatpush.msra.mxu0 %v1571
        %1681 = vmatpush.msra.mxu0 %v1569
        %1682 = vmatpush.msra.mxu0 %v1567
        %1683 = vmatpush.msra.mxu0 %v1565
        %1684 = vmatpush.msra.mxu0 %v1563
        %1685 = vmatpush.msra.mxu0 %v1561
        %1686 = vmatmul.f32.gmra.mxu0 %v1556
        %v1687 = vpop.f32.mrf.mxu0
        %v1688 = vadd.f32 0.0, %v1687
        %1689 = vmatmul.f32.gmra.mxu0 %v1558
        %v1690 = vpop.f32.mrf.mxu0
        %v1691 = vadd.f32 0.0, %v1690
        %1692 = vdwg.mxu0
        %1693 = vmatpush.msra.mxu0 %v1623
        %1694 = vmatpush.msra.mxu0 %v1621
        %1695 = vmatpush.msra.mxu0 %v1619
        %1696 = vmatpush.msra.mxu0 %v1617
        %1697 = vmatpush.msra.mxu0 %v1615
        %1698 = vmatpush.msra.mxu0 %v1613
        %1699 = vmatpush.msra.mxu0 %v1611
        %1700 = vmatpush.msra.mxu0 %v1609
        %1701 = vmatpush.msra.mxu0 %v1607
        %1702 = vmatpush.msra.mxu0 %v1605
        %1703 = vmatpush.msra.mxu0 %v1603
        %1704 = vmatpush.msra.mxu0 %v1601
        %1705 = vmatpush.msra.mxu0 %v1599
        %1706 = vmatpush.msra.mxu0 %v1597
        %1707 = vmatpush.msra.mxu0 %v1595
        %1708 = vmatpush.msra.mxu0 %v1593
        %1709 = vmatmul.f32.gmra.mxu0 %v1557
        %v1710 = vpop.f32.mrf.mxu0
        %v1711 = vadd.f32 %v1688, %v1710
        %1712 = vmatmul.f32.gmra.mxu0 %v1559
        %v1713 = vpop.f32.mrf.mxu0
        %v1714 = vadd.f32 %v1691, %v1713
        %1715 = vdwg.mxu0
        %v1716 = vrsqrt.pop %v1665
        %v1717 = vmul.f32 %v1716, %v1665
        %v1718 = vmul.f32 %v1717, %v1716
        %v1719 = vmul.f32 0.5, %v1718
        %v1720 = vsub.f32 1.5, %v1719
        %v1721 = vmul.f32 %v1716, %v1720
        %v1722 = vmul.f32 %v1665, %v1721
        %vm1723 = vcmp.eq.f32.partialorder %v1665, inf
        %v1724 = vsel %vm1723, %v1665, %v1722
        %vm1725 = vcmp.eq.f32.partialorder %v1665, 0.0
        %v1726 = vand.u32 %v1665, 2147483648
        %v1727 = vsel %vm1725, %v1726, %v1724
        %v1728 = vrsqrt.pop %v1711
        %v1729 = vmul.f32 %v1728, %v1711
        %v1730 = vmul.f32 %v1729, %v1728
        %v1731 = vmul.f32 0.5, %v1730
        %v1732 = vsub.f32 1.5, %v1731
        %v1733 = vmul.f32 %v1728, %v1732
        %v1734 = vmul.f32 %v1711, %v1733
        %vm1735 = vcmp.eq.f32.partialorder %v1711, inf
        %v1736 = vsel %vm1735, %v1711, %v1734
        %vm1737 = vcmp.eq.f32.partialorder %v1711, 0.0
        %v1738 = vand.u32 %v1711, 2147483648
        %v1739 = vsel %vm1737, %v1738, %v1736
        %v1740 = vrsqrt.pop %v1668
        %v1741 = vmul.f32 %v1740, %v1668
        %v1742 = vmul.f32 %v1741, %v1740
        %v1743 = vmul.f32 0.5, %v1742
        %v1744 = vsub.f32 1.5, %v1743
        %v1745 = vmul.f32 %v1740, %v1744
        %v1746 = vmul.f32 %v1668, %v1745
        %vm1747 = vcmp.eq.f32.partialorder %v1668, inf
        %v1748 = vsel %vm1747, %v1668, %v1746
        %vm1749 = vcmp.eq.f32.partialorder %v1668, 0.0
        %v1750 = vand.u32 %v1668, 2147483648
        %v1751 = vsel %vm1749, %v1750, %v1748
        %v1752 = vrsqrt.pop %v1714
        %v1753 = vmul.f32 %v1752, %v1714
        %v1754 = vmul.f32 %v1753, %v1752
        %v1755 = vmul.f32 0.5, %v1754
        %v1756 = vsub.f32 1.5, %v1755
        %v1757 = vmul.f32 %v1752, %v1756
        %v1758 = vmul.f32 %v1714, %v1757
        %vm1759 = vcmp.eq.f32.partialorder %v1714, inf
        %v1760 = vsel %vm1759, %v1714, %v1758
        %vm1761 = vcmp.eq.f32.partialorder %v1714, 0.0
        %v1762 = vand.u32 %v1714, 2147483648
        %v1763 = vsel %vm1761, %v1762, %v1760
        %v1764 = vadd.f32 %v1727, 1e-10
        %v1765 = vadd.f32 %v1739, 1e-10
        %v1766 = vadd.f32 %v1751, 1e-10
        %v1767 = vadd.f32 %v1763, 1e-10
        %v1768 = vrcp.pop %v1764
        %v1769 = vrcp.pop %v1765
        %v1770 = vrcp.pop %v1766
        %v1771 = vrcp.pop %v1767
        %v1772 = vmul.f32 %v1552, %v1768
        %v1773 = vmul.f32 %v1553, %v1769
        %v1774 = vmul.f32 %v1554, %v1770
        %v1775 = vmul.f32 %v1555, %v1771
        %v1776 = vld [vmem:[%s15] sm:$0x3]
        %v1778 = vperm.slane %v1776, 0
        %v1779 = vperm.slane %v1776, 1
        %v1782 = vmul.f32 %v1772, %v1778
        %v1783 = vmul.f32 %v1773, %v1779
        %v1784 = vmul.f32 %v1774, %v1778
        %v1785 = vmul.f32 %v1775, %v1779
        %1786 = vst [vmem:[%s797] sm:$0xff] %v1782
        %1787 = vst [vmem:[%s797 + $0x8] sm:$0xff] %v1783
        %1788 = vst [vmem:[%s797 + $0x10] sm:$0xff] %v1784
        %1789 = vst [vmem:[%s797 + $0x18] sm:$0xff] %v1785
        %1790 = vmatpush.msra.mxu0 0.0
        %1791 = vmatpush.msra.mxu0 0.0
        %1792 = vmatpush.msra.mxu0 0.0
        %1793 = vmatpush.msra.mxu0 0.0
        %1794 = vmatpush.msra.mxu0 0.0
        %1795 = vmatpush.msra.mxu0 0.0
        %1796 = vmatpush.msra.mxu0 0.0
        %1797 = vmatpush.msra.mxu0 0.0
        %1798 = vmatpush.msra.mxu0 0.0
        %1799 = vmatpush.msra.mxu0 0.0
        %1800 = vmatpush.msra.mxu0 0.0
        %1801 = vmatpush.msra.mxu0 0.0
        %1802 = vmatpush.msra.mxu0 0.0
        %1803 = vmatpush.msra.mxu0 0.0
        %1804 = vmatpush.msra.mxu0 %v1554
        %1805 = vmatpush.msra.mxu0 %v1552
        %1806 = vmatmul.f32.gmra.mxu0 %v821
        %v1807 = vpop.f32.mrf.mxu0
        %v1808 = vadd.f32 0.0, %v1807
        %1809 = vmatmul.f32.gmra.mxu0 %v824
        %v1810 = vpop.f32.mrf.mxu0
        %v1811 = vadd.f32 0.0, %v1810
        %1812 = vdwg.mxu0
        %1813 = vmatpush.msra.mxu0 0.0
        %1814 = vmatpush.msra.mxu0 0.0
        %1815 = vmatpush.msra.mxu0 0.0
        %1816 = vmatpush.msra.mxu0 0.0
        %1817 = vmatpush.msra.mxu0 0.0
        %1818 = vmatpush.msra.mxu0 0.0
        %1819 = vmatpush.msra.mxu0 0.0
        %1820 = vmatpush.msra.mxu0 0.0
        %1821 = vmatpush.msra.mxu0 0.0
        %1822 = vmatpush.msra.mxu0 0.0
        %1823 = vmatpush.msra.mxu0 0.0
        %1824 = vmatpush.msra.mxu0 0.0
        %1825 = vmatpush.msra.mxu0 0.0
        %1826 = vmatpush.msra.mxu0 0.0
        %1827 = vmatpush.msra.mxu0 %v1555
        %1828 = vmatpush.msra.mxu0 %v1553
        %1829 = vmatmul.f32.gmra.mxu0 %v821
        %v1830 = vpop.f32.mrf.mxu0
        %v1831 = vadd.f32 0.0, %v1830
        %1832 = vmatmul.f32.gmra.mxu0 %v824
        %v1833 = vpop.f32.mrf.mxu0
        %v1834 = vadd.f32 0.0, %v1833
        %1835 = vdwg.mxu0
        %1836 = vmatpush.msra.mxu0 0.0
        %1837 = vmatpush.msra.mxu0 0.0
        %1838 = vmatpush.msra.mxu0 0.0
        %1839 = vmatpush.msra.mxu0 0.0
        %1840 = vmatpush.msra.mxu0 0.0
        %1841 = vmatpush.msra.mxu0 0.0
        %1842 = vmatpush.msra.mxu0 0.0
        %1843 = vmatpush.msra.mxu0 0.0
        %1844 = vmatpush.msra.mxu0 0.0
        %1845 = vmatpush.msra.mxu0 0.0
        %1846 = vmatpush.msra.mxu0 0.0
        %1847 = vmatpush.msra.mxu0 0.0
        %1848 = vmatpush.msra.mxu0 0.0
        %1849 = vmatpush.msra.mxu0 0.0
        %1850 = vmatpush.msra.mxu0 %v1554
        %1851 = vmatpush.msra.mxu0 %v1552
        %1852 = vmatmul.f32.gmra.mxu0 %v850
        %v1853 = vpop.f32.mrf.mxu0
        %v1854 = vadd.f32 0.0, %v1853
        %1855 = vmatmul.f32.gmra.mxu0 %v853
        %v1856 = vpop.f32.mrf.mxu0
        %v1857 = vadd.f32 0.0, %v1856
        %1858 = vdwg.mxu0
        %1859 = vmatpush.msra.mxu0 0.0
        %1860 = vmatpush.msra.mxu0 0.0
        %1861 = vmatpush.msra.mxu0 0.0
        %1862 = vmatpush.msra.mxu0 0.0
        %1863 = vmatpush.msra.mxu0 0.0
        %1864 = vmatpush.msra.mxu0 0.0
        %1865 = vmatpush.msra.mxu0 0.0
        %1866 = vmatpush.msra.mxu0 0.0
        %1867 = vmatpush.msra.mxu0 0.0
        %1868 = vmatpush.msra.mxu0 0.0
        %1869 = vmatpush.msra.mxu0 0.0
        %1870 = vmatpush.msra.mxu0 0.0
        %1871 = vmatpush.msra.mxu0 0.0
        %1872 = vmatpush.msra.mxu0 0.0
        %1873 = vmatpush.msra.mxu0 %v1555
        %1874 = vmatpush.msra.mxu0 %v1553
        %1875 = vmatmul.f32.gmra.mxu0 %v850
        %v1876 = vpop.f32.mrf.mxu0
        %v1877 = vadd.f32 0.0, %v1876
        %1878 = vmatmul.f32.gmra.mxu0 %v853
        %v1879 = vpop.f32.mrf.mxu0
        %v1880 = vadd.f32 0.0, %v1879
        %1881 = vdwg.mxu0
        %v1882 = vld [vmem:[#allocation14] sm:$0xff]
        %v1883 = vld [vmem:[#allocation14 + $0x8] sm:$0xff]
        %v1884 = vld [vmem:[#allocation14 + $0x10] sm:$0xff]
        %v1885 = vld [vmem:[#allocation14 + $0x18] sm:$0xff]
        %v1886 = vld [vmem:[#allocation14 + $0x20] sm:$0xff]
        %v1887 = vld [vmem:[#allocation14 + $0x28] sm:$0xff]
        %v1888 = vld [vmem:[#allocation14 + $0x30] sm:$0xff]
        %v1889 = vld [vmem:[#allocation14 + $0x38] sm:$0xff]
        %v1890 = vld [vmem:[#allocation14 + $0x40] sm:$0xff]
        %v1891 = vld [vmem:[#allocation14 + $0x48] sm:$0xff]
        %v1892 = vld [vmem:[#allocation14 + $0x50] sm:$0xff]
        %v1893 = vld [vmem:[#allocation14 + $0x58] sm:$0xff]
        %v1894 = vld [vmem:[#allocation14 + $0x60] sm:$0xff]
        %v1895 = vld [vmem:[#allocation14 + $0x68] sm:$0xff]
        %v1896 = vld [vmem:[#allocation14 + $0x70] sm:$0xff]
        %v1897 = vld [vmem:[#allocation14 + $0x78] sm:$0xff]
        %v1898 = vld [vmem:[#allocation14 + $0x80] sm:$0xff]
        %v1899 = vld [vmem:[#allocation14 + $0x88] sm:$0xff]
        %v1900 = vld [vmem:[#allocation14 + $0x90] sm:$0xff]
        %v1901 = vld [vmem:[#allocation14 + $0x98] sm:$0xff]
        %v1902 = vld [vmem:[#allocation14 + $0xa0] sm:$0xff]
        %v1903 = vld [vmem:[#allocation14 + $0xa8] sm:$0xff]
        %v1904 = vld [vmem:[#allocation14 + $0xb0] sm:$0xff]
        %v1905 = vld [vmem:[#allocation14 + $0xb8] sm:$0xff]
        %v1906 = vld [vmem:[#allocation14 + $0xc0] sm:$0xff]
        %v1907 = vld [vmem:[#allocation14 + $0xc8] sm:$0xff]
        %v1908 = vld [vmem:[#allocation14 + $0xd0] sm:$0xff]
        %v1909 = vld [vmem:[#allocation14 + $0xd8] sm:$0xff]
        %v1910 = vld [vmem:[#allocation14 + $0xe0] sm:$0xff]
        %v1911 = vld [vmem:[#allocation14 + $0xe8] sm:$0xff]
        %v1912 = vld [vmem:[#allocation14 + $0xf0] sm:$0xff]
        %v1913 = vld [vmem:[#allocation14 + $0xf8] sm:$0xff]
        %v1914 = vld [vmem:[#allocation14 + $0x100] sm:$0xff]
        %v1915 = vld [vmem:[#allocation14 + $0x108] sm:$0xff]
        %v1916 = vld [vmem:[#allocation14 + $0x110] sm:$0xff]
        %v1917 = vld [vmem:[#allocation14 + $0x118] sm:$0xff]
        %v1918 = vld [vmem:[#allocation14 + $0x120] sm:$0xff]
        %v1919 = vld [vmem:[#allocation14 + $0x128] sm:$0xff]
        %v1920 = vld [vmem:[#allocation14 + $0x130] sm:$0xff]
        %v1921 = vld [vmem:[#allocation14 + $0x138] sm:$0xff]
        %v1922 = vld [vmem:[#allocation14 + $0x140] sm:$0xff]
        %v1923 = vld [vmem:[#allocation14 + $0x148] sm:$0xff]
        %v1924 = vld [vmem:[#allocation14 + $0x150] sm:$0xff]
        %v1925 = vld [vmem:[#allocation14 + $0x158] sm:$0xff]
        %v1926 = vld [vmem:[#allocation14 + $0x160] sm:$0xff]
        %v1927 = vld [vmem:[#allocation14 + $0x168] sm:$0xff]
        %v1928 = vld [vmem:[#allocation14 + $0x170] sm:$0xff]
        %v1929 = vld [vmem:[#allocation14 + $0x178] sm:$0xff]
        %v1930 = vld [vmem:[#allocation14 + $0x180] sm:$0xff]
        %v1931 = vld [vmem:[#allocation14 + $0x188] sm:$0xff]
        %v1932 = vld [vmem:[#allocation14 + $0x190] sm:$0xff]
        %v1933 = vld [vmem:[#allocation14 + $0x198] sm:$0xff]
        %v1934 = vld [vmem:[#allocation14 + $0x1a0] sm:$0xff]
        %v1935 = vld [vmem:[#allocation14 + $0x1a8] sm:$0xff]
        %v1936 = vld [vmem:[#allocation14 + $0x1b0] sm:$0xff]
        %v1937 = vld [vmem:[#allocation14 + $0x1b8] sm:$0xff]
        %v1938 = vld [vmem:[#allocation14 + $0x1c0] sm:$0xff]
        %v1939 = vld [vmem:[#allocation14 + $0x1c8] sm:$0xff]
        %v1940 = vld [vmem:[#allocation14 + $0x1d0] sm:$0xff]
        %v1941 = vld [vmem:[#allocation14 + $0x1d8] sm:$0xff]
        %v1942 = vld [vmem:[#allocation14 + $0x1e0] sm:$0xff]
        %v1943 = vld [vmem:[#allocation14 + $0x1e8] sm:$0xff]
        %v1944 = vld [vmem:[#allocation14 + $0x1f0] sm:$0xff]
        %v1945 = vld [vmem:[#allocation14 + $0x1f8] sm:$0xff]
        %s1946 = scalar_lea.vmem [#allocation14], 512
        %v1947 = vld [vmem:[%s1946] sm:$0xff]
        %v1948 = vld [vmem:[%s1946 + $0x8] sm:$0xff]
        %v1949 = vld [vmem:[%s1946 + $0x10] sm:$0xff]
        %v1950 = vld [vmem:[%s1946 + $0x18] sm:$0xff]
        %v1951 = vld [vmem:[%s1946 + $0x20] sm:$0xff]
        %v1952 = vld [vmem:[%s1946 + $0x28] sm:$0xff]
        %v1953 = vld [vmem:[%s1946 + $0x30] sm:$0xff]
        %v1954 = vld [vmem:[%s1946 + $0x38] sm:$0xff]
        %v1955 = vld [vmem:[%s1946 + $0x40] sm:$0xff]
        %v1956 = vld [vmem:[%s1946 + $0x48] sm:$0xff]
        %v1957 = vld [vmem:[%s1946 + $0x50] sm:$0xff]
        %v1958 = vld [vmem:[%s1946 + $0x58] sm:$0xff]
        %v1959 = vld [vmem:[%s1946 + $0x60] sm:$0xff]
        %v1960 = vld [vmem:[%s1946 + $0x68] sm:$0xff]
        %v1961 = vld [vmem:[%s1946 + $0x70] sm:$0xff]
        %v1962 = vld [vmem:[%s1946 + $0x78] sm:$0xff]
        %v1963 = vld [vmem:[%s1946 + $0x80] sm:$0xff]
        %v1964 = vld [vmem:[%s1946 + $0x88] sm:$0xff]
        %v1965 = vld [vmem:[%s1946 + $0x90] sm:$0xff]
        %v1966 = vld [vmem:[%s1946 + $0x98] sm:$0xff]
        %v1967 = vld [vmem:[%s1946 + $0xa0] sm:$0xff]
        %v1968 = vld [vmem:[%s1946 + $0xa8] sm:$0xff]
        %v1969 = vld [vmem:[%s1946 + $0xb0] sm:$0xff]
        %v1970 = vld [vmem:[%s1946 + $0xb8] sm:$0xff]
        %v1971 = vld [vmem:[%s1946 + $0xc0] sm:$0xff]
        %v1972 = vld [vmem:[%s1946 + $0xc8] sm:$0xff]
        %v1973 = vld [vmem:[%s1946 + $0xd0] sm:$0xff]
        %v1974 = vld [vmem:[%s1946 + $0xd8] sm:$0xff]
        %v1975 = vld [vmem:[%s1946 + $0xe0] sm:$0xff]
        %v1976 = vld [vmem:[%s1946 + $0xe8] sm:$0xff]
        %v1977 = vld [vmem:[%s1946 + $0xf0] sm:$0xff]
        %v1978 = vld [vmem:[%s1946 + $0xf8] sm:$0xff]
        %v1979 = vld [vmem:[%s1946 + $0x100] sm:$0xff]
        %v1980 = vld [vmem:[%s1946 + $0x108] sm:$0xff]
        %v1981 = vld [vmem:[%s1946 + $0x110] sm:$0xff]
        %v1982 = vld [vmem:[%s1946 + $0x118] sm:$0xff]
        %v1983 = vld [vmem:[%s1946 + $0x120] sm:$0xff]
        %v1984 = vld [vmem:[%s1946 + $0x128] sm:$0xff]
        %v1985 = vld [vmem:[%s1946 + $0x130] sm:$0xff]
        %v1986 = vld [vmem:[%s1946 + $0x138] sm:$0xff]
        %v1987 = vld [vmem:[%s1946 + $0x140] sm:$0xff]
        %v1988 = vld [vmem:[%s1946 + $0x148] sm:$0xff]
        %v1989 = vld [vmem:[%s1946 + $0x150] sm:$0xff]
        %v1990 = vld [vmem:[%s1946 + $0x158] sm:$0xff]
        %v1991 = vld [vmem:[%s1946 + $0x160] sm:$0xff]
        %v1992 = vld [vmem:[%s1946 + $0x168] sm:$0xff]
        %v1993 = vld [vmem:[%s1946 + $0x170] sm:$0xff]
        %v1994 = vld [vmem:[%s1946 + $0x178] sm:$0xff]
        %v1995 = vld [vmem:[%s1946 + $0x180] sm:$0xff]
        %v1996 = vld [vmem:[%s1946 + $0x188] sm:$0xff]
        %v1997 = vld [vmem:[%s1946 + $0x190] sm:$0xff]
        %v1998 = vld [vmem:[%s1946 + $0x198] sm:$0xff]
        %v1999 = vld [vmem:[%s1946 + $0x1a0] sm:$0xff]
        %v2000 = vld [vmem:[%s1946 + $0x1a8] sm:$0xff]
        %v2001 = vld [vmem:[%s1946 + $0x1b0] sm:$0xff]
        %v2002 = vld [vmem:[%s1946 + $0x1b8] sm:$0xff]
        %v2003 = vld [vmem:[%s1946 + $0x1c0] sm:$0xff]
        %v2004 = vld [vmem:[%s1946 + $0x1c8] sm:$0xff]
        %v2005 = vld [vmem:[%s1946 + $0x1d0] sm:$0xff]
        %v2006 = vld [vmem:[%s1946 + $0x1d8] sm:$0xff]
        %v2007 = vld [vmem:[%s1946 + $0x1e0] sm:$0xff]
        %v2008 = vld [vmem:[%s1946 + $0x1e8] sm:$0xff]
        %v2009 = vld [vmem:[%s1946 + $0x1f0] sm:$0xff]
        %v2010 = vld [vmem:[%s1946 + $0x1f8] sm:$0xff]
        %2011 = vmatpush.msra.mxu0 %v1977
        %2012 = vmatpush.msra.mxu0 %v1975
        %2013 = vmatpush.msra.mxu0 %v1973
        %2014 = vmatpush.msra.mxu0 %v1971
        %2015 = vmatpush.msra.mxu0 %v1969
        %2016 = vmatpush.msra.mxu0 %v1967
        %2017 = vmatpush.msra.mxu0 %v1965
        %2018 = vmatpush.msra.mxu0 %v1963
        %2019 = vmatpush.msra.mxu0 %v1961
        %2020 = vmatpush.msra.mxu0 %v1959
        %2021 = vmatpush.msra.mxu0 %v1957
        %2022 = vmatpush.msra.mxu0 %v1955
        %2023 = vmatpush.msra.mxu0 %v1953
        %2024 = vmatpush.msra.mxu0 %v1951
        %2025 = vmatpush.msra.mxu0 %v1949
        %2026 = vmatpush.msra.mxu0 %v1947
        %2027 = vmatmul.f32.gmra.mxu0 %v1552
        %v2028 = vpop.f32.mrf.mxu0
        %v2029 = vadd.f32 0.0, %v2028
        %2030 = vmatmul.f32.gmra.mxu0 %v1554
        %v2031 = vpop.f32.mrf.mxu0
        %v2032 = vadd.f32 0.0, %v2031
        %2033 = vdwg.mxu0
        %2034 = vmatpush.msra.mxu0 %v2009
        %2035 = vmatpush.msra.mxu0 %v2007
        %2036 = vmatpush.msra.mxu0 %v2005
        %2037 = vmatpush.msra.mxu0 %v2003
        %2038 = vmatpush.msra.mxu0 %v2001
        %2039 = vmatpush.msra.mxu0 %v1999
        %2040 = vmatpush.msra.mxu0 %v1997
        %2041 = vmatpush.msra.mxu0 %v1995
        %2042 = vmatpush.msra.mxu0 %v1993
        %2043 = vmatpush.msra.mxu0 %v1991
        %2044 = vmatpush.msra.mxu0 %v1989
        %2045 = vmatpush.msra.mxu0 %v1987
        %2046 = vmatpush.msra.mxu0 %v1985
        %2047 = vmatpush.msra.mxu0 %v1983
        %2048 = vmatpush.msra.mxu0 %v1981
        %2049 = vmatpush.msra.mxu0 %v1979
        %2050 = vmatmul.f32.gmra.mxu0 %v1553
        %v2051 = vpop.f32.mrf.mxu0
        %v2052 = vadd.f32 %v2029, %v2051
        %2053 = vmatmul.f32.gmra.mxu0 %v1555
        %v2054 = vpop.f32.mrf.mxu0
        %v2055 = vadd.f32 %v2032, %v2054
        %2056 = vdwg.mxu0
        %2057 = vmatpush.msra.mxu0 %v1978
        %2058 = vmatpush.msra.mxu0 %v1976
        %2059 = vmatpush.msra.mxu0 %v1974
        %2060 = vmatpush.msra.mxu0 %v1972
        %2061 = vmatpush.msra.mxu0 %v1970
        %2062 = vmatpush.msra.mxu0 %v1968
        %2063 = vmatpush.msra.mxu0 %v1966
        %2064 = vmatpush.msra.mxu0 %v1964
        %2065 = vmatpush.msra.mxu0 %v1962
        %2066 = vmatpush.msra.mxu0 %v1960
        %2067 = vmatpush.msra.mxu0 %v1958
        %2068 = vmatpush.msra.mxu0 %v1956
        %2069 = vmatpush.msra.mxu0 %v1954
        %2070 = vmatpush.msra.mxu0 %v1952
        %2071 = vmatpush.msra.mxu0 %v1950
        %2072 = vmatpush.msra.mxu0 %v1948
        %2073 = vmatmul.f32.gmra.mxu0 %v1552
        %v2074 = vpop.f32.mrf.mxu0
        %v2075 = vadd.f32 0.0, %v2074
        %2076 = vmatmul.f32.gmra.mxu0 %v1554
        %v2077 = vpop.f32.mrf.mxu0
        %v2078 = vadd.f32 0.0, %v2077
        %2079 = vdwg.mxu0
        %2080 = vmatpush.msra.mxu0 %v2010
        %2081 = vmatpush.msra.mxu0 %v2008
        %2082 = vmatpush.msra.mxu0 %v2006
        %2083 = vmatpush.msra.mxu0 %v2004
        %2084 = vmatpush.msra.mxu0 %v2002
        %2085 = vmatpush.msra.mxu0 %v2000
        %2086 = vmatpush.msra.mxu0 %v1998
        %2087 = vmatpush.msra.mxu0 %v1996
        %2088 = vmatpush.msra.mxu0 %v1994
        %2089 = vmatpush.msra.mxu0 %v1992
        %2090 = vmatpush.msra.mxu0 %v1990
        %2091 = vmatpush.msra.mxu0 %v1988
        %2092 = vmatpush.msra.mxu0 %v1986
        %2093 = vmatpush.msra.mxu0 %v1984
        %2094 = vmatpush.msra.mxu0 %v1982
        %2095 = vmatpush.msra.mxu0 %v1980
        %2096 = vmatmul.f32.gmra.mxu0 %v1553
        %v2097 = vpop.f32.mrf.mxu0
        %v2098 = vadd.f32 %v2075, %v2097
        %2099 = vmatmul.f32.gmra.mxu0 %v1555
        %v2100 = vpop.f32.mrf.mxu0
        %v2101 = vadd.f32 %v2078, %v2100
        %2102 = vdwg.mxu0
        %2103 = vmatpush.msra.mxu0 %v1912
        %2104 = vmatpush.msra.mxu0 %v1910
        %2105 = vmatpush.msra.mxu0 %v1908
        %2106 = vmatpush.msra.mxu0 %v1906
        %2107 = vmatpush.msra.mxu0 %v1904
        %2108 = vmatpush.msra.mxu0 %v1902
        %2109 = vmatpush.msra.mxu0 %v1900
        %2110 = vmatpush.msra.mxu0 %v1898
        %2111 = vmatpush.msra.mxu0 %v1896
        %2112 = vmatpush.msra.mxu0 %v1894
        %2113 = vmatpush.msra.mxu0 %v1892
        %2114 = vmatpush.msra.mxu0 %v1890
        %2115 = vmatpush.msra.mxu0 %v1888
        %2116 = vmatpush.msra.mxu0 %v1886
        %2117 = vmatpush.msra.mxu0 %v1884
        %2118 = vmatpush.msra.mxu0 %v1882
        %2119 = vmatmul.f32.gmra.mxu0 %v1808
        %v2120 = vpop.f32.mrf.mxu0
        %v2121 = vadd.f32 %v2052, %v2120
        %2122 = vmatmul.f32.gmra.mxu0 %v1811
        %v2123 = vpop.f32.mrf.mxu0
        %v2124 = vadd.f32 %v2055, %v2123
        %2125 = vdwg.mxu0
        %2126 = vmatpush.msra.mxu0 %v1944
        %2127 = vmatpush.msra.mxu0 %v1942
        %2128 = vmatpush.msra.mxu0 %v1940
        %2129 = vmatpush.msra.mxu0 %v1938
        %2130 = vmatpush.msra.mxu0 %v1936
        %2131 = vmatpush.msra.mxu0 %v1934
        %2132 = vmatpush.msra.mxu0 %v1932
        %2133 = vmatpush.msra.mxu0 %v1930
        %2134 = vmatpush.msra.mxu0 %v1928
        %2135 = vmatpush.msra.mxu0 %v1926
        %2136 = vmatpush.msra.mxu0 %v1924
        %2137 = vmatpush.msra.mxu0 %v1922
        %2138 = vmatpush.msra.mxu0 %v1920
        %2139 = vmatpush.msra.mxu0 %v1918
        %2140 = vmatpush.msra.mxu0 %v1916
        %2141 = vmatpush.msra.mxu0 %v1914
        %2142 = vmatmul.f32.gmra.mxu0 %v1831
        %v2143 = vpop.f32.mrf.mxu0
        %v2144 = vadd.f32 %v2121, %v2143
        %2145 = vmatmul.f32.gmra.mxu0 %v1834
        %v2146 = vpop.f32.mrf.mxu0
        %v2147 = vadd.f32 %v2124, %v2146
        %2148 = vdwg.mxu0
        %2149 = vmatpush.msra.mxu0 %v1913
        %2150 = vmatpush.msra.mxu0 %v1911
        %2151 = vmatpush.msra.mxu0 %v1909
        %2152 = vmatpush.msra.mxu0 %v1907
        %2153 = vmatpush.msra.mxu0 %v1905
        %2154 = vmatpush.msra.mxu0 %v1903
        %2155 = vmatpush.msra.mxu0 %v1901
        %2156 = vmatpush.msra.mxu0 %v1899
        %2157 = vmatpush.msra.mxu0 %v1897
        %2158 = vmatpush.msra.mxu0 %v1895
        %2159 = vmatpush.msra.mxu0 %v1893
        %2160 = vmatpush.msra.mxu0 %v1891
        %2161 = vmatpush.msra.mxu0 %v1889
        %2162 = vmatpush.msra.mxu0 %v1887
        %2163 = vmatpush.msra.mxu0 %v1885
        %2164 = vmatpush.msra.mxu0 %v1883
        %2165 = vmatmul.f32.gmra.mxu0 %v1808
        %v2166 = vpop.f32.mrf.mxu0
        %v2167 = vadd.f32 %v2098, %v2166
        %2168 = vmatmul.f32.gmra.mxu0 %v1811
        %v2169 = vpop.f32.mrf.mxu0
        %v2170 = vadd.f32 %v2101, %v2169
        %2171 = vdwg.mxu0
        %2172 = vmatpush.msra.mxu0 %v1945
        %2173 = vmatpush.msra.mxu0 %v1943
        %2174 = vmatpush.msra.mxu0 %v1941
        %2175 = vmatpush.msra.mxu0 %v1939
        %2176 = vmatpush.msra.mxu0 %v1937
        %2177 = vmatpush.msra.mxu0 %v1935
        %2178 = vmatpush.msra.mxu0 %v1933
        %2179 = vmatpush.msra.mxu0 %v1931
        %2180 = vmatpush.msra.mxu0 %v1929
        %2181 = vmatpush.msra.mxu0 %v1927
        %2182 = vmatpush.msra.mxu0 %v1925
        %2183 = vmatpush.msra.mxu0 %v1923
        %2184 = vmatpush.msra.mxu0 %v1921
        %2185 = vmatpush.msra.mxu0 %v1919
        %2186 = vmatpush.msra.mxu0 %v1917
        %2187 = vmatpush.msra.mxu0 %v1915
        %2188 = vmatmul.f32.gmra.mxu0 %v1831
        %v2189 = vpop.f32.mrf.mxu0
        %v2190 = vadd.f32 %v2167, %v2189
        %2191 = vmatmul.f32.gmra.mxu0 %v1834
        %v2192 = vpop.f32.mrf.mxu0
        %v2193 = vadd.f32 %v2170, %v2192
        %2194 = vdwg.mxu0
        %s2195 = scalar_lea.vmem [#allocation14], 1024
        %v2196 = vld [vmem:[%s2195] sm:$0xff]
        %v2197 = vld [vmem:[%s2195 + $0x8] sm:$0xff]
        %v2198 = vld [vmem:[%s2195 + $0x10] sm:$0xff]
        %v2199 = vld [vmem:[%s2195 + $0x18] sm:$0xff]
        %v2200 = vld [vmem:[%s2195 + $0x20] sm:$0xff]
        %v2201 = vld [vmem:[%s2195 + $0x28] sm:$0xff]
        %v2202 = vld [vmem:[%s2195 + $0x30] sm:$0xff]
        %v2203 = vld [vmem:[%s2195 + $0x38] sm:$0xff]
        %v2204 = vld [vmem:[%s2195 + $0x40] sm:$0xff]
        %v2205 = vld [vmem:[%s2195 + $0x48] sm:$0xff]
        %v2206 = vld [vmem:[%s2195 + $0x50] sm:$0xff]
        %v2207 = vld [vmem:[%s2195 + $0x58] sm:$0xff]
        %v2208 = vld [vmem:[%s2195 + $0x60] sm:$0xff]
        %v2209 = vld [vmem:[%s2195 + $0x68] sm:$0xff]
        %v2210 = vld [vmem:[%s2195 + $0x70] sm:$0xff]
        %v2211 = vld [vmem:[%s2195 + $0x78] sm:$0xff]
        %v2212 = vld [vmem:[%s2195 + $0x80] sm:$0xff]
        %v2213 = vld [vmem:[%s2195 + $0x88] sm:$0xff]
        %v2214 = vld [vmem:[%s2195 + $0x90] sm:$0xff]
        %v2215 = vld [vmem:[%s2195 + $0x98] sm:$0xff]
        %v2216 = vld [vmem:[%s2195 + $0xa0] sm:$0xff]
        %v2217 = vld [vmem:[%s2195 + $0xa8] sm:$0xff]
        %v2218 = vld [vmem:[%s2195 + $0xb0] sm:$0xff]
        %v2219 = vld [vmem:[%s2195 + $0xb8] sm:$0xff]
        %v2220 = vld [vmem:[%s2195 + $0xc0] sm:$0xff]
        %v2221 = vld [vmem:[%s2195 + $0xc8] sm:$0xff]
        %v2222 = vld [vmem:[%s2195 + $0xd0] sm:$0xff]
        %v2223 = vld [vmem:[%s2195 + $0xd8] sm:$0xff]
        %v2224 = vld [vmem:[%s2195 + $0xe0] sm:$0xff]
        %v2225 = vld [vmem:[%s2195 + $0xe8] sm:$0xff]
        %v2226 = vld [vmem:[%s2195 + $0xf0] sm:$0xff]
        %v2227 = vld [vmem:[%s2195 + $0xf8] sm:$0xff]
        %v2228 = vld [vmem:[%s2195 + $0x100] sm:$0xff]
        %v2229 = vld [vmem:[%s2195 + $0x108] sm:$0xff]
        %v2230 = vld [vmem:[%s2195 + $0x110] sm:$0xff]
        %v2231 = vld [vmem:[%s2195 + $0x118] sm:$0xff]
        %v2232 = vld [vmem:[%s2195 + $0x120] sm:$0xff]
        %v2233 = vld [vmem:[%s2195 + $0x128] sm:$0xff]
        %v2234 = vld [vmem:[%s2195 + $0x130] sm:$0xff]
        %v2235 = vld [vmem:[%s2195 + $0x138] sm:$0xff]
        %v2236 = vld [vmem:[%s2195 + $0x140] sm:$0xff]
        %v2237 = vld [vmem:[%s2195 + $0x148] sm:$0xff]
        %v2238 = vld [vmem:[%s2195 + $0x150] sm:$0xff]
        %v2239 = vld [vmem:[%s2195 + $0x158] sm:$0xff]
        %v2240 = vld [vmem:[%s2195 + $0x160] sm:$0xff]
        %v2241 = vld [vmem:[%s2195 + $0x168] sm:$0xff]
        %v2242 = vld [vmem:[%s2195 + $0x170] sm:$0xff]
        %v2243 = vld [vmem:[%s2195 + $0x178] sm:$0xff]
        %v2244 = vld [vmem:[%s2195 + $0x180] sm:$0xff]
        %v2245 = vld [vmem:[%s2195 + $0x188] sm:$0xff]
        %v2246 = vld [vmem:[%s2195 + $0x190] sm:$0xff]
        %v2247 = vld [vmem:[%s2195 + $0x198] sm:$0xff]
        %v2248 = vld [vmem:[%s2195 + $0x1a0] sm:$0xff]
        %v2249 = vld [vmem:[%s2195 + $0x1a8] sm:$0xff]
        %v2250 = vld [vmem:[%s2195 + $0x1b0] sm:$0xff]
        %v2251 = vld [vmem:[%s2195 + $0x1b8] sm:$0xff]
        %v2252 = vld [vmem:[%s2195 + $0x1c0] sm:$0xff]
        %v2253 = vld [vmem:[%s2195 + $0x1c8] sm:$0xff]
        %v2254 = vld [vmem:[%s2195 + $0x1d0] sm:$0xff]
        %v2255 = vld [vmem:[%s2195 + $0x1d8] sm:$0xff]
        %v2256 = vld [vmem:[%s2195 + $0x1e0] sm:$0xff]
        %v2257 = vld [vmem:[%s2195 + $0x1e8] sm:$0xff]
        %v2258 = vld [vmem:[%s2195 + $0x1f0] sm:$0xff]
        %v2259 = vld [vmem:[%s2195 + $0x1f8] sm:$0xff]
        %2260 = vmatpush.msra.mxu0 %v2226
        %2261 = vmatpush.msra.mxu0 %v2224
        %2262 = vmatpush.msra.mxu0 %v2222
        %2263 = vmatpush.msra.mxu0 %v2220
        %2264 = vmatpush.msra.mxu0 %v2218
        %2265 = vmatpush.msra.mxu0 %v2216
        %2266 = vmatpush.msra.mxu0 %v2214
        %2267 = vmatpush.msra.mxu0 %v2212
        %2268 = vmatpush.msra.mxu0 %v2210
        %2269 = vmatpush.msra.mxu0 %v2208
        %2270 = vmatpush.msra.mxu0 %v2206
        %2271 = vmatpush.msra.mxu0 %v2204
        %2272 = vmatpush.msra.mxu0 %v2202
        %2273 = vmatpush.msra.mxu0 %v2200
        %2274 = vmatpush.msra.mxu0 %v2198
        %2275 = vmatpush.msra.mxu0 %v2196
        %2276 = vmatmul.f32.gmra.mxu0 %v1854
        %v2277 = vpop.f32.mrf.mxu0
        %v2278 = vadd.f32 0.0, %v2277
        %2279 = vmatmul.f32.gmra.mxu0 %v1857
        %v2280 = vpop.f32.mrf.mxu0
        %v2281 = vadd.f32 0.0, %v2280
        %2282 = vdwg.mxu0
        %2283 = vmatpush.msra.mxu0 %v2258
        %2284 = vmatpush.msra.mxu0 %v2256
        %2285 = vmatpush.msra.mxu0 %v2254
        %2286 = vmatpush.msra.mxu0 %v2252
        %2287 = vmatpush.msra.mxu0 %v2250
        %2288 = vmatpush.msra.mxu0 %v2248
        %2289 = vmatpush.msra.mxu0 %v2246
        %2290 = vmatpush.msra.mxu0 %v2244
        %2291 = vmatpush.msra.mxu0 %v2242
        %2292 = vmatpush.msra.mxu0 %v2240
        %2293 = vmatpush.msra.mxu0 %v2238
        %2294 = vmatpush.msra.mxu0 %v2236
        %2295 = vmatpush.msra.mxu0 %v2234
        %2296 = vmatpush.msra.mxu0 %v2232
        %2297 = vmatpush.msra.mxu0 %v2230
        %2298 = vmatpush.msra.mxu0 %v2228
        %2299 = vmatmul.f32.gmra.mxu0 %v1877
        %v2300 = vpop.f32.mrf.mxu0
        %v2301 = vadd.f32 %v2278, %v2300
        %2302 = vmatmul.f32.gmra.mxu0 %v1880
        %v2303 = vpop.f32.mrf.mxu0
        %v2304 = vadd.f32 %v2281, %v2303
        %2305 = vdwg.mxu0
        %2306 = vmatpush.msra.mxu0 %v2227
        %2307 = vmatpush.msra.mxu0 %v2225
        %2308 = vmatpush.msra.mxu0 %v2223
        %2309 = vmatpush.msra.mxu0 %v2221
        %2310 = vmatpush.msra.mxu0 %v2219
        %2311 = vmatpush.msra.mxu0 %v2217
        %2312 = vmatpush.msra.mxu0 %v2215
        %2313 = vmatpush.msra.mxu0 %v2213
        %2314 = vmatpush.msra.mxu0 %v2211
        %2315 = vmatpush.msra.mxu0 %v2209
        %2316 = vmatpush.msra.mxu0 %v2207
        %2317 = vmatpush.msra.mxu0 %v2205
        %2318 = vmatpush.msra.mxu0 %v2203
        %2319 = vmatpush.msra.mxu0 %v2201
        %2320 = vmatpush.msra.mxu0 %v2199
        %2321 = vmatpush.msra.mxu0 %v2197
        %2322 = vmatmul.f32.gmra.mxu0 %v1854
        %v2323 = vpop.f32.mrf.mxu0
        %v2324 = vadd.f32 0.0, %v2323
        %2325 = vmatmul.f32.gmra.mxu0 %v1857
        %v2326 = vpop.f32.mrf.mxu0
        %v2327 = vadd.f32 0.0, %v2326
        %2328 = vdwg.mxu0
        %2329 = vmatpush.msra.mxu0 %v2259
        %2330 = vmatpush.msra.mxu0 %v2257
        %2331 = vmatpush.msra.mxu0 %v2255
        %2332 = vmatpush.msra.mxu0 %v2253
        %2333 = vmatpush.msra.mxu0 %v2251
        %2334 = vmatpush.msra.mxu0 %v2249
        %2335 = vmatpush.msra.mxu0 %v2247
        %2336 = vmatpush.msra.mxu0 %v2245
        %2337 = vmatpush.msra.mxu0 %v2243
        %2338 = vmatpush.msra.mxu0 %v2241
        %2339 = vmatpush.msra.mxu0 %v2239
        %2340 = vmatpush.msra.mxu0 %v2237
        %2341 = vmatpush.msra.mxu0 %v2235
        %2342 = vmatpush.msra.mxu0 %v2233
        %2343 = vmatpush.msra.mxu0 %v2231
        %2344 = vmatpush.msra.mxu0 %v2229
        %2345 = vmatmul.f32.gmra.mxu0 %v1877
        %v2346 = vpop.f32.mrf.mxu0
        %v2347 = vadd.f32 %v2324, %v2346
        %2348 = vmatmul.f32.gmra.mxu0 %v1880
        %v2349 = vpop.f32.mrf.mxu0
        %v2350 = vadd.f32 %v2327, %v2349
        %2351 = vdwg.mxu0
        %v2352 = vadd.f32 %v2144, %v2301
        %v2353 = vadd.f32 %v2190, %v2347
        %v2354 = vadd.f32 %v2147, %v2304
        %v2355 = vadd.f32 %v2193, %v2350
        %v2356 = vld [vmem:[%s9] sm:$0x3]
        %v2358 = vperm.slane %v2356, 0
        %v2359 = vperm.slane %v2356, 1
        %v2362 = vadd.f32 %v2352, %v2358
        %v2363 = vadd.f32 %v2353, %v2359
        %v2364 = vadd.f32 %v2354, %v2358
        %v2365 = vadd.f32 %v2355, %v2359
        %v2366 = vmax.f32 %v2362, 0.0
        %v2367 = vmax.f32 %v2363, 0.0
        %v2368 = vmax.f32 %v2364, 0.0
        %v2369 = vmax.f32 %v2365, 0.0
        %2370 = vst [vmem:[%s804] sm:$0xff] %v2366
        %2371 = vst [vmem:[%s804 + $0x8] sm:$0xff] %v2367
        %2372 = vst [vmem:[%s804 + $0x10] sm:$0xff] %v2368
        %2373 = vst [vmem:[%s804 + $0x18] sm:$0xff] %v2369
        %2374 = vmatpush.msra.mxu0 0.0
        %2375 = vmatpush.msra.mxu0 0.0
        %2376 = vmatpush.msra.mxu0 0.0
        %2377 = vmatpush.msra.mxu0 0.0
        %2378 = vmatpush.msra.mxu0 0.0
        %2379 = vmatpush.msra.mxu0 0.0
        %2380 = vmatpush.msra.mxu0 0.0
        %2381 = vmatpush.msra.mxu0 0.0
        %2382 = vmatpush.msra.mxu0 0.0
        %2383 = vmatpush.msra.mxu0 0.0
        %2384 = vmatpush.msra.mxu0 0.0
        %2385 = vmatpush.msra.mxu0 0.0
        %2386 = vmatpush.msra.mxu0 0.0
        %2387 = vmatpush.msra.mxu0 0.0
        %2388 = vmatpush.msra.mxu0 %v2368
        %2389 = vmatpush.msra.mxu0 %v2366
        %2390 = vmatmul.f32.gmra.mxu0 %v821
        %v2391 = vpop.f32.mrf.mxu0
        %v2392 = vadd.f32 0.0, %v2391
        %2393 = vmatmul.f32.gmra.mxu0 %v824
        %v2394 = vpop.f32.mrf.mxu0
        %v2395 = vadd.f32 0.0, %v2394
        %2396 = vdwg.mxu0
        %2397 = vmatpush.msra.mxu0 0.0
        %2398 = vmatpush.msra.mxu0 0.0
        %2399 = vmatpush.msra.mxu0 0.0
        %2400 = vmatpush.msra.mxu0 0.0
        %2401 = vmatpush.msra.mxu0 0.0
        %2402 = vmatpush.msra.mxu0 0.0
        %2403 = vmatpush.msra.mxu0 0.0
        %2404 = vmatpush.msra.mxu0 0.0
        %2405 = vmatpush.msra.mxu0 0.0
        %2406 = vmatpush.msra.mxu0 0.0
        %2407 = vmatpush.msra.mxu0 0.0
        %2408 = vmatpush.msra.mxu0 0.0
        %2409 = vmatpush.msra.mxu0 0.0
        %2410 = vmatpush.msra.mxu0 0.0
        %2411 = vmatpush.msra.mxu0 %v2369
        %2412 = vmatpush.msra.mxu0 %v2367
        %2413 = vmatmul.f32.gmra.mxu0 %v821
        %v2414 = vpop.f32.mrf.mxu0
        %v2415 = vadd.f32 0.0, %v2414
        %2416 = vmatmul.f32.gmra.mxu0 %v824
        %v2417 = vpop.f32.mrf.mxu0
        %v2418 = vadd.f32 0.0, %v2417
        %2419 = vdwg.mxu0
        %2420 = vmatpush.msra.mxu0 0.0
        %2421 = vmatpush.msra.mxu0 0.0
        %2422 = vmatpush.msra.mxu0 0.0
        %2423 = vmatpush.msra.mxu0 0.0
        %2424 = vmatpush.msra.mxu0 0.0
        %2425 = vmatpush.msra.mxu0 0.0
        %2426 = vmatpush.msra.mxu0 0.0
        %2427 = vmatpush.msra.mxu0 0.0
        %2428 = vmatpush.msra.mxu0 0.0
        %2429 = vmatpush.msra.mxu0 0.0
        %2430 = vmatpush.msra.mxu0 0.0
        %2431 = vmatpush.msra.mxu0 0.0
        %2432 = vmatpush.msra.mxu0 0.0
        %2433 = vmatpush.msra.mxu0 0.0
        %2434 = vmatpush.msra.mxu0 %v2368
        %2435 = vmatpush.msra.mxu0 %v2366
        %2436 = vmatmul.f32.gmra.mxu0 %v850
        %v2437 = vpop.f32.mrf.mxu0
        %v2438 = vadd.f32 0.0, %v2437
        %2439 = vmatmul.f32.gmra.mxu0 %v853
        %v2440 = vpop.f32.mrf.mxu0
        %v2441 = vadd.f32 0.0, %v2440
        %2442 = vdwg.mxu0
        %2443 = vmatpush.msra.mxu0 0.0
        %2444 = vmatpush.msra.mxu0 0.0
        %2445 = vmatpush.msra.mxu0 0.0
        %2446 = vmatpush.msra.mxu0 0.0
        %2447 = vmatpush.msra.mxu0 0.0
        %2448 = vmatpush.msra.mxu0 0.0
        %2449 = vmatpush.msra.mxu0 0.0
        %2450 = vmatpush.msra.mxu0 0.0
        %2451 = vmatpush.msra.mxu0 0.0
        %2452 = vmatpush.msra.mxu0 0.0
        %2453 = vmatpush.msra.mxu0 0.0
        %2454 = vmatpush.msra.mxu0 0.0
        %2455 = vmatpush.msra.mxu0 0.0
        %2456 = vmatpush.msra.mxu0 0.0
        %2457 = vmatpush.msra.mxu0 %v2369
        %2458 = vmatpush.msra.mxu0 %v2367
        %2459 = vmatmul.f32.gmra.mxu0 %v850
        %v2460 = vpop.f32.mrf.mxu0
        %v2461 = vadd.f32 0.0, %v2460
        %2462 = vmatmul.f32.gmra.mxu0 %v853
        %v2463 = vpop.f32.mrf.mxu0
        %v2464 = vadd.f32 0.0, %v2463
        %2465 = vdwg.mxu0
        %v2466 = vld [vmem:[#allocation16] sm:$0xff]
        %v2467 = vld [vmem:[#allocation16 + $0x8] sm:$0xff]
        %v2468 = vld [vmem:[#allocation16 + $0x10] sm:$0xff]
        %v2469 = vld [vmem:[#allocation16 + $0x18] sm:$0xff]
        %v2470 = vld [vmem:[#allocation16 + $0x20] sm:$0xff]
        %v2471 = vld [vmem:[#allocation16 + $0x28] sm:$0xff]
        %v2472 = vld [vmem:[#allocation16 + $0x30] sm:$0xff]
        %v2473 = vld [vmem:[#allocation16 + $0x38] sm:$0xff]
        %v2474 = vld [vmem:[#allocation16 + $0x40] sm:$0xff]
        %v2475 = vld [vmem:[#allocation16 + $0x48] sm:$0xff]
        %v2476 = vld [vmem:[#allocation16 + $0x50] sm:$0xff]
        %v2477 = vld [vmem:[#allocation16 + $0x58] sm:$0xff]
        %v2478 = vld [vmem:[#allocation16 + $0x60] sm:$0xff]
        %v2479 = vld [vmem:[#allocation16 + $0x68] sm:$0xff]
        %v2480 = vld [vmem:[#allocation16 + $0x70] sm:$0xff]
        %v2481 = vld [vmem:[#allocation16 + $0x78] sm:$0xff]
        %v2482 = vld [vmem:[#allocation16 + $0x80] sm:$0xff]
        %v2483 = vld [vmem:[#allocation16 + $0x88] sm:$0xff]
        %v2484 = vld [vmem:[#allocation16 + $0x90] sm:$0xff]
        %v2485 = vld [vmem:[#allocation16 + $0x98] sm:$0xff]
        %v2486 = vld [vmem:[#allocation16 + $0xa0] sm:$0xff]
        %v2487 = vld [vmem:[#allocation16 + $0xa8] sm:$0xff]
        %v2488 = vld [vmem:[#allocation16 + $0xb0] sm:$0xff]
        %v2489 = vld [vmem:[#allocation16 + $0xb8] sm:$0xff]
        %v2490 = vld [vmem:[#allocation16 + $0xc0] sm:$0xff]
        %v2491 = vld [vmem:[#allocation16 + $0xc8] sm:$0xff]
        %v2492 = vld [vmem:[#allocation16 + $0xd0] sm:$0xff]
        %v2493 = vld [vmem:[#allocation16 + $0xd8] sm:$0xff]
        %v2494 = vld [vmem:[#allocation16 + $0xe0] sm:$0xff]
        %v2495 = vld [vmem:[#allocation16 + $0xe8] sm:$0xff]
        %v2496 = vld [vmem:[#allocation16 + $0xf0] sm:$0xff]
        %v2497 = vld [vmem:[#allocation16 + $0xf8] sm:$0xff]
        %s2498 = scalar_lea.vmem [#allocation16], 256
        %v2499 = vld [vmem:[%s2498] sm:$0xff]
        %v2500 = vld [vmem:[%s2498 + $0x8] sm:$0xff]
        %v2501 = vld [vmem:[%s2498 + $0x10] sm:$0xff]
        %v2502 = vld [vmem:[%s2498 + $0x18] sm:$0xff]
        %v2503 = vld [vmem:[%s2498 + $0x20] sm:$0xff]
        %v2504 = vld [vmem:[%s2498 + $0x28] sm:$0xff]
        %v2505 = vld [vmem:[%s2498 + $0x30] sm:$0xff]
        %v2506 = vld [vmem:[%s2498 + $0x38] sm:$0xff]
        %v2507 = vld [vmem:[%s2498 + $0x40] sm:$0xff]
        %v2508 = vld [vmem:[%s2498 + $0x48] sm:$0xff]
        %v2509 = vld [vmem:[%s2498 + $0x50] sm:$0xff]
        %v2510 = vld [vmem:[%s2498 + $0x58] sm:$0xff]
        %v2511 = vld [vmem:[%s2498 + $0x60] sm:$0xff]
        %v2512 = vld [vmem:[%s2498 + $0x68] sm:$0xff]
        %v2513 = vld [vmem:[%s2498 + $0x70] sm:$0xff]
        %v2514 = vld [vmem:[%s2498 + $0x78] sm:$0xff]
        %v2515 = vld [vmem:[%s2498 + $0x80] sm:$0xff]
        %v2516 = vld [vmem:[%s2498 + $0x88] sm:$0xff]
        %v2517 = vld [vmem:[%s2498 + $0x90] sm:$0xff]
        %v2518 = vld [vmem:[%s2498 + $0x98] sm:$0xff]
        %v2519 = vld [vmem:[%s2498 + $0xa0] sm:$0xff]
        %v2520 = vld [vmem:[%s2498 + $0xa8] sm:$0xff]
        %v2521 = vld [vmem:[%s2498 + $0xb0] sm:$0xff]
        %v2522 = vld [vmem:[%s2498 + $0xb8] sm:$0xff]
        %v2523 = vld [vmem:[%s2498 + $0xc0] sm:$0xff]
        %v2524 = vld [vmem:[%s2498 + $0xc8] sm:$0xff]
        %v2525 = vld [vmem:[%s2498 + $0xd0] sm:$0xff]
        %v2526 = vld [vmem:[%s2498 + $0xd8] sm:$0xff]
        %v2527 = vld [vmem:[%s2498 + $0xe0] sm:$0xff]
        %v2528 = vld [vmem:[%s2498 + $0xe8] sm:$0xff]
        %v2529 = vld [vmem:[%s2498 + $0xf0] sm:$0xff]
        %v2530 = vld [vmem:[%s2498 + $0xf8] sm:$0xff]
        %2531 = vmatpush.msra.mxu0 %v2514
        %2532 = vmatpush.msra.mxu0 %v2513
        %2533 = vmatpush.msra.mxu0 %v2512
        %2534 = vmatpush.msra.mxu0 %v2511
        %2535 = vmatpush.msra.mxu0 %v2510
        %2536 = vmatpush.msra.mxu0 %v2509
        %2537 = vmatpush.msra.mxu0 %v2508
        %2538 = vmatpush.msra.mxu0 %v2507
        %2539 = vmatpush.msra.mxu0 %v2506
        %2540 = vmatpush.msra.mxu0 %v2505
        %2541 = vmatpush.msra.mxu0 %v2504
        %2542 = vmatpush.msra.mxu0 %v2503
        %2543 = vmatpush.msra.mxu0 %v2502
        %2544 = vmatpush.msra.mxu0 %v2501
        %2545 = vmatpush.msra.mxu0 %v2500
        %2546 = vmatpush.msra.mxu0 %v2499
        %2547 = vmatmul.f32.gmra.mxu0 %v2366
        %v2548 = vpop.f32.mrf.mxu0
        %v2549 = vadd.f32 0.0, %v2548
        %2550 = vmatmul.f32.gmra.mxu0 %v2368
        %v2551 = vpop.f32.mrf.mxu0
        %v2552 = vadd.f32 0.0, %v2551
        %2553 = vdwg.mxu0
        %2554 = vmatpush.msra.mxu0 %v2530
        %2555 = vmatpush.msra.mxu0 %v2529
        %2556 = vmatpush.msra.mxu0 %v2528
        %2557 = vmatpush.msra.mxu0 %v2527
        %2558 = vmatpush.msra.mxu0 %v2526
        %2559 = vmatpush.msra.mxu0 %v2525
        %2560 = vmatpush.msra.mxu0 %v2524
        %2561 = vmatpush.msra.mxu0 %v2523
        %2562 = vmatpush.msra.mxu0 %v2522
        %2563 = vmatpush.msra.mxu0 %v2521
        %2564 = vmatpush.msra.mxu0 %v2520
        %2565 = vmatpush.msra.mxu0 %v2519
        %2566 = vmatpush.msra.mxu0 %v2518
        %2567 = vmatpush.msra.mxu0 %v2517
        %2568 = vmatpush.msra.mxu0 %v2516
        %2569 = vmatpush.msra.mxu0 %v2515
        %2570 = vmatmul.f32.gmra.mxu0 %v2367
        %v2571 = vpop.f32.mrf.mxu0
        %v2572 = vadd.f32 %v2549, %v2571
        %2573 = vmatmul.f32.gmra.mxu0 %v2369
        %v2574 = vpop.f32.mrf.mxu0
        %v2575 = vadd.f32 %v2552, %v2574
        %2576 = vdwg.mxu0
        %2577 = vmatpush.msra.mxu0 %v2481
        %2578 = vmatpush.msra.mxu0 %v2480
        %2579 = vmatpush.msra.mxu0 %v2479
        %2580 = vmatpush.msra.mxu0 %v2478
        %2581 = vmatpush.msra.mxu0 %v2477
        %2582 = vmatpush.msra.mxu0 %v2476
        %2583 = vmatpush.msra.mxu0 %v2475
        %2584 = vmatpush.msra.mxu0 %v2474
        %2585 = vmatpush.msra.mxu0 %v2473
        %2586 = vmatpush.msra.mxu0 %v2472
        %2587 = vmatpush.msra.mxu0 %v2471
        %2588 = vmatpush.msra.mxu0 %v2470
        %2589 = vmatpush.msra.mxu0 %v2469
        %2590 = vmatpush.msra.mxu0 %v2468
        %2591 = vmatpush.msra.mxu0 %v2467
        %2592 = vmatpush.msra.mxu0 %v2466
        %2593 = vmatmul.f32.gmra.mxu0 %v2392
        %v2594 = vpop.f32.mrf.mxu0
        %v2595 = vadd.f32 %v2572, %v2594
        %2596 = vmatmul.f32.gmra.mxu0 %v2395
        %v2597 = vpop.f32.mrf.mxu0
        %v2598 = vadd.f32 %v2575, %v2597
        %2599 = vdwg.mxu0
        %2600 = vmatpush.msra.mxu0 %v2497
        %2601 = vmatpush.msra.mxu0 %v2496
        %2602 = vmatpush.msra.mxu0 %v2495
        %2603 = vmatpush.msra.mxu0 %v2494
        %2604 = vmatpush.msra.mxu0 %v2493
        %2605 = vmatpush.msra.mxu0 %v2492
        %2606 = vmatpush.msra.mxu0 %v2491
        %2607 = vmatpush.msra.mxu0 %v2490
        %2608 = vmatpush.msra.mxu0 %v2489
        %2609 = vmatpush.msra.mxu0 %v2488
        %2610 = vmatpush.msra.mxu0 %v2487
        %2611 = vmatpush.msra.mxu0 %v2486
        %2612 = vmatpush.msra.mxu0 %v2485
        %2613 = vmatpush.msra.mxu0 %v2484
        %2614 = vmatpush.msra.mxu0 %v2483
        %2615 = vmatpush.msra.mxu0 %v2482
        %2616 = vmatmul.f32.gmra.mxu0 %v2415
        %v2617 = vpop.f32.mrf.mxu0
        %v2618 = vadd.f32 %v2595, %v2617
        %2619 = vmatmul.f32.gmra.mxu0 %v2418
        %v2620 = vpop.f32.mrf.mxu0
        %v2621 = vadd.f32 %v2598, %v2620
        %2622 = vdwg.mxu0
        %s2623 = scalar_lea.vmem [#allocation16], 512
        %v2624 = vld [vmem:[%s2623] sm:$0xff]
        %v2625 = vld [vmem:[%s2623 + $0x8] sm:$0xff]
        %v2626 = vld [vmem:[%s2623 + $0x10] sm:$0xff]
        %v2627 = vld [vmem:[%s2623 + $0x18] sm:$0xff]
        %v2628 = vld [vmem:[%s2623 + $0x20] sm:$0xff]
        %v2629 = vld [vmem:[%s2623 + $0x28] sm:$0xff]
        %v2630 = vld [vmem:[%s2623 + $0x30] sm:$0xff]
        %v2631 = vld [vmem:[%s2623 + $0x38] sm:$0xff]
        %v2632 = vld [vmem:[%s2623 + $0x40] sm:$0xff]
        %v2633 = vld [vmem:[%s2623 + $0x48] sm:$0xff]
        %v2634 = vld [vmem:[%s2623 + $0x50] sm:$0xff]
        %v2635 = vld [vmem:[%s2623 + $0x58] sm:$0xff]
        %v2636 = vld [vmem:[%s2623 + $0x60] sm:$0xff]
        %v2637 = vld [vmem:[%s2623 + $0x68] sm:$0xff]
        %v2638 = vld [vmem:[%s2623 + $0x70] sm:$0xff]
        %v2639 = vld [vmem:[%s2623 + $0x78] sm:$0xff]
        %v2640 = vld [vmem:[%s2623 + $0x80] sm:$0xff]
        %v2641 = vld [vmem:[%s2623 + $0x88] sm:$0xff]
        %v2642 = vld [vmem:[%s2623 + $0x90] sm:$0xff]
        %v2643 = vld [vmem:[%s2623 + $0x98] sm:$0xff]
        %v2644 = vld [vmem:[%s2623 + $0xa0] sm:$0xff]
        %v2645 = vld [vmem:[%s2623 + $0xa8] sm:$0xff]
        %v2646 = vld [vmem:[%s2623 + $0xb0] sm:$0xff]
        %v2647 = vld [vmem:[%s2623 + $0xb8] sm:$0xff]
        %v2648 = vld [vmem:[%s2623 + $0xc0] sm:$0xff]
        %v2649 = vld [vmem:[%s2623 + $0xc8] sm:$0xff]
        %v2650 = vld [vmem:[%s2623 + $0xd0] sm:$0xff]
        %v2651 = vld [vmem:[%s2623 + $0xd8] sm:$0xff]
        %v2652 = vld [vmem:[%s2623 + $0xe0] sm:$0xff]
        %v2653 = vld [vmem:[%s2623 + $0xe8] sm:$0xff]
        %v2654 = vld [vmem:[%s2623 + $0xf0] sm:$0xff]
        %v2655 = vld [vmem:[%s2623 + $0xf8] sm:$0xff]
        %2656 = vmatpush.msra.mxu0 %v2639
        %2657 = vmatpush.msra.mxu0 %v2638
        %2658 = vmatpush.msra.mxu0 %v2637
        %2659 = vmatpush.msra.mxu0 %v2636
        %2660 = vmatpush.msra.mxu0 %v2635
        %2661 = vmatpush.msra.mxu0 %v2634
        %2662 = vmatpush.msra.mxu0 %v2633
        %2663 = vmatpush.msra.mxu0 %v2632
        %2664 = vmatpush.msra.mxu0 %v2631
        %2665 = vmatpush.msra.mxu0 %v2630
        %2666 = vmatpush.msra.mxu0 %v2629
        %2667 = vmatpush.msra.mxu0 %v2628
        %2668 = vmatpush.msra.mxu0 %v2627
        %2669 = vmatpush.msra.mxu0 %v2626
        %2670 = vmatpush.msra.mxu0 %v2625
        %2671 = vmatpush.msra.mxu0 %v2624
        %2672 = vmatmul.f32.gmra.mxu0 %v2438
        %v2673 = vpop.f32.mrf.mxu0
        %v2674 = vadd.f32 0.0, %v2673
        %2675 = vmatmul.f32.gmra.mxu0 %v2441
        %v2676 = vpop.f32.mrf.mxu0
        %v2677 = vadd.f32 0.0, %v2676
        %2678 = vdwg.mxu0
        %2679 = vmatpush.msra.mxu0 %v2655
        %2680 = vmatpush.msra.mxu0 %v2654
        %2681 = vmatpush.msra.mxu0 %v2653
        %2682 = vmatpush.msra.mxu0 %v2652
        %2683 = vmatpush.msra.mxu0 %v2651
        %2684 = vmatpush.msra.mxu0 %v2650
        %2685 = vmatpush.msra.mxu0 %v2649
        %2686 = vmatpush.msra.mxu0 %v2648
        %2687 = vmatpush.msra.mxu0 %v2647
        %2688 = vmatpush.msra.mxu0 %v2646
        %2689 = vmatpush.msra.mxu0 %v2645
        %2690 = vmatpush.msra.mxu0 %v2644
        %2691 = vmatpush.msra.mxu0 %v2643
        %2692 = vmatpush.msra.mxu0 %v2642
        %2693 = vmatpush.msra.mxu0 %v2641
        %2694 = vmatpush.msra.mxu0 %v2640
        %2695 = vmatmul.f32.gmra.mxu0 %v2461
        %v2696 = vpop.f32.mrf.mxu0
        %v2697 = vadd.f32 %v2674, %v2696
        %2698 = vmatmul.f32.gmra.mxu0 %v2464
        %v2699 = vpop.f32.mrf.mxu0
        %v2700 = vadd.f32 %v2677, %v2699
        %2701 = vdwg.mxu0
        %v2702 = vadd.f32 %v2618, %v2697
        %v2703 = vadd.f32 %v2621, %v2700
        %v2704 = vld [vmem:[%s11] sm:$0x1]
        %v2706 = vperm.slane %v2704, 0
        %v2708 = vadd.f32 %v2702, %v2706
        %v2709 = vadd.f32 %v2703, %v2706
        %v2710 = vmax.f32 %v2708, 0.0
        %v2711 = vmax.f32 %v2709, 0.0
        %2712 = vst [vmem:[%s811] sm:$0xff] %v2710
        %2713 = vst [vmem:[%s811 + $0x8] sm:$0xff] %v2711
        %s2714 = sand.u32 %s397, 1
        %s2715 = scalar_lea.sflag [#allocation4], %s2714
        %s2716 = sand.u32 %s397, 1
        %s2717 = smul.addr %s2716, 16
        %s2718 = scalar_lea.vmem [#allocation20], %s2717
        %s2719 = sand.u32 %s48, 1
        %s2720 = scalar_lea.sflag [#allocation22], %s2719
        %s2721 = sand.u32 %s423, 1
        %s2722 = smul.addr %s2721, 32
        %s2723 = scalar_lea.vmem [#allocation21], %s2722
        %s2724 = sand.u32 %s48, 1
        %s2725 = scalar_lea.sflag [#allocation22], %s2724
        %s2726 = sand.u32 %s449, 1
        %s2727 = smul.addr %s2726, 32
        %s2728 = scalar_lea.vmem [#allocation23], %s2727
        %s2729 = sand.u32 %s475, 1
        %s2730 = scalar_lea.sflag [#allocation25], %s2729
        %s2731 = sand.u32 %s475, 1
        %s2732 = smul.addr %s2731, 16
        %s2733 = scalar_lea.vmem [#allocation24], %s2732
        // Predicated region
        $region129: #{tpu_custom_call.1} parent=83 // pred_check
          %p2734 = pneg %p407
        $region130: #{tpu_custom_call.1} parent=83 // pred_check_branch
          %2736 = sbr.rel (%p2734) target = $region132
        $region131: #{tpu_custom_call.1} parent=83 // pred_region
          %2738 = vsyncadd %s2715, 0
          %s2739 = smul.addr %s48, 2
          %s2740 = smul.addr %s2739, 8
          %s2741 = scalar_lea.hbm %s16, %s2740
          %s2742 = sshll.u32 %s2718, 4
          %s2743 = int_to_ptr.vmem [resolvable:$true] %s2742
          %s2744 = sshll.u32 %s2741, 4
          %s2745 = int_to_ptr.hbm [resolvable:$true] %s2744
          %2750 = dma.vmem_to_hbm [thread:$0]  %s2743, 256, %s2745, %s2715, 128, 128, 8
        $region132: #{tpu_custom_call.1} parent=83 // pred_fallthru
          _
        // Predicated region
        $region133: #{tpu_custom_call.1} parent=83 // pred_check
          %p2751 = pneg %p433
        $region134: #{tpu_custom_call.1} parent=83 // pred_check_branch
          %2753 = sbr.rel (%p2751) target = $region136
        $region135: #{tpu_custom_call.1} parent=83 // pred_region
          %2755 = vsyncadd %s2720, 0
          %s2756 = smul.addr %s48, 4
          %s2757 = smul.addr %s2756, 8
          %s2758 = scalar_lea.hbm %s17, %s2757
          %s2759 = sshll.u32 %s2723, 4
          %s2760 = int_to_ptr.vmem [resolvable:$true] %s2759
          %s2761 = sshll.u32 %s2758, 4
          %s2762 = int_to_ptr.hbm [resolvable:$true] %s2761
          %2767 = dma.vmem_to_hbm [thread:$0]  %s2760, 512, %s2762, %s2720, 256, 256, 16
        $region136: #{tpu_custom_call.1} parent=83 // pred_fallthru
          _
        // Predicated region
        $region137: #{tpu_custom_call.1} parent=83 // pred_check
          %p2768 = pneg %p459
        $region138: #{tpu_custom_call.1} parent=83 // pred_check_branch
          %2770 = sbr.rel (%p2768) target = $region140
        $region139: #{tpu_custom_call.1} parent=83 // pred_region
          %2772 = vsyncadd %s2725, 0
          %s2773 = smul.addr %s48, 4
          %s2774 = smul.addr %s2773, 8
          %s2775 = scalar_lea.hbm %s18, %s2774
          %s2776 = sshll.u32 %s2728, 4
          %s2777 = int_to_ptr.vmem [resolvable:$true] %s2776
          %s2778 = sshll.u32 %s2775, 4
          %s2779 = int_to_ptr.hbm [resolvable:$true] %s2778
          %2784 = dma.vmem_to_hbm [thread:$0]  %s2777, 512, %s2779, %s2725, 256, 256, 16
        $region140: #{tpu_custom_call.1} parent=83 // pred_fallthru
          _
        // Predicated region
        $region141: #{tpu_custom_call.1} parent=83 // pred_check
          %p2785 = pneg %p485
        $region142: #{tpu_custom_call.1} parent=83 // pred_check_branch
          %2787 = sbr.rel (%p2785) target = $region144
        $region143: #{tpu_custom_call.1} parent=83 // pred_region
          %2789 = vsyncadd %s2730, 0
          %s2790 = smul.addr %s48, 2
          %s2791 = smul.addr %s2790, 8
          %s2792 = scalar_lea.hbm %s19, %s2791
          %s2793 = sshll.u32 %s2733, 4
          %s2794 = int_to_ptr.vmem [resolvable:$true] %s2793
          %s2795 = sshll.u32 %s2792, 4
          %s2796 = int_to_ptr.hbm [resolvable:$true] %s2795
          %2801 = dma.vmem_to_hbm [thread:$0]  %s2794, 256, %s2796, %s2730, 128, 128, 8
        $region144: #{tpu_custom_call.1} parent=83 // pred_fallthru
          _
      $region84: #{tpu_custom_call.1} parent=5 // pred_fallthru
        _
      %p2802 = scmp.le.s32.totalorder 2, %s43
      // Predicated region
      $region145: #{tpu_custom_call.1} parent=5 // pred_check
        %p2803 = pneg %p2802
      $region146: #{tpu_custom_call.1} parent=5 // pred_check_branch
        %2805 = sbr.rel (%p2803) target = $region148
      $region147: #{tpu_custom_call.1} parent=5 // pred_region
        %s2806 = ssub.s32 %s43, 2
        // Predicated region
        $region149: #{tpu_custom_call.1} parent=147 // pred_check
          %p2807 = pneg %p413
        $region150: #{tpu_custom_call.1} parent=147 // pred_check_branch
          %2809 = sbr.rel (%p2807) target = $region152
        $region151: #{tpu_custom_call.1} parent=147 // pred_region
          %s2810 = sand.u32 %s398, 1
          %s2811 = scalar_lea.sflag [#allocation4], %s2810
          %s2812 = sand.u32 %s398, 1
          %s2813 = smul.addr %s2812, 16
          %s2814 = scalar_lea.vmem [#allocation20], %s2813
          %2816 = dma.done %s2811, 256
        $region152: #{tpu_custom_call.1} parent=147 // pred_fallthru
          _
        // Predicated region
        $region153: #{tpu_custom_call.1} parent=147 // pred_check
          %p2817 = pneg %p439
        $region154: #{tpu_custom_call.1} parent=147 // pred_check_branch
          %2819 = sbr.rel (%p2817) target = $region156
        $region155: #{tpu_custom_call.1} parent=147 // pred_region
          %s2820 = sand.u32 %s49, 1
          %s2821 = scalar_lea.sflag [#allocation22], %s2820
          %s2822 = sand.u32 %s424, 1
          %s2823 = smul.addr %s2822, 32
          %s2824 = scalar_lea.vmem [#allocation21], %s2823
          %2826 = dma.done %s2821, 512
        $region156: #{tpu_custom_call.1} parent=147 // pred_fallthru
          _
        // Predicated region
        $region157: #{tpu_custom_call.1} parent=147 // pred_check
          %p2827 = pneg %p465
        $region158: #{tpu_custom_call.1} parent=147 // pred_check_branch
          %2829 = sbr.rel (%p2827) target = $region160
        $region159: #{tpu_custom_call.1} parent=147 // pred_region
          %s2830 = sand.u32 %s49, 1
          %s2831 = scalar_lea.sflag [#allocation22], %s2830
          %s2832 = sand.u32 %s450, 1
          %s2833 = smul.addr %s2832, 32
          %s2834 = scalar_lea.vmem [#allocation23], %s2833
          %2836 = dma.done %s2831, 512
        $region160: #{tpu_custom_call.1} parent=147 // pred_fallthru
          _
        // Predicated region
        $region161: #{tpu_custom_call.1} parent=147 // pred_check
          %p2837 = pneg %p491
        $region162: #{tpu_custom_call.1} parent=147 // pred_check_branch
          %2839 = sbr.rel (%p2837) target = $region164
        $region163: #{tpu_custom_call.1} parent=147 // pred_region
          %s2840 = sand.u32 %s476, 1
          %s2841 = scalar_lea.sflag [#allocation25], %s2840
          %s2842 = sand.u32 %s476, 1
          %s2843 = smul.addr %s2842, 16
          %s2844 = scalar_lea.vmem [#allocation24], %s2843
          %2846 = dma.done %s2841, 256
        $region164: #{tpu_custom_call.1} parent=147 // pred_fallthru
          _
      $region148: #{tpu_custom_call.1} parent=5 // pred_fallthru
        _
    $region6: #{tpu_custom_call.1} parent=1 // loop_footer
      %s47 = sadd.s32 1, %s43
    $region7: #{tpu_custom_call.1} parent=1 // loop_footer_branch
      %42 = sbr.rel target = $region3
    $region8: #{tpu_custom_call.1} parent=1 // loop_exit
      _
    %2847 = vsyncpa [#allocation3], 1
    %s2848 = scalar_lea.sflag [#allocation3], 1
    %2849 = vsyncpa %s2848, 1
    %2850 = vsyncpa [#allocation6], 1
    %2851 = vsyncpa [#allocation9], 1
    %2852 = vsyncpa [#allocation12], 1
    %2853 = vsyncpa [#allocation15], 1
    %2854 = vsyncpa [#allocation18], 1
    %2855 = vsyncpa [#allocation4], 1
    %s2856 = scalar_lea.sflag [#allocation4], 1
    %2857 = vsyncpa %s2856, 1
    %2858 = vsyncpa [#allocation22], 1
    %s2859 = scalar_lea.sflag [#allocation22], 1
    %2860 = vsyncpa %s2859, 1
    %2861 = vsyncpa [#allocation25], 1
    %s2862 = scalar_lea.sflag [#allocation25], 1
    %2863 = vsyncpa %s2862, 1

</llo_original>
